<compile_context>
chip_gen: v5e
topology: v5e:2x2
jax: 0.10.0
libtpu: 0.0.40
codegen_flags: <defaults>
</compile_context>

<pallas_src>
import functools

import jax
import jax.numpy as jnp
from jax import lax
from jax.experimental import pallas as pl
from jax.experimental.pallas import tpu as pltpu


def _basic_block_kernel(x_ref, w1_ref, w2_ref, b1_ref, b2_ref,
                        o_ref, xpad, mid_pad):
    """One batch element per grid step.

    x_ref    : (1, H, W, C)    bf16   input block (also the identity branch)
    w1_ref   : (3, 3*C, C)     bf16   conv1 weights (BN1 scale folded in)
    w2_ref   : (3, 3*C, C)     bf16   conv2 weights (BN2 scale folded in)
    b*_ref   : (1, C)          f32    folded BN bias
    o_ref    : (1, H, W, C)    f32    output block
    xpad     : (H+2, W+2, C)   bf16   VMEM scratch, spatially padded input
    mid_pad  : (H+2, W+2, C)   bf16   VMEM scratch, padded conv1 output
    """
    H = x_ref.shape[1]
    W = x_ref.shape[2]
    C = x_ref.shape[3]          # Cin == Cmid (downsample=None)

    zrow = jnp.zeros((W + 2, C), jnp.bfloat16)
    zcol = jnp.zeros((H, 1, C), jnp.bfloat16)

    def write_padded(dst, interior_bf16):
        # Interior rows carry their own zero edge columns (one dense store);
        # only the two tiny top/bottom halo rows need extra stores.
        dst[1:1 + H, :, :] = jnp.concatenate([zcol, interior_bf16, zcol],
                                             axis=1)
        dst[0] = zrow
        dst[H + 1] = zrow

    def conv3x3(src_pad, w_ref):
        # dx folded into the contraction: per dy, one (H*W, 3C) x (3C, C)
        # bf16 matmul with f32 accumulation -> 3 MXU feeds per conv.
        acc = None
        for dy in range(3):
            rows = src_pad[dy:dy + H]                           # (H, W+2, C)
            slab = jnp.concatenate(
                [rows[:, 0:W, :], rows[:, 1:1 + W, :], rows[:, 2:2 + W, :]],
                axis=-1).reshape(H * W, 3 * C)                  # bf16
            part = jnp.dot(slab, w_ref[dy],
                           preferred_element_type=jnp.float32)  # (H*W, C) f32
            acc = part if acc is None else acc + part
        return acc

    # ---- pad input into VMEM scratch (identity stays in x_ref) ----
    x_bf16 = x_ref[0]                                           # (H, W, C)
    write_padded(xpad, x_bf16)

    # ---- conv1 (BN1 scale folded in) -> +bias -> relu ----
    acc1 = conv3x3(xpad, w1_ref)
    out1 = jnp.maximum(acc1 + b1_ref[...], 0.0)
    write_padded(mid_pad, out1.reshape(H, W, C).astype(jnp.bfloat16))

    # ---- conv2 (BN2 scale folded in) -> +bias -> +identity -> relu ----
    acc2 = conv3x3(mid_pad, w2_ref)
    identity = x_bf16.reshape(H * W, C).astype(jnp.float32)
    out2 = jnp.maximum(acc2 + b2_ref[...] + identity, 0.0)
    o_ref[0] = out2.reshape(H, W, C).astype(o_ref.dtype)


@functools.partial(jax.jit, static_argnames=("eps",))
def basic_block(x_nchw, w1_hwio, w2_hwio,
                bn1_gamma, bn1_beta, bn1_mean, bn1_var,
                bn2_gamma, bn2_beta, bn2_mean, bn2_var,
                eps=1e-5):
    """BasicBlock forward.  x_nchw: (N, C, H, W) -> (N, C, H, W)."""
    N, Cin, H, W = x_nchw.shape
    Cmid = w1_hwio.shape[3]
    assert Cin == Cmid, "downsample=None requires inplanes == planes"

    # NCHW -> NHWC, bf16 for the MXU path (halves HBM read of x too).
    x = jnp.transpose(x_nchw, (0, 2, 3, 1)).astype(jnp.bfloat16)

    # Fold BN (eval semantics) into per-channel scale/bias.
    s1 = bn1_gamma / jnp.sqrt(bn1_var + eps)                       # (C,) f32
    b1 = (bn1_beta - bn1_mean * s1).reshape(1, Cmid).astype(jnp.float32)
    s2 = bn2_gamma / jnp.sqrt(bn2_var + eps)
    b2 = (bn2_beta - bn2_mean * s2).reshape(1, Cmid).astype(jnp.float32)

    # Fold the BN scale into the conv output channels, then fold the dx taps
    # into the contraction dim: (3, 3, Cin, Cout) -> (3, 3*Cin, Cout), with
    # row index = dx*Cin + cin (matches the in-kernel slab layout).
    w1 = (w1_hwio * s1[None, None, None, :]).astype(jnp.bfloat16) \
        .reshape(3, 3 * Cin, Cmid)
    w2 = (w2_hwio * s2[None, None, None, :]).astype(jnp.bfloat16) \
        .reshape(3, 3 * Cmid, Cmid)

    out_nhwc = pl.pallas_call(
        _basic_block_kernel,
        out_shape=jax.ShapeDtypeStruct((N, H, W, Cmid), jnp.float32),
        grid_spec=pltpu.PrefetchScalarGridSpec(
            num_scalar_prefetch=0,
            grid=(N,),
            in_specs=[
                pl.BlockSpec((1, H, W, Cin), lambda n: (n, 0, 0, 0)),
                pl.BlockSpec((3, 3 * Cin, Cmid), lambda n: (0, 0, 0)),
                pl.BlockSpec((3, 3 * Cmid, Cmid), lambda n: (0, 0, 0)),
                pl.BlockSpec((1, Cmid), lambda n: (0, 0)),
                pl.BlockSpec((1, Cmid), lambda n: (0, 0)),
            ],
            out_specs=pl.BlockSpec((1, H, W, Cmid), lambda n: (n, 0, 0, 0)),
            scratch_shapes=[
                pltpu.VMEM((H + 2, W + 2, Cin), jnp.bfloat16),    # padded x
                pltpu.VMEM((H + 2, W + 2, Cmid), jnp.bfloat16),   # padded mid
            ],
        ),
        compiler_params=pltpu.CompilerParams(
            dimension_semantics=("parallel",),
            vmem_limit_bytes=32 * 1024 * 1024),
    )(x, w1, w2, b1, b2)

    # NHWC -> NCHW to match PyTorch.
    return jnp.transpose(out_nhwc, (0, 3, 1, 2)).astype(x_nchw.dtype)


def _reference(x_nchw, w1, w2, g1, be1, m1, v1, g2, be2, m2, v2, eps=1e-5):
    """Pure-JAX f32 reference (NHWC conv via lax) for verification."""
    x = jnp.transpose(x_nchw, (0, 2, 3, 1)).astype(jnp.float32)
    dn = ("NHWC", "HWIO", "NHWC")
    out = lax.conv_general_dilated(x, w1, (1, 1), "SAME", dimension_numbers=dn)
    out = (out - m1) / jnp.sqrt(v1 + eps) * g1 + be1
    out = jnp.maximum(out, 0.0)
    out = lax.conv_general_dilated(out, w2, (1, 1), "SAME", dimension_numbers=dn)
    out = (out - m2) / jnp.sqrt(v2 + eps) * g2 + be2
    out = jnp.maximum(out + x, 0.0)
    return jnp.transpose(out, (0, 3, 1, 2))


if __name__ == "__main__":
    key = jax.random.PRNGKey(0)
    # Lane-friendly channel count (>= 64); inplanes == planes, stride == 1.
    N, C, H, W = 2, 64, 16, 16
    ks = jax.random.split(key, 12)

    x = jax.random.normal(ks[0], (N, C, H, W), jnp.float32)
    w1 = jax.random.normal(ks[1], (3, 3, C, C), jnp.float32) * 0.05   # HWIO
    w2 = jax.random.normal(ks[2], (3, 3, C, C), jnp.float32) * 0.05   # HWIO

    bn1_gamma = jax.random.uniform(ks[3], (C,), jnp.float32, 0.5, 1.5)
    bn1_beta = jax.random.normal(ks[4], (C,), jnp.float32) * 0.1
    bn1_mean = jax.random.normal(ks[7], (C,), jnp.float32) * 0.1
    bn1_var = jax.random.uniform(ks[8], (C,), jnp.float32, 0.5, 1.5)

    bn2_gamma = jax.random.uniform(ks[5], (C,), jnp.float32, 0.5, 1.5)
    bn2_beta = jax.random.normal(ks[6], (C,), jnp.float32) * 0.1
    bn2_mean = jax.random.normal(ks[9], (C,), jnp.float32) * 0.1
    bn2_var = jax.random.uniform(ks[10], (C,), jnp.float32, 0.5, 1.5)

    out = basic_block(x, w1, w2,
                      bn1_gamma, bn1_beta, bn1_mean, bn1_var,
                      bn2_gamma, bn2_beta, bn2_mean, bn2_var)
    out = jax.block_until_ready(out)

    ref = _reference(x, w1, w2,
                     bn1_gamma, bn1_beta, bn1_mean, bn1_var,
                     bn2_gamma, bn2_beta, bn2_mean, bn2_var)

    assert out.shape == (N, C, H, W)
    max_err = float(jnp.max(jnp.abs(out - ref)))
    # bf16 MXU operands (with BN scale folded into the weights) -> loosened
    # tolerance vs the f32 reference.
    assert bool(jnp.allclose(out, ref, atol=1e-1, rtol=1e-1)), (
        f"mismatch vs reference: max_err={max_err:.4f}")

    print("KERNEL_OK")
</pallas_src>

<mosaic_0001>
module attributes {stable_mosaic.version = 11 : i64} {
  func.func @_basic_block_kernel(%arg0: i32, %arg1: memref<1x16x16x64xbf16, #tpu.memory_space<vmem>>, %arg2: memref<3x192x64xbf16, #tpu.memory_space<vmem>>, %arg3: memref<3x192x64xbf16, #tpu.memory_space<vmem>>, %arg4: memref<1x64xf32, #tpu.memory_space<vmem>>, %arg5: memref<1x64xf32, #tpu.memory_space<vmem>>, %arg6: memref<1x16x16x64xf32, #tpu.memory_space<vmem>>, %arg7: memref<18x18x64xbf16, #tpu.memory_space<vmem>>, %arg8: memref<18x18x64xbf16, #tpu.memory_space<vmem>>) attributes {dimension_semantics = [#tpu.dimension_semantics<parallel>], iteration_bounds = array<i64: 2>, scalar_prefetch = 0 : i64, scratch_operands = 2 : i64, tpu.core_type = #tpu.core_type<tc>, window_params = [{transform_indices = @transform_0, window_bounds = array<i64: 1, 16, 16, 64>}, {pipeline_mode = #tpu.pipeline_mode<synchronous>, transform_indices = @transform_1, window_bounds = array<i64: 3, 192, 64>}, {pipeline_mode = #tpu.pipeline_mode<synchronous>, transform_indices = @transform_2, window_bounds = array<i64: 3, 192, 64>}, {pipeline_mode = #tpu.pipeline_mode<synchronous>, transform_indices = @transform_3, window_bounds = array<i64: 1, 64>}, {pipeline_mode = #tpu.pipeline_mode<synchronous>, transform_indices = @transform_4, window_bounds = array<i64: 1, 64>}, {transform_indices = @transform_5, window_bounds = array<i64: 1, 16, 16, 64>}]} {
    %cst = arith.constant 0.000000e+00 : bf16
    %0 = vector.broadcast %cst : bf16 to vector<18x64xbf16>
    %cst_0 = arith.constant 0.000000e+00 : bf16
    %1 = vector.broadcast %cst_0 : bf16 to vector<16x1x64xbf16>
    %c0 = arith.constant 0 : index
    %c0_1 = arith.constant 0 : index
    %c0_2 = arith.constant 0 : index
    %c0_3 = arith.constant 0 : index
    %2 = vector.load %arg1[%c0, %c0_1, %c0_2, %c0_3] : memref<1x16x16x64xbf16, #tpu.memory_space<vmem>>, vector<1x16x16x64xbf16>
    %3 = vector.shape_cast %2 : vector<1x16x16x64xbf16> to vector<16x16x64xbf16>
    %4 = tpu.concatenate %1, %3, %1 in 1 : vector<16x1x64xbf16>, vector<16x16x64xbf16>, vector<16x1x64xbf16> -> vector<16x18x64xbf16>
    %c1 = arith.constant 1 : index
    %c0_4 = arith.constant 0 : index
    %c0_5 = arith.constant 0 : index
    %5 = vector.load %arg7[%c1, %c0_4, %c0_5] : memref<18x18x64xbf16, #tpu.memory_space<vmem>>, vector<16x18x64xbf16>
    tpu.vector_store %arg7[%c1, %c0_4, %c0_5], %4 {strides = array<i32>} : memref<18x18x64xbf16, #tpu.memory_space<vmem>>, vector<16x18x64xbf16>,
    %c0_6 = arith.constant 0 : index
    %c0_7 = arith.constant 0 : index
    %c0_8 = arith.constant 0 : index
    %6 = vector.load %arg7[%c0_6, %c0_7, %c0_8] : memref<18x18x64xbf16, #tpu.memory_space<vmem>>, vector<1x18x64xbf16>
    %7 = vector.shape_cast %6 : vector<1x18x64xbf16> to vector<18x64xbf16>
    %8 = vector.shape_cast %0 : vector<18x64xbf16> to vector<1x18x64xbf16>
    tpu.vector_store %arg7[%c0_6, %c0_7, %c0_8], %8 {strides = array<i32>} : memref<18x18x64xbf16, #tpu.memory_space<vmem>>, vector<1x18x64xbf16>,
    %c17 = arith.constant 17 : index
    %c0_9 = arith.constant 0 : index
    %c0_10 = arith.constant 0 : index
    %9 = vector.load %arg7[%c17, %c0_9, %c0_10] : memref<18x18x64xbf16, #tpu.memory_space<vmem>>, vector<1x18x64xbf16>
    %10 = vector.shape_cast %9 : vector<1x18x64xbf16> to vector<18x64xbf16>
    %11 = vector.shape_cast %0 : vector<18x64xbf16> to vector<1x18x64xbf16>
    tpu.vector_store %arg7[%c17, %c0_9, %c0_10], %11 {strides = array<i32>} : memref<18x18x64xbf16, #tpu.memory_space<vmem>>, vector<1x18x64xbf16>,
    %c0_11 = arith.constant 0 : index
    %c0_12 = arith.constant 0 : index
    %c0_13 = arith.constant 0 : index
    %12 = vector.load %arg7[%c0_11, %c0_12, %c0_13] : memref<18x18x64xbf16, #tpu.memory_space<vmem>>, vector<16x18x64xbf16>
    %13 = vector.extract_strided_slice %12 {offsets = [0, 0, 0], sizes = [16, 16, 64], strides = [1, 1, 1]} : vector<16x18x64xbf16> to vector<16x16x64xbf16>
    %14 = vector.extract_strided_slice %12 {offsets = [0, 1, 0], sizes = [16, 16, 64], strides = [1, 1, 1]} : vector<16x18x64xbf16> to vector<16x16x64xbf16>
    %15 = vector.extract_strided_slice %12 {offsets = [0, 2, 0], sizes = [16, 16, 64], strides = [1, 1, 1]} : vector<16x18x64xbf16> to vector<16x16x64xbf16>
    %16 = tpu.concatenate %13, %14, %15 in 2 : vector<16x16x64xbf16>, vector<16x16x64xbf16>, vector<16x16x64xbf16> -> vector<16x16x192xbf16>
    %17 = vector.shape_cast %16 : vector<16x16x192xbf16> to vector<256x192xbf16>
    %c0_14 = arith.constant 0 : index
    %c0_15 = arith.constant 0 : index
    %c0_16 = arith.constant 0 : index
    %18 = vector.load %arg2[%c0_14, %c0_15, %c0_16] : memref<3x192x64xbf16, #tpu.memory_space<vmem>>, vector<1x192x64xbf16>
    %19 = vector.shape_cast %18 : vector<1x192x64xbf16> to vector<192x64xbf16>
    %cst_17 = arith.constant dense<0.000000e+00> : vector<256x64xf32>
    %20 = tpu.matmul %17, %19, %cst_17 {dimension_numbers = #tpu.dot_dimension_numbers<[1], [0], [0], [1], [0, 0, 1, 1], [], []>} : vector<256x192xbf16>, vector<192x64xbf16>, vector<256x64xf32> -> vector<256x64xf32>
    %c1_18 = arith.constant 1 : index
    %c0_19 = arith.constant 0 : index
    %c0_20 = arith.constant 0 : index
    %21 = vector.load %arg7[%c1_18, %c0_19, %c0_20] : memref<18x18x64xbf16, #tpu.memory_space<vmem>>, vector<16x18x64xbf16>
    %22 = vector.extract_strided_slice %21 {offsets = [0, 0, 0], sizes = [16, 16, 64], strides = [1, 1, 1]} : vector<16x18x64xbf16> to vector<16x16x64xbf16>
    %23 = vector.extract_strided_slice %21 {offsets = [0, 1, 0], sizes = [16, 16, 64], strides = [1, 1, 1]} : vector<16x18x64xbf16> to vector<16x16x64xbf16>
    %24 = vector.extract_strided_slice %21 {offsets = [0, 2, 0], sizes = [16, 16, 64], strides = [1, 1, 1]} : vector<16x18x64xbf16> to vector<16x16x64xbf16>
    %25 = tpu.concatenate %22, %23, %24 in 2 : vector<16x16x64xbf16>, vector<16x16x64xbf16>, vector<16x16x64xbf16> -> vector<16x16x192xbf16>
    %26 = vector.shape_cast %25 : vector<16x16x192xbf16> to vector<256x192xbf16>
    %c1_21 = arith.constant 1 : index
    %c0_22 = arith.constant 0 : index
    %c0_23 = arith.constant 0 : index
    %27 = vector.load %arg2[%c1_21, %c0_22, %c0_23] : memref<3x192x64xbf16, #tpu.memory_space<vmem>>, vector<1x192x64xbf16>
    %28 = vector.shape_cast %27 : vector<1x192x64xbf16> to vector<192x64xbf16>
    %cst_24 = arith.constant dense<0.000000e+00> : vector<256x64xf32>
    %29 = tpu.matmul %26, %28, %cst_24 {dimension_numbers = #tpu.dot_dimension_numbers<[1], [0], [0], [1], [0, 0, 1, 1], [], []>} : vector<256x192xbf16>, vector<192x64xbf16>, vector<256x64xf32> -> vector<256x64xf32>
    %30 = arith.addf %20, %29 : vector<256x64xf32>
    %c2 = arith.constant 2 : index
    %c0_25 = arith.constant 0 : index
    %c0_26 = arith.constant 0 : index
    %31 = vector.load %arg7[%c2, %c0_25, %c0_26] : memref<18x18x64xbf16, #tpu.memory_space<vmem>>, vector<16x18x64xbf16>
    %32 = vector.extract_strided_slice %31 {offsets = [0, 0, 0], sizes = [16, 16, 64], strides = [1, 1, 1]} : vector<16x18x64xbf16> to vector<16x16x64xbf16>
    %33 = vector.extract_strided_slice %31 {offsets = [0, 1, 0], sizes = [16, 16, 64], strides = [1, 1, 1]} : vector<16x18x64xbf16> to vector<16x16x64xbf16>
    %34 = vector.extract_strided_slice %31 {offsets = [0, 2, 0], sizes = [16, 16, 64], strides = [1, 1, 1]} : vector<16x18x64xbf16> to vector<16x16x64xbf16>
    %35 = tpu.concatenate %32, %33, %34 in 2 : vector<16x16x64xbf16>, vector<16x16x64xbf16>, vector<16x16x64xbf16> -> vector<16x16x192xbf16>
    %36 = vector.shape_cast %35 : vector<16x16x192xbf16> to vector<256x192xbf16>
    %c2_27 = arith.constant 2 : index
    %c0_28 = arith.constant 0 : index
    %c0_29 = arith.constant 0 : index
    %37 = vector.load %arg2[%c2_27, %c0_28, %c0_29] : memref<3x192x64xbf16, #tpu.memory_space<vmem>>, vector<1x192x64xbf16>
    %38 = vector.shape_cast %37 : vector<1x192x64xbf16> to vector<192x64xbf16>
    %cst_30 = arith.constant dense<0.000000e+00> : vector<256x64xf32>
    %39 = tpu.matmul %36, %38, %cst_30 {dimension_numbers = #tpu.dot_dimension_numbers<[1], [0], [0], [1], [0, 0, 1, 1], [], []>} : vector<256x192xbf16>, vector<192x64xbf16>, vector<256x64xf32> -> vector<256x64xf32>
    %40 = arith.addf %30, %39 : vector<256x64xf32>
    %c0_31 = arith.constant 0 : index
    %c0_32 = arith.constant 0 : index
    %41 = vector.load %arg4[%c0_31, %c0_32] : memref<1x64xf32, #tpu.memory_space<vmem>>, vector<1x64xf32>
    %42 = vector.broadcast %41 : vector<1x64xf32> to vector<256x64xf32>
    %43 = arith.addf %40, %42 : vector<256x64xf32>
    %cst_33 = arith.constant 0.000000e+00 : f32
    %44 = vector.broadcast %cst_33 : f32 to vector<256x64xf32>
    %45 = arith.maximumf %43, %44 : vector<256x64xf32>
    %46 = vector.shape_cast %45 : vector<256x64xf32> to vector<16x16x64xf32>
    %47 = arith.truncf %46 : vector<16x16x64xf32> to vector<16x16x64xbf16>
    %48 = tpu.concatenate %1, %47, %1 in 1 : vector<16x1x64xbf16>, vector<16x16x64xbf16>, vector<16x1x64xbf16> -> vector<16x18x64xbf16>
    %c1_34 = arith.constant 1 : index
    %c0_35 = arith.constant 0 : index
    %c0_36 = arith.constant 0 : index
    %49 = vector.load %arg8[%c1_34, %c0_35, %c0_36] : memref<18x18x64xbf16, #tpu.memory_space<vmem>>, vector<16x18x64xbf16>
    tpu.vector_store %arg8[%c1_34, %c0_35, %c0_36], %48 {strides = array<i32>} : memref<18x18x64xbf16, #tpu.memory_space<vmem>>, vector<16x18x64xbf16>,
    %c0_37 = arith.constant 0 : index
    %c0_38 = arith.constant 0 : index
    %c0_39 = arith.constant 0 : index
    %50 = vector.load %arg8[%c0_37, %c0_38, %c0_39] : memref<18x18x64xbf16, #tpu.memory_space<vmem>>, vector<1x18x64xbf16>
    %51 = vector.shape_cast %50 : vector<1x18x64xbf16> to vector<18x64xbf16>
    %52 = vector.shape_cast %0 : vector<18x64xbf16> to vector<1x18x64xbf16>
    tpu.vector_store %arg8[%c0_37, %c0_38, %c0_39], %52 {strides = array<i32>} : memref<18x18x64xbf16, #tpu.memory_space<vmem>>, vector<1x18x64xbf16>,
    %c17_40 = arith.constant 17 : index
    %c0_41 = arith.constant 0 : index
    %c0_42 = arith.constant 0 : index
    %53 = vector.load %arg8[%c17_40, %c0_41, %c0_42] : memref<18x18x64xbf16, #tpu.memory_space<vmem>>, vector<1x18x64xbf16>
    %54 = vector.shape_cast %53 : vector<1x18x64xbf16> to vector<18x64xbf16>
    %55 = vector.shape_cast %0 : vector<18x64xbf16> to vector<1x18x64xbf16>
    tpu.vector_store %arg8[%c17_40, %c0_41, %c0_42], %55 {strides = array<i32>} : memref<18x18x64xbf16, #tpu.memory_space<vmem>>, vector<1x18x64xbf16>,
    %c0_43 = arith.constant 0 : index
    %c0_44 = arith.constant 0 : index
    %c0_45 = arith.constant 0 : index
    %56 = vector.load %arg8[%c0_43, %c0_44, %c0_45] : memref<18x18x64xbf16, #tpu.memory_space<vmem>>, vector<16x18x64xbf16>
    %57 = vector.extract_strided_slice %56 {offsets = [0, 0, 0], sizes = [16, 16, 64], strides = [1, 1, 1]} : vector<16x18x64xbf16> to vector<16x16x64xbf16>
    %58 = vector.extract_strided_slice %56 {offsets = [0, 1, 0], sizes = [16, 16, 64], strides = [1, 1, 1]} : vector<16x18x64xbf16> to vector<16x16x64xbf16>
    %59 = vector.extract_strided_slice %56 {offsets = [0, 2, 0], sizes = [16, 16, 64], strides = [1, 1, 1]} : vector<16x18x64xbf16> to vector<16x16x64xbf16>
    %60 = tpu.concatenate %57, %58, %59 in 2 : vector<16x16x64xbf16>, vector<16x16x64xbf16>, vector<16x16x64xbf16> -> vector<16x16x192xbf16>
    %61 = vector.shape_cast %60 : vector<16x16x192xbf16> to vector<256x192xbf16>
    %c0_46 = arith.constant 0 : index
    %c0_47 = arith.constant 0 : index
    %c0_48 = arith.constant 0 : index
    %62 = vector.load %arg3[%c0_46, %c0_47, %c0_48] : memref<3x192x64xbf16, #tpu.memory_space<vmem>>, vector<1x192x64xbf16>
    %63 = vector.shape_cast %62 : vector<1x192x64xbf16> to vector<192x64xbf16>
    %cst_49 = arith.constant dense<0.000000e+00> : vector<256x64xf32>
    %64 = tpu.matmul %61, %63, %cst_49 {dimension_numbers = #tpu.dot_dimension_numbers<[1], [0], [0], [1], [0, 0, 1, 1], [], []>} : vector<256x192xbf16>, vector<192x64xbf16>, vector<256x64xf32> -> vector<256x64xf32>
    %c1_50 = arith.constant 1 : index
    %c0_51 = arith.constant 0 : index
    %c0_52 = arith.constant 0 : index
    %65 = vector.load %arg8[%c1_50, %c0_51, %c0_52] : memref<18x18x64xbf16, #tpu.memory_space<vmem>>, vector<16x18x64xbf16>
    %66 = vector.extract_strided_slice %65 {offsets = [0, 0, 0], sizes = [16, 16, 64], strides = [1, 1, 1]} : vector<16x18x64xbf16> to vector<16x16x64xbf16>
    %67 = vector.extract_strided_slice %65 {offsets = [0, 1, 0], sizes = [16, 16, 64], strides = [1, 1, 1]} : vector<16x18x64xbf16> to vector<16x16x64xbf16>
    %68 = vector.extract_strided_slice %65 {offsets = [0, 2, 0], sizes = [16, 16, 64], strides = [1, 1, 1]} : vector<16x18x64xbf16> to vector<16x16x64xbf16>
    %69 = tpu.concatenate %66, %67, %68 in 2 : vector<16x16x64xbf16>, vector<16x16x64xbf16>, vector<16x16x64xbf16> -> vector<16x16x192xbf16>
    %70 = vector.shape_cast %69 : vector<16x16x192xbf16> to vector<256x192xbf16>
    %c1_53 = arith.constant 1 : index
    %c0_54 = arith.constant 0 : index
    %c0_55 = arith.constant 0 : index
    %71 = vector.load %arg3[%c1_53, %c0_54, %c0_55] : memref<3x192x64xbf16, #tpu.memory_space<vmem>>, vector<1x192x64xbf16>
    %72 = vector.shape_cast %71 : vector<1x192x64xbf16> to vector<192x64xbf16>
    %cst_56 = arith.constant dense<0.000000e+00> : vector<256x64xf32>
    %73 = tpu.matmul %70, %72, %cst_56 {dimension_numbers = #tpu.dot_dimension_numbers<[1], [0], [0], [1], [0, 0, 1, 1], [], []>} : vector<256x192xbf16>, vector<192x64xbf16>, vector<256x64xf32> -> vector<256x64xf32>
    %74 = arith.addf %64, %73 : vector<256x64xf32>
    %c2_57 = arith.constant 2 : index
    %c0_58 = arith.constant 0 : index
    %c0_59 = arith.constant 0 : index
    %75 = vector.load %arg8[%c2_57, %c0_58, %c0_59] : memref<18x18x64xbf16, #tpu.memory_space<vmem>>, vector<16x18x64xbf16>
    %76 = vector.extract_strided_slice %75 {offsets = [0, 0, 0], sizes = [16, 16, 64], strides = [1, 1, 1]} : vector<16x18x64xbf16> to vector<16x16x64xbf16>
    %77 = vector.extract_strided_slice %75 {offsets = [0, 1, 0], sizes = [16, 16, 64], strides = [1, 1, 1]} : vector<16x18x64xbf16> to vector<16x16x64xbf16>
    %78 = vector.extract_strided_slice %75 {offsets = [0, 2, 0], sizes = [16, 16, 64], strides = [1, 1, 1]} : vector<16x18x64xbf16> to vector<16x16x64xbf16>
    %79 = tpu.concatenate %76, %77, %78 in 2 : vector<16x16x64xbf16>, vector<16x16x64xbf16>, vector<16x16x64xbf16> -> vector<16x16x192xbf16>
    %80 = vector.shape_cast %79 : vector<16x16x192xbf16> to vector<256x192xbf16>
    %c2_60 = arith.constant 2 : index
    %c0_61 = arith.constant 0 : index
    %c0_62 = arith.constant 0 : index
    %81 = vector.load %arg3[%c2_60, %c0_61, %c0_62] : memref<3x192x64xbf16, #tpu.memory_space<vmem>>, vector<1x192x64xbf16>
    %82 = vector.shape_cast %81 : vector<1x192x64xbf16> to vector<192x64xbf16>
    %cst_63 = arith.constant dense<0.000000e+00> : vector<256x64xf32>
    %83 = tpu.matmul %80, %82, %cst_63 {dimension_numbers = #tpu.dot_dimension_numbers<[1], [0], [0], [1], [0, 0, 1, 1], [], []>} : vector<256x192xbf16>, vector<192x64xbf16>, vector<256x64xf32> -> vector<256x64xf32>
    %84 = arith.addf %74, %83 : vector<256x64xf32>
    %85 = vector.shape_cast %3 : vector<16x16x64xbf16> to vector<256x64xbf16>
    %86 = arith.extf %85 : vector<256x64xbf16> to vector<256x64xf32>
    %c0_64 = arith.constant 0 : index
    %c0_65 = arith.constant 0 : index
    %87 = vector.load %arg5[%c0_64, %c0_65] : memref<1x64xf32, #tpu.memory_space<vmem>>, vector<1x64xf32>
    %88 = vector.broadcast %87 : vector<1x64xf32> to vector<256x64xf32>
    %89 = arith.addf %84, %88 : vector<256x64xf32>
    %90 = arith.addf %89, %86 : vector<256x64xf32>
    %cst_66 = arith.constant 0.000000e+00 : f32
    %91 = vector.broadcast %cst_66 : f32 to vector<256x64xf32>
    %92 = arith.maximumf %90, %91 : vector<256x64xf32>
    %93 = vector.shape_cast %92 : vector<256x64xf32> to vector<16x16x64xf32>
    %c0_67 = arith.constant 0 : index
    %c0_68 = arith.constant 0 : index
    %c0_69 = arith.constant 0 : index
    %c0_70 = arith.constant 0 : index
    %94 = vector.load %arg6[%c0_67, %c0_68, %c0_69, %c0_70] : memref<1x16x16x64xf32, #tpu.memory_space<vmem>>, vector<1x16x16x64xf32>
    %95 = vector.shape_cast %94 : vector<1x16x16x64xf32> to vector<16x16x64xf32>
    %96 = vector.shape_cast %93 : vector<16x16x64xf32> to vector<1x16x16x64xf32>
    tpu.vector_store %arg6[%c0_67, %c0_68, %c0_69, %c0_70], %96 {strides = array<i32>} : memref<1x16x16x64xf32, #tpu.memory_space<vmem>>, vector<1x16x16x64xf32>,
    return
  }
  func.func @transform_0(%arg0: i32) -> (i32, i32, i32, i32) {
    %c0_i32 = arith.constant 0 : i32
    %c0_i32_0 = arith.constant 0 : i32
    %c0_i32_1 = arith.constant 0 : i32
    %c0_i32_2 = arith.constant 0 : i32
    return %arg0, %c0_i32, %c0_i32_0, %c0_i32_1 : i32, i32, i32, i32
  }
  func.func @transform_1(%arg0: i32) -> (i32, i32, i32) {
    %c0_i32 = arith.constant 0 : i32
    %c0_i32_0 = arith.constant 0 : i32
    %c0_i32_1 = arith.constant 0 : i32
    %c0_i32_2 = arith.constant 0 : i32
    return %c0_i32, %c0_i32_0, %c0_i32_1 : i32, i32, i32
  }
  func.func @transform_2(%arg0: i32) -> (i32, i32, i32) {
    %c0_i32 = arith.constant 0 : i32
    %c0_i32_0 = arith.constant 0 : i32
    %c0_i32_1 = arith.constant 0 : i32
    %c0_i32_2 = arith.constant 0 : i32
    return %c0_i32, %c0_i32_0, %c0_i32_1 : i32, i32, i32
  }
  func.func @transform_3(%arg0: i32) -> (i32, i32) {
    %c0_i32 = arith.constant 0 : i32
    %c0_i32_0 = arith.constant 0 : i32
    %c0_i32_1 = arith.constant 0 : i32
    return %c0_i32, %c0_i32_0 : i32, i32
  }
  func.func @transform_4(%arg0: i32) -> (i32, i32) {
    %c0_i32 = arith.constant 0 : i32
    %c0_i32_0 = arith.constant 0 : i32
    %c0_i32_1 = arith.constant 0 : i32
    return %c0_i32, %c0_i32_0 : i32, i32
  }
  func.func @transform_5(%arg0: i32) -> (i32, i32, i32, i32) {
    %c0_i32 = arith.constant 0 : i32
    %c0_i32_0 = arith.constant 0 : i32
    %c0_i32_1 = arith.constant 0 : i32
    %c0_i32_2 = arith.constant 0 : i32
    return %arg0, %c0_i32, %c0_i32_0, %c0_i32_1 : i32, i32, i32, i32
  }
}

</mosaic_0001>

<llo_original>
// kernel: basic_block.1
$region0: #{basic_block.1}
  #allocation0 [shape = 'u32[]', space=smem, size = 0x4, offset = 0x4, fixed_abs, tag = 'smem constant byte address 0x4 - core index']
  #allocation1 [shape = 'u32[72,128]{1,0:T(1,128)}', space=vmem, size = 0x9000, scoped, tag = 'internal scratch']
  #allocation2 [shape = 'bf16[18,18,64]{2,1,0:T(8,128)(2,1)}', space=vmem, size = 0x1b000, scoped, tag = 'scratch operand']
  #allocation3 [shape = 'bf16[18,18,64]{2,1,0:T(8,128)(2,1)}', space=vmem, size = 0x1b000, scoped, tag = 'scratch operand']
  %s0 = inlined_call_operand.vmem [shape: bf16[2,16,16,64], index: 0, kind: input, shape index: {}]
  %s1 = inlined_call_operand.vmem [shape: bf16[3,192,64], index: 1, kind: input, shape index: {}]
  %s2 = inlined_call_operand.vmem [shape: bf16[3,192,64], index: 2, kind: input, shape index: {}]
  %s3 = inlined_call_operand.vmem [shape: f32[1,64], index: 3, kind: input, shape index: {}]
  %s4 = inlined_call_operand.vmem [shape: f32[1,64], index: 4, kind: input, shape index: {}]
  %s5 = inlined_call_operand.hbm [shape: f32[2,16,16,64], index: 5, kind: output, shape index: {}]
  %s6 = sld [smem:[#allocation0]]
  $region53: #{basic_block.1} parent=0
    _
  %s8 = ssub.s32 1, %s6
  %s9 = scalar_select 0, %s8, %s6
  $region1: #{basic_block.1} parent=0
    #allocation4 [shape = 'u8[262144]{0}', space=vmem, size = 0x40000, scoped, tag = 'output window, operand 0']
    #allocation5 [shape = 's32[2]{0}', space=sflag, size = 0x8, scoped, tag = 'scoped memory for basic_block.1']
    %10 = vsyncpa [#allocation5], 0
    %s11 = scalar_lea.sflag [#allocation5], 1
    %12 = vsyncpa %s11, 0
    loop: start=0, step=1, limit=4
    $region2: #{basic_block.1} parent=1 // loop_pre_header
      _
    $region3: #{basic_block.1} parent=1 // loop_header
      %s14 = sphi 0, %s18
      %p15 = scmp.ge.s32.totalorder %s14, 4
      %s24 = sphi 0, %s26
      %s27 = sphi 0, %s24
      %s28 = sphi 0, %s27
      %s44 = sphi 0, %s28
      %s48 = sphi 0, %s48
      %s50 = sphi 0, %s48
      %s51 = sphi 0, %s50
      %s65 = sphi 0, %s51
      %s69 = sphi 0, %s69
      %s71 = sphi 0, %s69
      %s72 = sphi 0, %s71
      %s86 = sphi 0, %s72
      %s90 = sphi 0, %s90
      %s92 = sphi 0, %s90
      %s93 = sphi 0, %s92
      %s107 = sphi 0, %s93
      %s111 = sphi 0, %s111
      %s113 = sphi 0, %s111
      %s114 = sphi 0, %s113
      %s128 = sphi 0, %s114
      %s134 = sphi 0, %s136
      %s137 = sphi 0, %s134
      %s138 = sphi 0, %s137
      %s154 = sphi 0, %s138
    $region4: #{basic_block.1} parent=1 // loop_header_branch
      %17 = sbr.rel (%p15) target = $region8
    $region5: #{basic_block.1} parent=1 // loop_body
      %s19 = ssub.s32 %s14, 1
      %s20 = ssub.s32 %s14, 2
      %s21 = sadd.s32 %s14, 1
      %s22 = ssub.s32 %s14, %s21
      %p23 = scmp.eq.s32.totalorder %s22, 0
      %s25 = sadd.s32 %s24, 1
      %s26 = scalar_select %p23, %s24, %s25
      %p29 = pneg %p23
      %p30 = scmp.eq.s32.totalorder %s14, 1
      %p31 = por %p29, %p30
      %p32 = scmp.ne.s32.totalorder %s24, %s27
      %p33 = scmp.eq.s32.totalorder %s14, 0
      %p34 = por %p32, %p33
      %p35 = scmp.ne.s32.totalorder %s24, %s27
      %p36 = scmp.eq.s32.totalorder %s19, 1
      %p37 = por %p35, %p36
      %p38 = scmp.ne.s32.totalorder %s27, %s28
      %p39 = scmp.eq.s32.totalorder %s19, 0
      %p40 = por %p38, %p39
      %p41 = scmp.ne.s32.totalorder %s27, %s28
      %p42 = scmp.eq.s32.totalorder %s20, 1
      %p43 = por %p41, %p42
      %p45 = scmp.ne.s32.totalorder %s28, %s44
      %p46 = scmp.eq.s32.totalorder %s20, 0
      %p47 = por %p45, %p46
      %s49 = sadd.s32 %s48, 1
      %p52 = scmp.eq.s32.totalorder %s14, 1
      %p53 = scmp.ne.s32.totalorder %s48, %s50
      %p54 = scmp.eq.s32.totalorder %s14, 0
      %p55 = por %p53, %p54
      %p56 = scmp.ne.s32.totalorder %s48, %s50
      %p57 = scmp.eq.s32.totalorder %s19, 1
      %p58 = por %p56, %p57
      %p59 = scmp.ne.s32.totalorder %s50, %s51
      %p60 = scmp.eq.s32.totalorder %s19, 0
      %p61 = por %p59, %p60
      %p62 = scmp.ne.s32.totalorder %s50, %s51
      %p63 = scmp.eq.s32.totalorder %s20, 1
      %p64 = por %p62, %p63
      %p66 = scmp.ne.s32.totalorder %s51, %s65
      %p67 = scmp.eq.s32.totalorder %s20, 0
      %p68 = por %p66, %p67
      %s70 = sadd.s32 %s69, 1
      %p73 = scmp.eq.s32.totalorder %s14, 1
      %p74 = scmp.ne.s32.totalorder %s69, %s71
      %p75 = scmp.eq.s32.totalorder %s14, 0
      %p76 = por %p74, %p75
      %p77 = scmp.ne.s32.totalorder %s69, %s71
      %p78 = scmp.eq.s32.totalorder %s19, 1
      %p79 = por %p77, %p78
      %p80 = scmp.ne.s32.totalorder %s71, %s72
      %p81 = scmp.eq.s32.totalorder %s19, 0
      %p82 = por %p80, %p81
      %p83 = scmp.ne.s32.totalorder %s71, %s72
      %p84 = scmp.eq.s32.totalorder %s20, 1
      %p85 = por %p83, %p84
      %p87 = scmp.ne.s32.totalorder %s72, %s86
      %p88 = scmp.eq.s32.totalorder %s20, 0
      %p89 = por %p87, %p88
      %s91 = sadd.s32 %s90, 1
      %p94 = scmp.eq.s32.totalorder %s14, 1
      %p95 = scmp.ne.s32.totalorder %s90, %s92
      %p96 = scmp.eq.s32.totalorder %s14, 0
      %p97 = por %p95, %p96
      %p98 = scmp.ne.s32.totalorder %s90, %s92
      %p99 = scmp.eq.s32.totalorder %s19, 1
      %p100 = por %p98, %p99
      %p101 = scmp.ne.s32.totalorder %s92, %s93
      %p102 = scmp.eq.s32.totalorder %s19, 0
      %p103 = por %p101, %p102
      %p104 = scmp.ne.s32.totalorder %s92, %s93
      %p105 = scmp.eq.s32.totalorder %s20, 1
      %p106 = por %p104, %p105
      %p108 = scmp.ne.s32.totalorder %s93, %s107
      %p109 = scmp.eq.s32.totalorder %s20, 0
      %p110 = por %p108, %p109
      %s112 = sadd.s32 %s111, 1
      %p115 = scmp.eq.s32.totalorder %s14, 1
      %p116 = scmp.ne.s32.totalorder %s111, %s113
      %p117 = scmp.eq.s32.totalorder %s14, 0
      %p118 = por %p116, %p117
      %p119 = scmp.ne.s32.totalorder %s111, %s113
      %p120 = scmp.eq.s32.totalorder %s19, 1
      %p121 = por %p119, %p120
      %p122 = scmp.ne.s32.totalorder %s113, %s114
      %p123 = scmp.eq.s32.totalorder %s19, 0
      %p124 = por %p122, %p123
      %p125 = scmp.ne.s32.totalorder %s113, %s114
      %p126 = scmp.eq.s32.totalorder %s20, 1
      %p127 = por %p125, %p126
      %p129 = scmp.ne.s32.totalorder %s114, %s128
      %p130 = scmp.eq.s32.totalorder %s20, 0
      %p131 = por %p129, %p130
      %s132 = ssub.s32 %s14, %s21
      %p133 = scmp.eq.s32.totalorder %s132, 0
      %s135 = sadd.s32 %s134, 1
      %s136 = scalar_select %p133, %s134, %s135
      %p139 = pneg %p133
      %p140 = scmp.eq.s32.totalorder %s14, 1
      %p141 = por %p139, %p140
      %p142 = scmp.ne.s32.totalorder %s134, %s137
      %p143 = scmp.eq.s32.totalorder %s14, 0
      %p144 = por %p142, %p143
      %p145 = scmp.ne.s32.totalorder %s134, %s137
      %p146 = scmp.eq.s32.totalorder %s19, 1
      %p147 = por %p145, %p146
      %p148 = scmp.ne.s32.totalorder %s137, %s138
      %p149 = scmp.eq.s32.totalorder %s19, 0
      %p150 = por %p148, %p149
      %p151 = scmp.ne.s32.totalorder %s137, %s138
      %p152 = scmp.eq.s32.totalorder %s20, 1
      %p153 = por %p151, %p152
      %p155 = scmp.ne.s32.totalorder %s138, %s154
      %p156 = scmp.eq.s32.totalorder %s20, 0
      %p157 = por %p155, %p156
      %p158 = scmp.le.s32.totalorder 1, %s14
      %p159 = scmp.lt.s32.totalorder %s14, 3
      %p160 = pnand %p158, %p159
      %p161 = pneg %p160
      // Predicated region
      $region9: #{basic_block.1} parent=5 // pred_check
        _
      $region10: #{basic_block.1} parent=5 // pred_check_branch
        %163 = sbr.rel (%p160) target = $region12
      $region11: #{basic_block.1} parent=5 // pred_region
        %s164 = ssub.s32 %s14, 1
        // Predicated region
        $region13: #{basic_block.1} parent=11 // pred_check
          %p165 = pneg %p61
        $region14: #{basic_block.1} parent=11 // pred_check_branch
          %167 = sbr.rel (%p165) target = $region16
        $region15: #{basic_block.1} parent=11 // pred_region
          _
        $region16: #{basic_block.1} parent=11 // pred_fallthru
          _
        // Predicated region
        $region17: #{basic_block.1} parent=11 // pred_check
          %p168 = pneg %p82
        $region18: #{basic_block.1} parent=11 // pred_check_branch
          %170 = sbr.rel (%p168) target = $region20
        $region19: #{basic_block.1} parent=11 // pred_region
          _
        $region20: #{basic_block.1} parent=11 // pred_fallthru
          _
        // Predicated region
        $region21: #{basic_block.1} parent=11 // pred_check
          %p171 = pneg %p103
        $region22: #{basic_block.1} parent=11 // pred_check_branch
          %173 = sbr.rel (%p171) target = $region24
        $region23: #{basic_block.1} parent=11 // pred_region
          _
        $region24: #{basic_block.1} parent=11 // pred_fallthru
          _
        // Predicated region
        $region25: #{basic_block.1} parent=11 // pred_check
          %p174 = pneg %p124
        $region26: #{basic_block.1} parent=11 // pred_check_branch
          %176 = sbr.rel (%p174) target = $region28
        $region27: #{basic_block.1} parent=11 // pred_region
          _
        $region28: #{basic_block.1} parent=11 // pred_fallthru
          _
      $region12: #{basic_block.1} parent=5 // pred_fallthru
        _
      %p177 = scmp.lt.s32.totalorder %s14, 2
      // Predicated region
      $region29: #{basic_block.1} parent=5 // pred_check
        %p178 = pneg %p177
      $region30: #{basic_block.1} parent=5 // pred_check_branch
        %180 = sbr.rel (%p178) target = $region32
      $region31: #{basic_block.1} parent=5 // pred_region
        // Predicated region
        $region33: #{basic_block.1} parent=31 // pred_check
          %p181 = pneg %p34
        $region34: #{basic_block.1} parent=31 // pred_check_branch
          %183 = sbr.rel (%p181) target = $region36
        $region35: #{basic_block.1} parent=31 // pred_region
          %p184 = scmp.lt.s32.totalorder %s14, 1
          %s185 = scalar_select %p184, %s14, 1
          %s186 = smul.addr %s185, 32
          %s187 = smul.addr %s186, 4
          %s188 = scalar_lea.vmem %s0, %s187
        $region36: #{basic_block.1} parent=31 // pred_fallthru
          _
      $region32: #{basic_block.1} parent=5 // pred_fallthru
        _
      %p189 = scmp.le.s32.totalorder 1, %s14
      %p190 = scmp.lt.s32.totalorder %s14, 3
      %p191 = pnand %p189, %p190
      %p192 = pneg %p191
      // Predicated region
      $region37: #{basic_block.1} parent=5 // pred_check
        _
      $region38: #{basic_block.1} parent=5 // pred_check_branch
        %194 = sbr.rel (%p191) target = $region40
      $region39: #{basic_block.1} parent=5 // pred_region
        %s195 = ssub.s32 %s14, 1
        %p196 = scmp.lt.s32.totalorder %s19, 1
        %s197 = scalar_select %p196, %s19, 1
        %s198 = smul.addr %s197, 32
        %s199 = smul.addr %s198, 4
        %s200 = scalar_lea.vmem %s0, %s199
        %p201 = pneg %p40
        %p202 = pneg %p37
        %p203 = pneg %p61
        %p204 = pneg %p58
        %p205 = pneg %p82
        %p206 = pneg %p79
        %p207 = pneg %p103
        %p208 = pneg %p100
        %p209 = pneg %p124
        %p210 = pneg %p121
        %p211 = pneg %p150
        %p212 = pneg %p147
        %s213 = sand.u32 %s137, 1
        %s214 = scalar_lea.sflag [#allocation5], %s213
        %s215 = sand.u32 %s137, 1
        %s216 = smul.addr %s215, 256
        %s217 = scalar_lea.vmem [#allocation4], %s216
        %p218 = scmp.lt.s32.totalorder %s19, 1
        %s219 = scalar_select %p218, %s19, 1
        %s220 = smul.addr %s219, 32
        %s221 = smul.addr %s220, 4
        %s222 = scalar_lea.vmem %s0, %s221
        %v224 = vld [vmem:[%s222] sm:$0xf]
        %v225 = vld [vmem:[%s222 + $0x4] sm:$0xf]
        %v226 = vld [vmem:[%s222 + $0x8] sm:$0xf]
        %v227 = vld [vmem:[%s222 + $0xc] sm:$0xf]
        %v228 = vld [vmem:[%s222 + $0x10] sm:$0xf]
        %v229 = vld [vmem:[%s222 + $0x14] sm:$0xf]
        %v230 = vld [vmem:[%s222 + $0x18] sm:$0xf]
        %v231 = vld [vmem:[%s222 + $0x1c] sm:$0xf]
        %v232 = vld [vmem:[%s222 + $0x20] sm:$0xf]
        %v233 = vld [vmem:[%s222 + $0x24] sm:$0xf]
        %v234 = vld [vmem:[%s222 + $0x28] sm:$0xf]
        %v235 = vld [vmem:[%s222 + $0x2c] sm:$0xf]
        %v236 = vld [vmem:[%s222 + $0x30] sm:$0xf]
        %v237 = vld [vmem:[%s222 + $0x34] sm:$0xf]
        %v238 = vld [vmem:[%s222 + $0x38] sm:$0xf]
        %v239 = vld [vmem:[%s222 + $0x3c] sm:$0xf]
        %v240 = vld [vmem:[%s222 + $0x40] sm:$0xf]
        %v241 = vld [vmem:[%s222 + $0x44] sm:$0xf]
        %v242 = vld [vmem:[%s222 + $0x48] sm:$0xf]
        %v243 = vld [vmem:[%s222 + $0x4c] sm:$0xf]
        %v244 = vld [vmem:[%s222 + $0x50] sm:$0xf]
        %v245 = vld [vmem:[%s222 + $0x54] sm:$0xf]
        %v246 = vld [vmem:[%s222 + $0x58] sm:$0xf]
        %v247 = vld [vmem:[%s222 + $0x5c] sm:$0xf]
        %v248 = vld [vmem:[%s222 + $0x60] sm:$0xf]
        %v249 = vld [vmem:[%s222 + $0x64] sm:$0xf]
        %v250 = vld [vmem:[%s222 + $0x68] sm:$0xf]
        %v251 = vld [vmem:[%s222 + $0x6c] sm:$0xf]
        %v252 = vld [vmem:[%s222 + $0x70] sm:$0xf]
        %v253 = vld [vmem:[%s222 + $0x74] sm:$0xf]
        %v254 = vld [vmem:[%s222 + $0x78] sm:$0xf]
        %v255 = vld [vmem:[%s222 + $0x7c] sm:$0xf]
        %v288 = vunpack.c.l.b16 %v224
        %v289 = vunpack.c.l.b16 %v225
        %v290 = vunpack.c.l.b16 %v226
        %v291 = vunpack.c.l.b16 %v227
        %v292 = vunpack.c.l.b16 %v228
        %v293 = vunpack.c.l.b16 %v229
        %v294 = vunpack.c.l.b16 %v230
        %v295 = vunpack.c.l.b16 %v231
        %v296 = vunpack.c.l.b16 %v232
        %v297 = vunpack.c.l.b16 %v233
        %v298 = vunpack.c.l.b16 %v234
        %v299 = vunpack.c.l.b16 %v235
        %v300 = vunpack.c.l.b16 %v236
        %v301 = vunpack.c.l.b16 %v237
        %v302 = vunpack.c.l.b16 %v238
        %v303 = vunpack.c.l.b16 %v239
        %v304 = vunpack.c.l.b16 %v240
        %v305 = vunpack.c.l.b16 %v241
        %v306 = vunpack.c.l.b16 %v242
        %v307 = vunpack.c.l.b16 %v243
        %v308 = vunpack.c.l.b16 %v244
        %v309 = vunpack.c.l.b16 %v245
        %v310 = vunpack.c.l.b16 %v246
        %v311 = vunpack.c.l.b16 %v247
        %v312 = vunpack.c.l.b16 %v248
        %v313 = vunpack.c.l.b16 %v249
        %v314 = vunpack.c.l.b16 %v250
        %v315 = vunpack.c.l.b16 %v251
        %v316 = vunpack.c.l.b16 %v252
        %v317 = vunpack.c.l.b16 %v253
        %v318 = vunpack.c.l.b16 %v254
        %v319 = vunpack.c.l.b16 %v255
        %v320 = vpack.c.b16 %v289, %v288
        %v321 = vpack.c.b16 %v291, %v290
        %v322 = vpack.c.b16 %v293, %v292
        %v323 = vpack.c.b16 %v295, %v294
        %v324 = vpack.c.b16 %v297, %v296
        %v325 = vpack.c.b16 %v299, %v298
        %v326 = vpack.c.b16 %v301, %v300
        %v327 = vpack.c.b16 %v303, %v302
        %v328 = vpack.c.b16 %v305, %v304
        %v329 = vpack.c.b16 %v307, %v306
        %v330 = vpack.c.b16 %v309, %v308
        %v331 = vpack.c.b16 %v311, %v310
        %v332 = vpack.c.b16 %v313, %v312
        %v333 = vpack.c.b16 %v315, %v314
        %v334 = vpack.c.b16 %v317, %v316
        %v335 = vpack.c.b16 %v319, %v318
        %v337 = vshrl.u32 %v320, 16
        %v339 = vrot.slane %v337, 7
        %v340 = vshll.u32 %v320, 16
        %v342 = vor.u32 %v339, %v340
        %v344 = vshrl.u32 %v321, 16
        %v346 = vrot.slane %v344, 7
        %v347 = vshll.u32 %v321, 16
        %v349 = vor.u32 %v346, %v347
        %v351 = vshrl.u32 %v322, 16
        %v353 = vrot.slane %v351, 7
        %v354 = vshll.u32 %v322, 16
        %v356 = vor.u32 %v353, %v354
        %v358 = vshrl.u32 %v323, 16
        %v360 = vrot.slane %v358, 7
        %v361 = vshll.u32 %v323, 16
        %v363 = vor.u32 %v360, %v361
        %v365 = vshrl.u32 %v324, 16
        %v367 = vrot.slane %v365, 7
        %v368 = vshll.u32 %v324, 16
        %v370 = vor.u32 %v367, %v368
        %v372 = vshrl.u32 %v325, 16
        %v374 = vrot.slane %v372, 7
        %v375 = vshll.u32 %v325, 16
        %v377 = vor.u32 %v374, %v375
        %v379 = vshrl.u32 %v326, 16
        %v381 = vrot.slane %v379, 7
        %v382 = vshll.u32 %v326, 16
        %v384 = vor.u32 %v381, %v382
        %v386 = vshrl.u32 %v327, 16
        %v388 = vrot.slane %v386, 7
        %v389 = vshll.u32 %v327, 16
        %v391 = vor.u32 %v388, %v389
        %v393 = vshrl.u32 %v328, 16
        %v395 = vrot.slane %v393, 7
        %v396 = vshll.u32 %v328, 16
        %v398 = vor.u32 %v395, %v396
        %v400 = vshrl.u32 %v329, 16
        %v402 = vrot.slane %v400, 7
        %v403 = vshll.u32 %v329, 16
        %v405 = vor.u32 %v402, %v403
        %v407 = vshrl.u32 %v330, 16
        %v409 = vrot.slane %v407, 7
        %v410 = vshll.u32 %v330, 16
        %v412 = vor.u32 %v409, %v410
        %v414 = vshrl.u32 %v331, 16
        %v416 = vrot.slane %v414, 7
        %v417 = vshll.u32 %v331, 16
        %v419 = vor.u32 %v416, %v417
        %v421 = vshrl.u32 %v332, 16
        %v423 = vrot.slane %v421, 7
        %v424 = vshll.u32 %v332, 16
        %v426 = vor.u32 %v423, %v424
        %v428 = vshrl.u32 %v333, 16
        %v430 = vrot.slane %v428, 7
        %v431 = vshll.u32 %v333, 16
        %v433 = vor.u32 %v430, %v431
        %v435 = vshrl.u32 %v334, 16
        %v437 = vrot.slane %v435, 7
        %v438 = vshll.u32 %v334, 16
        %v440 = vor.u32 %v437, %v438
        %v442 = vshrl.u32 %v335, 16
        %v444 = vrot.slane %v442, 7
        %v445 = vshll.u32 %v335, 16
        %v447 = vor.u32 %v444, %v445
        %vm480 = vcmask 1040384
        %vm481 = vsmask.f32 256
        %vm482 = vmand %vm480, %vm481
        %v483 = vsel %vm482, 0, %v342
        %v484 = vsel %vm482, 0, %v349
        %v485 = vsel %vm482, 0, %v356
        %v486 = vsel %vm482, 0, %v363
        %v487 = vsel %vm482, 0, %v370
        %v488 = vsel %vm482, 0, %v377
        %v489 = vsel %vm482, 0, %v384
        %v490 = vsel %vm482, 0, %v391
        %v491 = vsel %vm482, 0, %v398
        %v492 = vsel %vm482, 0, %v405
        %v493 = vsel %vm482, 0, %v412
        %v494 = vsel %vm482, 0, %v419
        %v495 = vsel %vm482, 0, %v426
        %v496 = vsel %vm482, 0, %v433
        %v497 = vsel %vm482, 0, %v440
        %v498 = vsel %vm482, 0, %v447
        %v499 = vsel %vm482, %v339, 0
        %v500 = vsel %vm482, %v346, 0
        %v501 = vsel %vm482, %v353, 0
        %v502 = vsel %vm482, %v360, 0
        %v503 = vsel %vm482, %v367, 0
        %v504 = vsel %vm482, %v374, 0
        %v505 = vsel %vm482, %v381, 0
        %v506 = vsel %vm482, %v388, 0
        %v507 = vsel %vm482, %v395, 0
        %v508 = vsel %vm482, %v402, 0
        %v509 = vsel %vm482, %v409, 0
        %v510 = vsel %vm482, %v416, 0
        %v511 = vsel %vm482, %v423, 0
        %v512 = vsel %vm482, %v430, 0
        %v513 = vsel %vm482, %v437, 0
        %v514 = vsel %vm482, %v444, 0
        %v547 = vunpack.c.l.b16 %v483
        %v548 = vunpack.c.h.b16 %v483
        %v549 = vunpack.c.l.b16 %v499
        %v550 = vunpack.c.l.b16 %v484
        %v551 = vunpack.c.h.b16 %v484
        %v552 = vunpack.c.l.b16 %v500
        %v553 = vunpack.c.l.b16 %v485
        %v554 = vunpack.c.h.b16 %v485
        %v555 = vunpack.c.l.b16 %v501
        %v556 = vunpack.c.l.b16 %v486
        %v557 = vunpack.c.h.b16 %v486
        %v558 = vunpack.c.l.b16 %v502
        %v559 = vunpack.c.l.b16 %v487
        %v560 = vunpack.c.h.b16 %v487
        %v561 = vunpack.c.l.b16 %v503
        %v562 = vunpack.c.l.b16 %v488
        %v563 = vunpack.c.h.b16 %v488
        %v564 = vunpack.c.l.b16 %v504
        %v565 = vunpack.c.l.b16 %v489
        %v566 = vunpack.c.h.b16 %v489
        %v567 = vunpack.c.l.b16 %v505
        %v568 = vunpack.c.l.b16 %v490
        %v569 = vunpack.c.h.b16 %v490
        %v570 = vunpack.c.l.b16 %v506
        %v571 = vunpack.c.l.b16 %v491
        %v572 = vunpack.c.h.b16 %v491
        %v573 = vunpack.c.l.b16 %v507
        %v574 = vunpack.c.l.b16 %v492
        %v575 = vunpack.c.h.b16 %v492
        %v576 = vunpack.c.l.b16 %v508
        %v577 = vunpack.c.l.b16 %v493
        %v578 = vunpack.c.h.b16 %v493
        %v579 = vunpack.c.l.b16 %v509
        %v580 = vunpack.c.l.b16 %v494
        %v581 = vunpack.c.h.b16 %v494
        %v582 = vunpack.c.l.b16 %v510
        %v583 = vunpack.c.l.b16 %v495
        %v584 = vunpack.c.h.b16 %v495
        %v585 = vunpack.c.l.b16 %v511
        %v586 = vunpack.c.l.b16 %v496
        %v587 = vunpack.c.h.b16 %v496
        %v588 = vunpack.c.l.b16 %v512
        %v589 = vunpack.c.l.b16 %v497
        %v590 = vunpack.c.h.b16 %v497
        %v591 = vunpack.c.l.b16 %v513
        %v592 = vunpack.c.l.b16 %v498
        %v593 = vunpack.c.h.b16 %v498
        %v594 = vunpack.c.l.b16 %v514
        %v595 = vpack.c.b16 %v547, %v547
        %v596 = vpack.c.b16 %v548, %v548
        %v597 = vpack.c.b16 %v549, %v549
        %v598 = vpack.c.b16 %v550, %v550
        %v599 = vpack.c.b16 %v551, %v551
        %v600 = vpack.c.b16 %v552, %v552
        %v601 = vpack.c.b16 %v553, %v553
        %v602 = vpack.c.b16 %v554, %v554
        %v603 = vpack.c.b16 %v555, %v555
        %v604 = vpack.c.b16 %v556, %v556
        %v605 = vpack.c.b16 %v557, %v557
        %v606 = vpack.c.b16 %v558, %v558
        %v607 = vpack.c.b16 %v559, %v559
        %v608 = vpack.c.b16 %v560, %v560
        %v609 = vpack.c.b16 %v561, %v561
        %v610 = vpack.c.b16 %v562, %v562
        %v611 = vpack.c.b16 %v563, %v563
        %v612 = vpack.c.b16 %v564, %v564
        %v613 = vpack.c.b16 %v565, %v565
        %v614 = vpack.c.b16 %v566, %v566
        %v615 = vpack.c.b16 %v567, %v567
        %v616 = vpack.c.b16 %v568, %v568
        %v617 = vpack.c.b16 %v569, %v569
        %v618 = vpack.c.b16 %v570, %v570
        %v619 = vpack.c.b16 %v571, %v571
        %v620 = vpack.c.b16 %v572, %v572
        %v621 = vpack.c.b16 %v573, %v573
        %v622 = vpack.c.b16 %v574, %v574
        %v623 = vpack.c.b16 %v575, %v575
        %v624 = vpack.c.b16 %v576, %v576
        %v625 = vpack.c.b16 %v577, %v577
        %v626 = vpack.c.b16 %v578, %v578
        %v627 = vpack.c.b16 %v579, %v579
        %v628 = vpack.c.b16 %v580, %v580
        %v629 = vpack.c.b16 %v581, %v581
        %v630 = vpack.c.b16 %v582, %v582
        %v631 = vpack.c.b16 %v583, %v583
        %v632 = vpack.c.b16 %v584, %v584
        %v633 = vpack.c.b16 %v585, %v585
        %v634 = vpack.c.b16 %v586, %v586
        %v635 = vpack.c.b16 %v587, %v587
        %v636 = vpack.c.b16 %v588, %v588
        %v637 = vpack.c.b16 %v589, %v589
        %v638 = vpack.c.b16 %v590, %v590
        %v639 = vpack.c.b16 %v591, %v591
        %v640 = vpack.c.b16 %v592, %v592
        %v641 = vpack.c.b16 %v593, %v593
        %v642 = vpack.c.b16 %v594, %v594
        %s691 = scalar_lea.vmem [#allocation2], 12
        %vm692 = vcmask 519168
        %693 = vst.msk [vmem:[%s691] sm:$0xf] %vm692, %v595
        %694 = vst.msk [vmem:[%s691 + $0x4] sm:$0xf] %vm692, %v596
        %vm695 = vcmask 516096
        %696 = vst.msk [vmem:[%s691 + $0x8] sm:$0x1] %vm695, %v597
        %697 = vst.msk [vmem:[%s691 + $0xc] sm:$0xf] %vm692, %v598
        %698 = vst.msk [vmem:[%s691 + $0x10] sm:$0xf] %vm692, %v599
        %699 = vst.msk [vmem:[%s691 + $0x14] sm:$0x1] %vm695, %v600
        %700 = vst.msk [vmem:[%s691 + $0x18] sm:$0xf] %vm692, %v601
        %701 = vst.msk [vmem:[%s691 + $0x1c] sm:$0xf] %vm692, %v602
        %702 = vst.msk [vmem:[%s691 + $0x20] sm:$0x1] %vm695, %v603
        %703 = vst.msk [vmem:[%s691 + $0x24] sm:$0xf] %vm692, %v604
        %704 = vst.msk [vmem:[%s691 + $0x28] sm:$0xf] %vm692, %v605
        %705 = vst.msk [vmem:[%s691 + $0x2c] sm:$0x1] %vm695, %v606
        %706 = vst.msk [vmem:[%s691 + $0x30] sm:$0xf] %vm692, %v607
        %707 = vst.msk [vmem:[%s691 + $0x34] sm:$0xf] %vm692, %v608
        %708 = vst.msk [vmem:[%s691 + $0x38] sm:$0x1] %vm695, %v609
        %709 = vst.msk [vmem:[%s691 + $0x3c] sm:$0xf] %vm692, %v610
        %710 = vst.msk [vmem:[%s691 + $0x40] sm:$0xf] %vm692, %v611
        %711 = vst.msk [vmem:[%s691 + $0x44] sm:$0x1] %vm695, %v612
        %712 = vst.msk [vmem:[%s691 + $0x48] sm:$0xf] %vm692, %v613
        %713 = vst.msk [vmem:[%s691 + $0x4c] sm:$0xf] %vm692, %v614
        %714 = vst.msk [vmem:[%s691 + $0x50] sm:$0x1] %vm695, %v615
        %715 = vst.msk [vmem:[%s691 + $0x54] sm:$0xf] %vm692, %v616
        %716 = vst.msk [vmem:[%s691 + $0x58] sm:$0xf] %vm692, %v617
        %717 = vst.msk [vmem:[%s691 + $0x5c] sm:$0x1] %vm695, %v618
        %718 = vst.msk [vmem:[%s691 + $0x60] sm:$0xf] %vm692, %v619
        %719 = vst.msk [vmem:[%s691 + $0x64] sm:$0xf] %vm692, %v620
        %720 = vst.msk [vmem:[%s691 + $0x68] sm:$0x1] %vm695, %v621
        %721 = vst.msk [vmem:[%s691 + $0x6c] sm:$0xf] %vm692, %v622
        %722 = vst.msk [vmem:[%s691 + $0x70] sm:$0xf] %vm692, %v623
        %723 = vst.msk [vmem:[%s691 + $0x74] sm:$0x1] %vm695, %v624
        %724 = vst.msk [vmem:[%s691 + $0x78] sm:$0xf] %vm692, %v625
        %725 = vst.msk [vmem:[%s691 + $0x7c] sm:$0xf] %vm692, %v626
        %726 = vst.msk [vmem:[%s691 + $0x80] sm:$0x1] %vm695, %v627
        %727 = vst.msk [vmem:[%s691 + $0x84] sm:$0xf] %vm692, %v628
        %728 = vst.msk [vmem:[%s691 + $0x88] sm:$0xf] %vm692, %v629
        %729 = vst.msk [vmem:[%s691 + $0x8c] sm:$0x1] %vm695, %v630
        %730 = vst.msk [vmem:[%s691 + $0x90] sm:$0xf] %vm692, %v631
        %731 = vst.msk [vmem:[%s691 + $0x94] sm:$0xf] %vm692, %v632
        %732 = vst.msk [vmem:[%s691 + $0x98] sm:$0x1] %vm695, %v633
        %733 = vst.msk [vmem:[%s691 + $0x9c] sm:$0xf] %vm692, %v634
        %734 = vst.msk [vmem:[%s691 + $0xa0] sm:$0xf] %vm692, %v635
        %735 = vst.msk [vmem:[%s691 + $0xa4] sm:$0x1] %vm695, %v636
        %736 = vst.msk [vmem:[%s691 + $0xa8] sm:$0xf] %vm692, %v637
        %737 = vst.msk [vmem:[%s691 + $0xac] sm:$0xf] %vm692, %v638
        %738 = vst.msk [vmem:[%s691 + $0xb0] sm:$0x1] %vm695, %v639
        %739 = vst.msk [vmem:[%s691 + $0xb4] sm:$0xf] %vm692, %v640
        %740 = vst.msk [vmem:[%s691 + $0xb8] sm:$0xf] %vm692, %v641
        %741 = vst.msk [vmem:[%s691 + $0xbc] sm:$0x1] %vm695, %v642
        %742 = vst.msk [vmem:[#allocation2] sm:$0xf] %vm692, 0
        %743 = vst.msk [vmem:[#allocation2 + $0x4] sm:$0xf] %vm692, 0
        %744 = vst.msk [vmem:[#allocation2 + $0x8] sm:$0x1] %vm695, 0
        %s745 = scalar_lea.vmem [#allocation2], 204
        %746 = vst.msk [vmem:[%s745] sm:$0xf] %vm692, 0
        %747 = vst.msk [vmem:[%s745 + $0x4] sm:$0xf] %vm692, 0
        %748 = vst.msk [vmem:[%s745 + $0x8] sm:$0x1] %vm695, 0
        %v749 = vld [vmem:[#allocation2] sm:$0xf]
        %v750 = vld [vmem:[#allocation2 + $0x4] sm:$0xf]
        %v751 = vld [vmem:[#allocation2 + $0x8] sm:$0x1]
        %v752 = vld [vmem:[#allocation2 + $0xc] sm:$0xf]
        %v753 = vld [vmem:[#allocation2 + $0x10] sm:$0xf]
        %v754 = vld [vmem:[#allocation2 + $0x14] sm:$0x1]
        %v755 = vld [vmem:[#allocation2 + $0x18] sm:$0xf]
        %v756 = vld [vmem:[#allocation2 + $0x1c] sm:$0xf]
        %v757 = vld [vmem:[#allocation2 + $0x20] sm:$0x1]
        %v758 = vld [vmem:[#allocation2 + $0x24] sm:$0xf]
        %v759 = vld [vmem:[#allocation2 + $0x28] sm:$0xf]
        %v760 = vld [vmem:[#allocation2 + $0x2c] sm:$0x1]
        %v761 = vld [vmem:[#allocation2 + $0x30] sm:$0xf]
        %v762 = vld [vmem:[#allocation2 + $0x34] sm:$0xf]
        %v763 = vld [vmem:[#allocation2 + $0x38] sm:$0x1]
        %v764 = vld [vmem:[#allocation2 + $0x3c] sm:$0xf]
        %v765 = vld [vmem:[#allocation2 + $0x40] sm:$0xf]
        %v766 = vld [vmem:[#allocation2 + $0x44] sm:$0x1]
        %v767 = vld [vmem:[#allocation2 + $0x48] sm:$0xf]
        %v768 = vld [vmem:[#allocation2 + $0x4c] sm:$0xf]
        %v769 = vld [vmem:[#allocation2 + $0x50] sm:$0x1]
        %v770 = vld [vmem:[#allocation2 + $0x54] sm:$0xf]
        %v771 = vld [vmem:[#allocation2 + $0x58] sm:$0xf]
        %v772 = vld [vmem:[#allocation2 + $0x5c] sm:$0x1]
        %v773 = vld [vmem:[#allocation2 + $0x60] sm:$0xf]
        %v774 = vld [vmem:[#allocation2 + $0x64] sm:$0xf]
        %v775 = vld [vmem:[#allocation2 + $0x68] sm:$0x1]
        %v776 = vld [vmem:[#allocation2 + $0x6c] sm:$0xf]
        %v777 = vld [vmem:[#allocation2 + $0x70] sm:$0xf]
        %v778 = vld [vmem:[#allocation2 + $0x74] sm:$0x1]
        %v779 = vld [vmem:[#allocation2 + $0x78] sm:$0xf]
        %v780 = vld [vmem:[#allocation2 + $0x7c] sm:$0xf]
        %v781 = vld [vmem:[#allocation2 + $0x80] sm:$0x1]
        %v782 = vld [vmem:[#allocation2 + $0x84] sm:$0xf]
        %v783 = vld [vmem:[#allocation2 + $0x88] sm:$0xf]
        %v784 = vld [vmem:[#allocation2 + $0x8c] sm:$0x1]
        %v785 = vld [vmem:[#allocation2 + $0x90] sm:$0xf]
        %v786 = vld [vmem:[#allocation2 + $0x94] sm:$0xf]
        %v787 = vld [vmem:[#allocation2 + $0x98] sm:$0x1]
        %v788 = vld [vmem:[#allocation2 + $0x9c] sm:$0xf]
        %v789 = vld [vmem:[#allocation2 + $0xa0] sm:$0xf]
        %v790 = vld [vmem:[#allocation2 + $0xa4] sm:$0x1]
        %v791 = vld [vmem:[#allocation2 + $0xa8] sm:$0xf]
        %v792 = vld [vmem:[#allocation2 + $0xac] sm:$0xf]
        %v793 = vld [vmem:[#allocation2 + $0xb0] sm:$0x1]
        %v794 = vld [vmem:[#allocation2 + $0xb4] sm:$0xf]
        %v795 = vld [vmem:[#allocation2 + $0xb8] sm:$0xf]
        %v796 = vld [vmem:[#allocation2 + $0xbc] sm:$0x1]
        %v829 = vunpack.c.l.b16 %v749
        %v830 = vunpack.c.l.b16 %v750
        %v831 = vunpack.c.l.b16 %v752
        %v832 = vunpack.c.l.b16 %v753
        %v833 = vunpack.c.l.b16 %v755
        %v834 = vunpack.c.l.b16 %v756
        %v835 = vunpack.c.l.b16 %v758
        %v836 = vunpack.c.l.b16 %v759
        %v837 = vunpack.c.l.b16 %v761
        %v838 = vunpack.c.l.b16 %v762
        %v839 = vunpack.c.l.b16 %v764
        %v840 = vunpack.c.l.b16 %v765
        %v841 = vunpack.c.l.b16 %v767
        %v842 = vunpack.c.l.b16 %v768
        %v843 = vunpack.c.l.b16 %v770
        %v844 = vunpack.c.l.b16 %v771
        %v845 = vunpack.c.l.b16 %v773
        %v846 = vunpack.c.l.b16 %v774
        %v847 = vunpack.c.l.b16 %v776
        %v848 = vunpack.c.l.b16 %v777
        %v849 = vunpack.c.l.b16 %v779
        %v850 = vunpack.c.l.b16 %v780
        %v851 = vunpack.c.l.b16 %v782
        %v852 = vunpack.c.l.b16 %v783
        %v853 = vunpack.c.l.b16 %v785
        %v854 = vunpack.c.l.b16 %v786
        %v855 = vunpack.c.l.b16 %v788
        %v856 = vunpack.c.l.b16 %v789
        %v857 = vunpack.c.l.b16 %v791
        %v858 = vunpack.c.l.b16 %v792
        %v859 = vunpack.c.l.b16 %v794
        %v860 = vunpack.c.l.b16 %v795
        %v861 = vpack.c.b16 %v830, %v829
        %v862 = vpack.c.b16 %v832, %v831
        %v863 = vpack.c.b16 %v834, %v833
        %v864 = vpack.c.b16 %v836, %v835
        %v865 = vpack.c.b16 %v838, %v837
        %v866 = vpack.c.b16 %v840, %v839
        %v867 = vpack.c.b16 %v842, %v841
        %v868 = vpack.c.b16 %v844, %v843
        %v869 = vpack.c.b16 %v846, %v845
        %v870 = vpack.c.b16 %v848, %v847
        %v871 = vpack.c.b16 %v850, %v849
        %v872 = vpack.c.b16 %v852, %v851
        %v873 = vpack.c.b16 %v854, %v853
        %v874 = vpack.c.b16 %v856, %v855
        %v875 = vpack.c.b16 %v858, %v857
        %v876 = vpack.c.b16 %v860, %v859
        %v893 = vunpack.c.l.b16 %v751
        %v894 = vunpack.c.l.b16 %v754
        %v895 = vunpack.c.l.b16 %v757
        %v896 = vunpack.c.l.b16 %v760
        %v897 = vunpack.c.l.b16 %v763
        %v898 = vunpack.c.l.b16 %v766
        %v899 = vunpack.c.l.b16 %v769
        %v900 = vunpack.c.l.b16 %v772
        %v901 = vunpack.c.l.b16 %v775
        %v902 = vunpack.c.l.b16 %v778
        %v903 = vunpack.c.l.b16 %v781
        %v904 = vunpack.c.l.b16 %v784
        %v905 = vunpack.c.l.b16 %v787
        %v906 = vunpack.c.l.b16 %v790
        %v907 = vunpack.c.l.b16 %v793
        %v908 = vunpack.c.l.b16 %v796
        %v909 = vpack.c.b16 %v893, %v893
        %v910 = vpack.c.b16 %v894, %v894
        %v911 = vpack.c.b16 %v895, %v895
        %v912 = vpack.c.b16 %v896, %v896
        %v913 = vpack.c.b16 %v897, %v897
        %v914 = vpack.c.b16 %v898, %v898
        %v915 = vpack.c.b16 %v899, %v899
        %v916 = vpack.c.b16 %v900, %v900
        %v917 = vpack.c.b16 %v901, %v901
        %v918 = vpack.c.b16 %v902, %v902
        %v919 = vpack.c.b16 %v903, %v903
        %v920 = vpack.c.b16 %v904, %v904
        %v921 = vpack.c.b16 %v905, %v905
        %v922 = vpack.c.b16 %v906, %v906
        %v923 = vpack.c.b16 %v907, %v907
        %v924 = vpack.c.b16 %v908, %v908
        %vm925 = vsmask.f32 7424
        %v927 = vshrl.u32 %v861, 16
        %v929 = vshll.u32 %v861, 16
        %v931 = vrot.slane %v929, 1
        %v932 = vor.u32 %v927, %v931
        %v934 = vshll.u32 %v909, 16
        %v936 = vrot.slane %v934, 1
        %v937 = vsel %vm925, %v932, %v936
        %v939 = vshrl.u32 %v862, 16
        %v941 = vshll.u32 %v862, 16
        %v943 = vrot.slane %v941, 1
        %v944 = vor.u32 %v939, %v943
        %v946 = vshll.u32 %v910, 16
        %v948 = vrot.slane %v946, 1
        %v949 = vsel %vm925, %v944, %v948
        %v951 = vshrl.u32 %v863, 16
        %v953 = vshll.u32 %v863, 16
        %v955 = vrot.slane %v953, 1
        %v956 = vor.u32 %v951, %v955
        %v958 = vshll.u32 %v911, 16
        %v960 = vrot.slane %v958, 1
        %v961 = vsel %vm925, %v956, %v960
        %v963 = vshrl.u32 %v864, 16
        %v965 = vshll.u32 %v864, 16
        %v967 = vrot.slane %v965, 1
        %v968 = vor.u32 %v963, %v967
        %v970 = vshll.u32 %v912, 16
        %v972 = vrot.slane %v970, 1
        %v973 = vsel %vm925, %v968, %v972
        %v975 = vshrl.u32 %v865, 16
        %v977 = vshll.u32 %v865, 16
        %v979 = vrot.slane %v977, 1
        %v980 = vor.u32 %v975, %v979
        %v982 = vshll.u32 %v913, 16
        %v984 = vrot.slane %v982, 1
        %v985 = vsel %vm925, %v980, %v984
        %v987 = vshrl.u32 %v866, 16
        %v989 = vshll.u32 %v866, 16
        %v991 = vrot.slane %v989, 1
        %v992 = vor.u32 %v987, %v991
        %v994 = vshll.u32 %v914, 16
        %v996 = vrot.slane %v994, 1
        %v997 = vsel %vm925, %v992, %v996
        %v999 = vshrl.u32 %v867, 16
        %v1001 = vshll.u32 %v867, 16
        %v1003 = vrot.slane %v1001, 1
        %v1004 = vor.u32 %v999, %v1003
        %v1006 = vshll.u32 %v915, 16
        %v1008 = vrot.slane %v1006, 1
        %v1009 = vsel %vm925, %v1004, %v1008
        %v1011 = vshrl.u32 %v868, 16
        %v1013 = vshll.u32 %v868, 16
        %v1015 = vrot.slane %v1013, 1
        %v1016 = vor.u32 %v1011, %v1015
        %v1018 = vshll.u32 %v916, 16
        %v1020 = vrot.slane %v1018, 1
        %v1021 = vsel %vm925, %v1016, %v1020
        %v1023 = vshrl.u32 %v869, 16
        %v1025 = vshll.u32 %v869, 16
        %v1027 = vrot.slane %v1025, 1
        %v1028 = vor.u32 %v1023, %v1027
        %v1030 = vshll.u32 %v917, 16
        %v1032 = vrot.slane %v1030, 1
        %v1033 = vsel %vm925, %v1028, %v1032
        %v1035 = vshrl.u32 %v870, 16
        %v1037 = vshll.u32 %v870, 16
        %v1039 = vrot.slane %v1037, 1
        %v1040 = vor.u32 %v1035, %v1039
        %v1042 = vshll.u32 %v918, 16
        %v1044 = vrot.slane %v1042, 1
        %v1045 = vsel %vm925, %v1040, %v1044
        %v1047 = vshrl.u32 %v871, 16
        %v1049 = vshll.u32 %v871, 16
        %v1051 = vrot.slane %v1049, 1
        %v1052 = vor.u32 %v1047, %v1051
        %v1054 = vshll.u32 %v919, 16
        %v1056 = vrot.slane %v1054, 1
        %v1057 = vsel %vm925, %v1052, %v1056
        %v1059 = vshrl.u32 %v872, 16
        %v1061 = vshll.u32 %v872, 16
        %v1063 = vrot.slane %v1061, 1
        %v1064 = vor.u32 %v1059, %v1063
        %v1066 = vshll.u32 %v920, 16
        %v1068 = vrot.slane %v1066, 1
        %v1069 = vsel %vm925, %v1064, %v1068
        %v1071 = vshrl.u32 %v873, 16
        %v1073 = vshll.u32 %v873, 16
        %v1075 = vrot.slane %v1073, 1
        %v1076 = vor.u32 %v1071, %v1075
        %v1078 = vshll.u32 %v921, 16
        %v1080 = vrot.slane %v1078, 1
        %v1081 = vsel %vm925, %v1076, %v1080
        %v1083 = vshrl.u32 %v874, 16
        %v1085 = vshll.u32 %v874, 16
        %v1087 = vrot.slane %v1085, 1
        %v1088 = vor.u32 %v1083, %v1087
        %v1090 = vshll.u32 %v922, 16
        %v1092 = vrot.slane %v1090, 1
        %v1093 = vsel %vm925, %v1088, %v1092
        %v1095 = vshrl.u32 %v875, 16
        %v1097 = vshll.u32 %v875, 16
        %v1099 = vrot.slane %v1097, 1
        %v1100 = vor.u32 %v1095, %v1099
        %v1102 = vshll.u32 %v923, 16
        %v1104 = vrot.slane %v1102, 1
        %v1105 = vsel %vm925, %v1100, %v1104
        %v1107 = vshrl.u32 %v876, 16
        %v1109 = vshll.u32 %v876, 16
        %v1111 = vrot.slane %v1109, 1
        %v1112 = vor.u32 %v1107, %v1111
        %v1114 = vshll.u32 %v924, 16
        %v1116 = vrot.slane %v1114, 1
        %v1117 = vsel %vm925, %v1112, %v1116
        %1118 = vrot.lane.b32.xlu0 %v937, 64
        %v1119 = vpop.permute.xlu0 %1118
        %1120 = vrot.lane.b32.xlu0 %v949, 64
        %v1121 = vpop.permute.xlu0 %1120
        %1122 = vrot.lane.b32.xlu0 %v961, 64
        %v1123 = vpop.permute.xlu0 %1122
        %1124 = vrot.lane.b32.xlu0 %v973, 64
        %v1125 = vpop.permute.xlu0 %1124
        %1126 = vrot.lane.b32.xlu0 %v985, 64
        %v1127 = vpop.permute.xlu0 %1126
        %1128 = vrot.lane.b32.xlu0 %v997, 64
        %v1129 = vpop.permute.xlu0 %1128
        %1130 = vrot.lane.b32.xlu0 %v1009, 64
        %v1131 = vpop.permute.xlu0 %1130
        %1132 = vrot.lane.b32.xlu0 %v1021, 64
        %v1133 = vpop.permute.xlu0 %1132
        %1134 = vrot.lane.b32.xlu0 %v1033, 64
        %v1135 = vpop.permute.xlu0 %1134
        %1136 = vrot.lane.b32.xlu0 %v1045, 64
        %v1137 = vpop.permute.xlu0 %1136
        %1138 = vrot.lane.b32.xlu0 %v1057, 64
        %v1139 = vpop.permute.xlu0 %1138
        %1140 = vrot.lane.b32.xlu0 %v1069, 64
        %v1141 = vpop.permute.xlu0 %1140
        %1142 = vrot.lane.b32.xlu0 %v1081, 64
        %v1143 = vpop.permute.xlu0 %1142
        %1144 = vrot.lane.b32.xlu0 %v1093, 64
        %v1145 = vpop.permute.xlu0 %1144
        %1146 = vrot.lane.b32.xlu0 %v1105, 64
        %v1147 = vpop.permute.xlu0 %1146
        %1148 = vrot.lane.b32.xlu0 %v1117, 64
        %v1149 = vpop.permute.xlu0 %1148
        %vm1150 = vcmask 1046528
        %v1151 = vrot.slane %v861, 1
        %v1152 = vrot.slane %v909, 1
        %v1153 = vsel %vm1150, %v1151, %v1152
        %v1154 = vrot.slane %v862, 1
        %v1155 = vrot.slane %v910, 1
        %v1156 = vsel %vm1150, %v1154, %v1155
        %v1157 = vrot.slane %v863, 1
        %v1158 = vrot.slane %v911, 1
        %v1159 = vsel %vm1150, %v1157, %v1158
        %v1160 = vrot.slane %v864, 1
        %v1161 = vrot.slane %v912, 1
        %v1162 = vsel %vm1150, %v1160, %v1161
        %v1163 = vrot.slane %v865, 1
        %v1164 = vrot.slane %v913, 1
        %v1165 = vsel %vm1150, %v1163, %v1164
        %v1166 = vrot.slane %v866, 1
        %v1167 = vrot.slane %v914, 1
        %v1168 = vsel %vm1150, %v1166, %v1167
        %v1169 = vrot.slane %v867, 1
        %v1170 = vrot.slane %v915, 1
        %v1171 = vsel %vm1150, %v1169, %v1170
        %v1172 = vrot.slane %v868, 1
        %v1173 = vrot.slane %v916, 1
        %v1174 = vsel %vm1150, %v1172, %v1173
        %v1175 = vrot.slane %v869, 1
        %v1176 = vrot.slane %v917, 1
        %v1177 = vsel %vm1150, %v1175, %v1176
        %v1178 = vrot.slane %v870, 1
        %v1179 = vrot.slane %v918, 1
        %v1180 = vsel %vm1150, %v1178, %v1179
        %v1181 = vrot.slane %v871, 1
        %v1182 = vrot.slane %v919, 1
        %v1183 = vsel %vm1150, %v1181, %v1182
        %v1184 = vrot.slane %v872, 1
        %v1185 = vrot.slane %v920, 1
        %v1186 = vsel %vm1150, %v1184, %v1185
        %v1187 = vrot.slane %v873, 1
        %v1188 = vrot.slane %v921, 1
        %v1189 = vsel %vm1150, %v1187, %v1188
        %v1190 = vrot.slane %v874, 1
        %v1191 = vrot.slane %v922, 1
        %v1192 = vsel %vm1150, %v1190, %v1191
        %v1193 = vrot.slane %v875, 1
        %v1194 = vrot.slane %v923, 1
        %v1195 = vsel %vm1150, %v1193, %v1194
        %v1196 = vrot.slane %v876, 1
        %v1197 = vrot.slane %v924, 1
        %v1198 = vsel %vm1150, %v1196, %v1197
        %vm1199 = vcmask 523264
        %v1201 = vsel %vm1199, %v861, %v1119
        %v1204 = vsel %vm1199, %v862, %v1121
        %v1207 = vsel %vm1199, %v863, %v1123
        %v1210 = vsel %vm1199, %v864, %v1125
        %v1213 = vsel %vm1199, %v865, %v1127
        %v1216 = vsel %vm1199, %v866, %v1129
        %v1219 = vsel %vm1199, %v867, %v1131
        %v1222 = vsel %vm1199, %v868, %v1133
        %v1225 = vsel %vm1199, %v869, %v1135
        %v1228 = vsel %vm1199, %v870, %v1137
        %v1231 = vsel %vm1199, %v871, %v1139
        %v1234 = vsel %vm1199, %v872, %v1141
        %v1237 = vsel %vm1199, %v873, %v1143
        %v1240 = vsel %vm1199, %v874, %v1145
        %v1243 = vsel %vm1199, %v875, %v1147
        %v1246 = vsel %vm1199, %v876, %v1149
        %v1248 = vld [vmem:[%s1] sm:$0xf]
        %v1249 = vld [vmem:[%s1 + $0x4] sm:$0xf]
        %v1250 = vld [vmem:[%s1 + $0x8] sm:$0xf]
        %v1251 = vld [vmem:[%s1 + $0xc] sm:$0xf]
        %v1252 = vld [vmem:[%s1 + $0x10] sm:$0xf]
        %v1253 = vld [vmem:[%s1 + $0x14] sm:$0xf]
        %v1254 = vld [vmem:[%s1 + $0x18] sm:$0xf]
        %v1255 = vld [vmem:[%s1 + $0x1c] sm:$0xf]
        %v1256 = vld [vmem:[%s1 + $0x20] sm:$0xf]
        %v1257 = vld [vmem:[%s1 + $0x24] sm:$0xf]
        %v1258 = vld [vmem:[%s1 + $0x28] sm:$0xf]
        %v1259 = vld [vmem:[%s1 + $0x2c] sm:$0xf]
        %v1260 = vld [vmem:[%s1 + $0x30] sm:$0xf]
        %v1261 = vld [vmem:[%s1 + $0x34] sm:$0xf]
        %v1262 = vld [vmem:[%s1 + $0x38] sm:$0xf]
        %v1263 = vld [vmem:[%s1 + $0x3c] sm:$0xf]
        %v1264 = vld [vmem:[%s1 + $0x40] sm:$0xf]
        %v1265 = vld [vmem:[%s1 + $0x44] sm:$0xf]
        %v1266 = vld [vmem:[%s1 + $0x48] sm:$0xf]
        %v1267 = vld [vmem:[%s1 + $0x4c] sm:$0xf]
        %v1268 = vld [vmem:[%s1 + $0x50] sm:$0xf]
        %v1269 = vld [vmem:[%s1 + $0x54] sm:$0xf]
        %v1270 = vld [vmem:[%s1 + $0x58] sm:$0xf]
        %v1271 = vld [vmem:[%s1 + $0x5c] sm:$0xf]
        %v1272 = vld [vmem:[%s691] sm:$0xf]
        %v1273 = vld [vmem:[%s691 + $0x4] sm:$0xf]
        %v1274 = vld [vmem:[%s691 + $0x8] sm:$0x1]
        %v1275 = vld [vmem:[%s691 + $0xc] sm:$0xf]
        %v1276 = vld [vmem:[%s691 + $0x10] sm:$0xf]
        %v1277 = vld [vmem:[%s691 + $0x14] sm:$0x1]
        %v1278 = vld [vmem:[%s691 + $0x18] sm:$0xf]
        %v1279 = vld [vmem:[%s691 + $0x1c] sm:$0xf]
        %v1280 = vld [vmem:[%s691 + $0x20] sm:$0x1]
        %v1281 = vld [vmem:[%s691 + $0x24] sm:$0xf]
        %v1282 = vld [vmem:[%s691 + $0x28] sm:$0xf]
        %v1283 = vld [vmem:[%s691 + $0x2c] sm:$0x1]
        %v1284 = vld [vmem:[%s691 + $0x30] sm:$0xf]
        %v1285 = vld [vmem:[%s691 + $0x34] sm:$0xf]
        %v1286 = vld [vmem:[%s691 + $0x38] sm:$0x1]
        %v1287 = vld [vmem:[%s691 + $0x3c] sm:$0xf]
        %v1288 = vld [vmem:[%s691 + $0x40] sm:$0xf]
        %v1289 = vld [vmem:[%s691 + $0x44] sm:$0x1]
        %v1290 = vld [vmem:[%s691 + $0x48] sm:$0xf]
        %v1291 = vld [vmem:[%s691 + $0x4c] sm:$0xf]
        %v1292 = vld [vmem:[%s691 + $0x50] sm:$0x1]
        %v1293 = vld [vmem:[%s691 + $0x54] sm:$0xf]
        %v1294 = vld [vmem:[%s691 + $0x58] sm:$0xf]
        %v1295 = vld [vmem:[%s691 + $0x5c] sm:$0x1]
        %v1296 = vld [vmem:[%s691 + $0x60] sm:$0xf]
        %v1297 = vld [vmem:[%s691 + $0x64] sm:$0xf]
        %v1298 = vld [vmem:[%s691 + $0x68] sm:$0x1]
        %v1299 = vld [vmem:[%s691 + $0x6c] sm:$0xf]
        %v1300 = vld [vmem:[%s691 + $0x70] sm:$0xf]
        %v1301 = vld [vmem:[%s691 + $0x74] sm:$0x1]
        %v1302 = vld [vmem:[%s691 + $0x78] sm:$0xf]
        %v1303 = vld [vmem:[%s691 + $0x7c] sm:$0xf]
        %v1304 = vld [vmem:[%s691 + $0x80] sm:$0x1]
        %v1305 = vld [vmem:[%s691 + $0x84] sm:$0xf]
        %v1306 = vld [vmem:[%s691 + $0x88] sm:$0xf]
        %v1307 = vld [vmem:[%s691 + $0x8c] sm:$0x1]
        %v1308 = vld [vmem:[%s691 + $0x90] sm:$0xf]
        %v1309 = vld [vmem:[%s691 + $0x94] sm:$0xf]
        %v1310 = vld [vmem:[%s691 + $0x98] sm:$0x1]
        %v1311 = vld [vmem:[%s691 + $0x9c] sm:$0xf]
        %v1312 = vld [vmem:[%s691 + $0xa0] sm:$0xf]
        %v1313 = vld [vmem:[%s691 + $0xa4] sm:$0x1]
        %v1314 = vld [vmem:[%s691 + $0xa8] sm:$0xf]
        %v1315 = vld [vmem:[%s691 + $0xac] sm:$0xf]
        %v1316 = vld [vmem:[%s691 + $0xb0] sm:$0x1]
        %v1317 = vld [vmem:[%s691 + $0xb4] sm:$0xf]
        %v1318 = vld [vmem:[%s691 + $0xb8] sm:$0xf]
        %v1319 = vld [vmem:[%s691 + $0xbc] sm:$0x1]
        %v1352 = vunpack.c.l.b16 %v1272
        %v1353 = vunpack.c.l.b16 %v1273
        %v1354 = vunpack.c.l.b16 %v1275
        %v1355 = vunpack.c.l.b16 %v1276
        %v1356 = vunpack.c.l.b16 %v1278
        %v1357 = vunpack.c.l.b16 %v1279
        %v1358 = vunpack.c.l.b16 %v1281
        %v1359 = vunpack.c.l.b16 %v1282
        %v1360 = vunpack.c.l.b16 %v1284
        %v1361 = vunpack.c.l.b16 %v1285
        %v1362 = vunpack.c.l.b16 %v1287
        %v1363 = vunpack.c.l.b16 %v1288
        %v1364 = vunpack.c.l.b16 %v1290
        %v1365 = vunpack.c.l.b16 %v1291
        %v1366 = vunpack.c.l.b16 %v1293
        %v1367 = vunpack.c.l.b16 %v1294
        %v1368 = vunpack.c.l.b16 %v1296
        %v1369 = vunpack.c.l.b16 %v1297
        %v1370 = vunpack.c.l.b16 %v1299
        %v1371 = vunpack.c.l.b16 %v1300
        %v1372 = vunpack.c.l.b16 %v1302
        %v1373 = vunpack.c.l.b16 %v1303
        %v1374 = vunpack.c.l.b16 %v1305
        %v1375 = vunpack.c.l.b16 %v1306
        %v1376 = vunpack.c.l.b16 %v1308
        %v1377 = vunpack.c.l.b16 %v1309
        %v1378 = vunpack.c.l.b16 %v1311
        %v1379 = vunpack.c.l.b16 %v1312
        %v1380 = vunpack.c.l.b16 %v1314
        %v1381 = vunpack.c.l.b16 %v1315
        %v1382 = vunpack.c.l.b16 %v1317
        %v1383 = vunpack.c.l.b16 %v1318
        %v1384 = vpack.c.b16 %v1353, %v1352
        %v1385 = vpack.c.b16 %v1355, %v1354
        %v1386 = vpack.c.b16 %v1357, %v1356
        %v1387 = vpack.c.b16 %v1359, %v1358
        %v1388 = vpack.c.b16 %v1361, %v1360
        %v1389 = vpack.c.b16 %v1363, %v1362
        %v1390 = vpack.c.b16 %v1365, %v1364
        %v1391 = vpack.c.b16 %v1367, %v1366
        %v1392 = vpack.c.b16 %v1369, %v1368
        %v1393 = vpack.c.b16 %v1371, %v1370
        %v1394 = vpack.c.b16 %v1373, %v1372
        %v1395 = vpack.c.b16 %v1375, %v1374
        %v1396 = vpack.c.b16 %v1377, %v1376
        %v1397 = vpack.c.b16 %v1379, %v1378
        %v1398 = vpack.c.b16 %v1381, %v1380
        %v1399 = vpack.c.b16 %v1383, %v1382
        %v1416 = vunpack.c.l.b16 %v1274
        %v1417 = vunpack.c.l.b16 %v1277
        %v1418 = vunpack.c.l.b16 %v1280
        %v1419 = vunpack.c.l.b16 %v1283
        %v1420 = vunpack.c.l.b16 %v1286
        %v1421 = vunpack.c.l.b16 %v1289
        %v1422 = vunpack.c.l.b16 %v1292
        %v1423 = vunpack.c.l.b16 %v1295
        %v1424 = vunpack.c.l.b16 %v1298
        %v1425 = vunpack.c.l.b16 %v1301
        %v1426 = vunpack.c.l.b16 %v1304
        %v1427 = vunpack.c.l.b16 %v1307
        %v1428 = vunpack.c.l.b16 %v1310
        %v1429 = vunpack.c.l.b16 %v1313
        %v1430 = vunpack.c.l.b16 %v1316
        %v1431 = vunpack.c.l.b16 %v1319
        %v1432 = vpack.c.b16 %v1416, %v1416
        %v1433 = vpack.c.b16 %v1417, %v1417
        %v1434 = vpack.c.b16 %v1418, %v1418
        %v1435 = vpack.c.b16 %v1419, %v1419
        %v1436 = vpack.c.b16 %v1420, %v1420
        %v1437 = vpack.c.b16 %v1421, %v1421
        %v1438 = vpack.c.b16 %v1422, %v1422
        %v1439 = vpack.c.b16 %v1423, %v1423
        %v1440 = vpack.c.b16 %v1424, %v1424
        %v1441 = vpack.c.b16 %v1425, %v1425
        %v1442 = vpack.c.b16 %v1426, %v1426
        %v1443 = vpack.c.b16 %v1427, %v1427
        %v1444 = vpack.c.b16 %v1428, %v1428
        %v1445 = vpack.c.b16 %v1429, %v1429
        %v1446 = vpack.c.b16 %v1430, %v1430
        %v1447 = vpack.c.b16 %v1431, %v1431
        %v1449 = vshrl.u32 %v1384, 16
        %v1451 = vshll.u32 %v1384, 16
        %v1453 = vrot.slane %v1451, 1
        %v1454 = vor.u32 %v1449, %v1453
        %v1456 = vshll.u32 %v1432, 16
        %v1458 = vrot.slane %v1456, 1
        %v1459 = vsel %vm925, %v1454, %v1458
        %v1461 = vshrl.u32 %v1385, 16
        %v1463 = vshll.u32 %v1385, 16
        %v1465 = vrot.slane %v1463, 1
        %v1466 = vor.u32 %v1461, %v1465
        %v1468 = vshll.u32 %v1433, 16
        %v1470 = vrot.slane %v1468, 1
        %v1471 = vsel %vm925, %v1466, %v1470
        %v1473 = vshrl.u32 %v1386, 16
        %v1475 = vshll.u32 %v1386, 16
        %v1477 = vrot.slane %v1475, 1
        %v1478 = vor.u32 %v1473, %v1477
        %v1480 = vshll.u32 %v1434, 16
        %v1482 = vrot.slane %v1480, 1
        %v1483 = vsel %vm925, %v1478, %v1482
        %v1485 = vshrl.u32 %v1387, 16
        %v1487 = vshll.u32 %v1387, 16
        %v1489 = vrot.slane %v1487, 1
        %v1490 = vor.u32 %v1485, %v1489
        %v1492 = vshll.u32 %v1435, 16
        %v1494 = vrot.slane %v1492, 1
        %v1495 = vsel %vm925, %v1490, %v1494
        %v1497 = vshrl.u32 %v1388, 16
        %v1499 = vshll.u32 %v1388, 16
        %v1501 = vrot.slane %v1499, 1
        %v1502 = vor.u32 %v1497, %v1501
        %v1504 = vshll.u32 %v1436, 16
        %v1506 = vrot.slane %v1504, 1
        %v1507 = vsel %vm925, %v1502, %v1506
        %v1509 = vshrl.u32 %v1389, 16
        %v1511 = vshll.u32 %v1389, 16
        %v1513 = vrot.slane %v1511, 1
        %v1514 = vor.u32 %v1509, %v1513
        %v1516 = vshll.u32 %v1437, 16
        %v1518 = vrot.slane %v1516, 1
        %v1519 = vsel %vm925, %v1514, %v1518
        %v1521 = vshrl.u32 %v1390, 16
        %v1523 = vshll.u32 %v1390, 16
        %v1525 = vrot.slane %v1523, 1
        %v1526 = vor.u32 %v1521, %v1525
        %v1528 = vshll.u32 %v1438, 16
        %v1530 = vrot.slane %v1528, 1
        %v1531 = vsel %vm925, %v1526, %v1530
        %v1533 = vshrl.u32 %v1391, 16
        %v1535 = vshll.u32 %v1391, 16
        %v1537 = vrot.slane %v1535, 1
        %v1538 = vor.u32 %v1533, %v1537
        %v1540 = vshll.u32 %v1439, 16
        %v1542 = vrot.slane %v1540, 1
        %v1543 = vsel %vm925, %v1538, %v1542
        %v1545 = vshrl.u32 %v1392, 16
        %v1547 = vshll.u32 %v1392, 16
        %v1549 = vrot.slane %v1547, 1
        %v1550 = vor.u32 %v1545, %v1549
        %v1552 = vshll.u32 %v1440, 16
        %v1554 = vrot.slane %v1552, 1
        %v1555 = vsel %vm925, %v1550, %v1554
        %v1557 = vshrl.u32 %v1393, 16
        %v1559 = vshll.u32 %v1393, 16
        %v1561 = vrot.slane %v1559, 1
        %v1562 = vor.u32 %v1557, %v1561
        %v1564 = vshll.u32 %v1441, 16
        %v1566 = vrot.slane %v1564, 1
        %v1567 = vsel %vm925, %v1562, %v1566
        %v1569 = vshrl.u32 %v1394, 16
        %v1571 = vshll.u32 %v1394, 16
        %v1573 = vrot.slane %v1571, 1
        %v1574 = vor.u32 %v1569, %v1573
        %v1576 = vshll.u32 %v1442, 16
        %v1578 = vrot.slane %v1576, 1
        %v1579 = vsel %vm925, %v1574, %v1578
        %v1581 = vshrl.u32 %v1395, 16
        %v1583 = vshll.u32 %v1395, 16
        %v1585 = vrot.slane %v1583, 1
        %v1586 = vor.u32 %v1581, %v1585
        %v1588 = vshll.u32 %v1443, 16
        %v1590 = vrot.slane %v1588, 1
        %v1591 = vsel %vm925, %v1586, %v1590
        %v1593 = vshrl.u32 %v1396, 16
        %v1595 = vshll.u32 %v1396, 16
        %v1597 = vrot.slane %v1595, 1
        %v1598 = vor.u32 %v1593, %v1597
        %v1600 = vshll.u32 %v1444, 16
        %v1602 = vrot.slane %v1600, 1
        %v1603 = vsel %vm925, %v1598, %v1602
        %v1605 = vshrl.u32 %v1397, 16
        %v1607 = vshll.u32 %v1397, 16
        %v1609 = vrot.slane %v1607, 1
        %v1610 = vor.u32 %v1605, %v1609
        %v1612 = vshll.u32 %v1445, 16
        %v1614 = vrot.slane %v1612, 1
        %v1615 = vsel %vm925, %v1610, %v1614
        %v1617 = vshrl.u32 %v1398, 16
        %v1619 = vshll.u32 %v1398, 16
        %v1621 = vrot.slane %v1619, 1
        %v1622 = vor.u32 %v1617, %v1621
        %v1624 = vshll.u32 %v1446, 16
        %v1626 = vrot.slane %v1624, 1
        %v1627 = vsel %vm925, %v1622, %v1626
        %v1629 = vshrl.u32 %v1399, 16
        %v1631 = vshll.u32 %v1399, 16
        %v1633 = vrot.slane %v1631, 1
        %v1634 = vor.u32 %v1629, %v1633
        %v1636 = vshll.u32 %v1447, 16
        %v1638 = vrot.slane %v1636, 1
        %v1639 = vsel %vm925, %v1634, %v1638
        %1640 = vrot.lane.b32.xlu0 %v1459, 64
        %v1641 = vpop.permute.xlu0 %1640
        %1642 = vrot.lane.b32.xlu0 %v1471, 64
        %v1643 = vpop.permute.xlu0 %1642
        %1644 = vrot.lane.b32.xlu0 %v1483, 64
        %v1645 = vpop.permute.xlu0 %1644
        %1646 = vrot.lane.b32.xlu0 %v1495, 64
        %v1647 = vpop.permute.xlu0 %1646
        %1648 = vrot.lane.b32.xlu0 %v1507, 64
        %v1649 = vpop.permute.xlu0 %1648
        %1650 = vrot.lane.b32.xlu0 %v1519, 64
        %v1651 = vpop.permute.xlu0 %1650
        %1652 = vrot.lane.b32.xlu0 %v1531, 64
        %v1653 = vpop.permute.xlu0 %1652
        %1654 = vrot.lane.b32.xlu0 %v1543, 64
        %v1655 = vpop.permute.xlu0 %1654
        %1656 = vrot.lane.b32.xlu0 %v1555, 64
        %v1657 = vpop.permute.xlu0 %1656
        %1658 = vrot.lane.b32.xlu0 %v1567, 64
        %v1659 = vpop.permute.xlu0 %1658
        %1660 = vrot.lane.b32.xlu0 %v1579, 64
        %v1661 = vpop.permute.xlu0 %1660
        %1662 = vrot.lane.b32.xlu0 %v1591, 64
        %v1663 = vpop.permute.xlu0 %1662
        %1664 = vrot.lane.b32.xlu0 %v1603, 64
        %v1665 = vpop.permute.xlu0 %1664
        %1666 = vrot.lane.b32.xlu0 %v1615, 64
        %v1667 = vpop.permute.xlu0 %1666
        %1668 = vrot.lane.b32.xlu0 %v1627, 64
        %v1669 = vpop.permute.xlu0 %1668
        %1670 = vrot.lane.b32.xlu0 %v1639, 64
        %v1671 = vpop.permute.xlu0 %1670
        %v1672 = vrot.slane %v1384, 1
        %v1673 = vrot.slane %v1432, 1
        %v1674 = vsel %vm1150, %v1672, %v1673
        %v1675 = vrot.slane %v1385, 1
        %v1676 = vrot.slane %v1433, 1
        %v1677 = vsel %vm1150, %v1675, %v1676
        %v1678 = vrot.slane %v1386, 1
        %v1679 = vrot.slane %v1434, 1
        %v1680 = vsel %vm1150, %v1678, %v1679
        %v1681 = vrot.slane %v1387, 1
        %v1682 = vrot.slane %v1435, 1
        %v1683 = vsel %vm1150, %v1681, %v1682
        %v1684 = vrot.slane %v1388, 1
        %v1685 = vrot.slane %v1436, 1
        %v1686 = vsel %vm1150, %v1684, %v1685
        %v1687 = vrot.slane %v1389, 1
        %v1688 = vrot.slane %v1437, 1
        %v1689 = vsel %vm1150, %v1687, %v1688
        %v1690 = vrot.slane %v1390, 1
        %v1691 = vrot.slane %v1438, 1
        %v1692 = vsel %vm1150, %v1690, %v1691
        %v1693 = vrot.slane %v1391, 1
        %v1694 = vrot.slane %v1439, 1
        %v1695 = vsel %vm1150, %v1693, %v1694
        %v1696 = vrot.slane %v1392, 1
        %v1697 = vrot.slane %v1440, 1
        %v1698 = vsel %vm1150, %v1696, %v1697
        %v1699 = vrot.slane %v1393, 1
        %v1700 = vrot.slane %v1441, 1
        %v1701 = vsel %vm1150, %v1699, %v1700
        %v1702 = vrot.slane %v1394, 1
        %v1703 = vrot.slane %v1442, 1
        %v1704 = vsel %vm1150, %v1702, %v1703
        %v1705 = vrot.slane %v1395, 1
        %v1706 = vrot.slane %v1443, 1
        %v1707 = vsel %vm1150, %v1705, %v1706
        %v1708 = vrot.slane %v1396, 1
        %v1709 = vrot.slane %v1444, 1
        %v1710 = vsel %vm1150, %v1708, %v1709
        %v1711 = vrot.slane %v1397, 1
        %v1712 = vrot.slane %v1445, 1
        %v1713 = vsel %vm1150, %v1711, %v1712
        %v1714 = vrot.slane %v1398, 1
        %v1715 = vrot.slane %v1446, 1
        %v1716 = vsel %vm1150, %v1714, %v1715
        %v1717 = vrot.slane %v1399, 1
        %v1718 = vrot.slane %v1447, 1
        %v1719 = vsel %vm1150, %v1717, %v1718
        %v1721 = vsel %vm1199, %v1384, %v1641
        %v1724 = vsel %vm1199, %v1385, %v1643
        %v1727 = vsel %vm1199, %v1386, %v1645
        %v1730 = vsel %vm1199, %v1387, %v1647
        %v1733 = vsel %vm1199, %v1388, %v1649
        %v1736 = vsel %vm1199, %v1389, %v1651
        %v1739 = vsel %vm1199, %v1390, %v1653
        %v1742 = vsel %vm1199, %v1391, %v1655
        %v1745 = vsel %vm1199, %v1392, %v1657
        %v1748 = vsel %vm1199, %v1393, %v1659
        %v1751 = vsel %vm1199, %v1394, %v1661
        %v1754 = vsel %vm1199, %v1395, %v1663
        %v1757 = vsel %vm1199, %v1396, %v1665
        %v1760 = vsel %vm1199, %v1397, %v1667
        %v1763 = vsel %vm1199, %v1398, %v1669
        %v1766 = vsel %vm1199, %v1399, %v1671
        %s1768 = scalar_lea.vmem %s1, 96
        %v1769 = vld [vmem:[%s1768] sm:$0xf]
        %v1770 = vld [vmem:[%s1768 + $0x4] sm:$0xf]
        %v1771 = vld [vmem:[%s1768 + $0x8] sm:$0xf]
        %v1772 = vld [vmem:[%s1768 + $0xc] sm:$0xf]
        %v1773 = vld [vmem:[%s1768 + $0x10] sm:$0xf]
        %v1774 = vld [vmem:[%s1768 + $0x14] sm:$0xf]
        %v1775 = vld [vmem:[%s1768 + $0x18] sm:$0xf]
        %v1776 = vld [vmem:[%s1768 + $0x1c] sm:$0xf]
        %v1777 = vld [vmem:[%s1768 + $0x20] sm:$0xf]
        %v1778 = vld [vmem:[%s1768 + $0x24] sm:$0xf]
        %v1779 = vld [vmem:[%s1768 + $0x28] sm:$0xf]
        %v1780 = vld [vmem:[%s1768 + $0x2c] sm:$0xf]
        %v1781 = vld [vmem:[%s1768 + $0x30] sm:$0xf]
        %v1782 = vld [vmem:[%s1768 + $0x34] sm:$0xf]
        %v1783 = vld [vmem:[%s1768 + $0x38] sm:$0xf]
        %v1784 = vld [vmem:[%s1768 + $0x3c] sm:$0xf]
        %v1785 = vld [vmem:[%s1768 + $0x40] sm:$0xf]
        %v1786 = vld [vmem:[%s1768 + $0x44] sm:$0xf]
        %v1787 = vld [vmem:[%s1768 + $0x48] sm:$0xf]
        %v1788 = vld [vmem:[%s1768 + $0x4c] sm:$0xf]
        %v1789 = vld [vmem:[%s1768 + $0x50] sm:$0xf]
        %v1790 = vld [vmem:[%s1768 + $0x54] sm:$0xf]
        %v1791 = vld [vmem:[%s1768 + $0x58] sm:$0xf]
        %v1792 = vld [vmem:[%s1768 + $0x5c] sm:$0xf]
        %v1817 = vunpack.c.l.b16 %v1769
        %v1818 = vunpack.c.l.b16 %v1770
        %v1819 = vunpack.c.l.b16 %v1771
        %v1820 = vunpack.c.l.b16 %v1772
        %v1821 = vunpack.c.l.b16 %v1773
        %v1822 = vunpack.c.l.b16 %v1774
        %v1823 = vunpack.c.l.b16 %v1775
        %v1824 = vunpack.c.l.b16 %v1776
        %v1825 = vunpack.c.l.b16 %v1777
        %v1826 = vunpack.c.l.b16 %v1778
        %v1827 = vunpack.c.l.b16 %v1779
        %v1828 = vunpack.c.l.b16 %v1780
        %v1829 = vunpack.c.l.b16 %v1781
        %v1830 = vunpack.c.l.b16 %v1782
        %v1831 = vunpack.c.l.b16 %v1783
        %v1832 = vunpack.c.l.b16 %v1784
        %v1833 = vunpack.c.l.b16 %v1785
        %v1834 = vunpack.c.l.b16 %v1786
        %v1835 = vunpack.c.l.b16 %v1787
        %v1836 = vunpack.c.l.b16 %v1788
        %v1837 = vunpack.c.l.b16 %v1789
        %v1838 = vunpack.c.l.b16 %v1790
        %v1839 = vunpack.c.l.b16 %v1791
        %v1840 = vunpack.c.l.b16 %v1792
        %v1841 = vpack.c.b16 %v1818, %v1817
        %v1842 = vpack.c.b16 %v1820, %v1819
        %v1843 = vpack.c.b16 %v1822, %v1821
        %v1844 = vpack.c.b16 %v1824, %v1823
        %v1845 = vpack.c.b16 %v1826, %v1825
        %v1846 = vpack.c.b16 %v1828, %v1827
        %v1847 = vpack.c.b16 %v1830, %v1829
        %v1848 = vpack.c.b16 %v1832, %v1831
        %v1849 = vpack.c.b16 %v1834, %v1833
        %v1850 = vpack.c.b16 %v1836, %v1835
        %v1851 = vpack.c.b16 %v1838, %v1837
        %v1852 = vpack.c.b16 %v1840, %v1839
        %v1866 = vsel %vm1199, %v1674, 0
        %v1869 = vsel %vm1199, %v1677, 0
        %v1872 = vsel %vm1199, %v1680, 0
        %v1875 = vsel %vm1199, %v1683, 0
        %v1878 = vsel %vm1199, %v1686, 0
        %v1881 = vsel %vm1199, %v1689, 0
        %v1884 = vsel %vm1199, %v1692, 0
        %v1887 = vsel %vm1199, %v1695, 0
        %v1890 = vsel %vm1199, %v1698, 0
        %v1893 = vsel %vm1199, %v1701, 0
        %v1896 = vsel %vm1199, %v1704, 0
        %v1899 = vsel %vm1199, %v1707, 0
        %v1902 = vsel %vm1199, %v1710, 0
        %v1905 = vsel %vm1199, %v1713, 0
        %v1908 = vsel %vm1199, %v1716, 0
        %v1911 = vsel %vm1199, %v1719, 0
        %1913 = vmatpush.bf16.msra.mxu0 %v1848
        %1914 = vmatpush.bf16.msra.mxu0 %v1847
        %1915 = vmatpush.bf16.msra.mxu0 %v1846
        %1916 = vmatpush.bf16.msra.mxu0 %v1845
        %1917 = vmatpush.bf16.msra.mxu0 %v1844
        %1918 = vmatpush.bf16.msra.mxu0 %v1843
        %1919 = vmatpush.bf16.msra.mxu0 %v1842
        %1920 = vmatpush.bf16.msra.mxu0 %v1841
        %1921 = vmatmul.bf16.gmra.mxu0 %v1721
        %v1922 = vpop.f32.mrf.mxu0
        %v1923 = vadd.f32 0.0, %v1922
        %v1924 = vpop.f32.mrf.mxu0
        %v1925 = vadd.f32 0.0, %v1924
        %1926 = vmatmul.bf16.gmra.mxu0 %v1724
        %v1927 = vpop.f32.mrf.mxu0
        %v1928 = vadd.f32 0.0, %v1927
        %v1929 = vpop.f32.mrf.mxu0
        %v1930 = vadd.f32 0.0, %v1929
        %1931 = vmatmul.bf16.gmra.mxu0 %v1727
        %v1932 = vpop.f32.mrf.mxu0
        %v1933 = vadd.f32 0.0, %v1932
        %v1934 = vpop.f32.mrf.mxu0
        %v1935 = vadd.f32 0.0, %v1934
        %1936 = vmatmul.bf16.gmra.mxu0 %v1730
        %v1937 = vpop.f32.mrf.mxu0
        %v1938 = vadd.f32 0.0, %v1937
        %v1939 = vpop.f32.mrf.mxu0
        %v1940 = vadd.f32 0.0, %v1939
        %1941 = vmatmul.bf16.gmra.mxu0 %v1733
        %v1942 = vpop.f32.mrf.mxu0
        %v1943 = vadd.f32 0.0, %v1942
        %v1944 = vpop.f32.mrf.mxu0
        %v1945 = vadd.f32 0.0, %v1944
        %1946 = vmatmul.bf16.gmra.mxu0 %v1736
        %v1947 = vpop.f32.mrf.mxu0
        %v1948 = vadd.f32 0.0, %v1947
        %v1949 = vpop.f32.mrf.mxu0
        %v1950 = vadd.f32 0.0, %v1949
        %1951 = vmatmul.bf16.gmra.mxu0 %v1739
        %v1952 = vpop.f32.mrf.mxu0
        %v1953 = vadd.f32 0.0, %v1952
        %v1954 = vpop.f32.mrf.mxu0
        %v1955 = vadd.f32 0.0, %v1954
        %1956 = vmatmul.bf16.gmra.mxu0 %v1742
        %v1957 = vpop.f32.mrf.mxu0
        %v1958 = vadd.f32 0.0, %v1957
        %v1959 = vpop.f32.mrf.mxu0
        %v1960 = vadd.f32 0.0, %v1959
        %1961 = vmatmul.bf16.gmra.mxu0 %v1745
        %v1962 = vpop.f32.mrf.mxu0
        %v1963 = vadd.f32 0.0, %v1962
        %v1964 = vpop.f32.mrf.mxu0
        %v1965 = vadd.f32 0.0, %v1964
        %1966 = vmatmul.bf16.gmra.mxu0 %v1748
        %v1967 = vpop.f32.mrf.mxu0
        %v1968 = vadd.f32 0.0, %v1967
        %v1969 = vpop.f32.mrf.mxu0
        %v1970 = vadd.f32 0.0, %v1969
        %1971 = vmatmul.bf16.gmra.mxu0 %v1751
        %v1972 = vpop.f32.mrf.mxu0
        %v1973 = vadd.f32 0.0, %v1972
        %v1974 = vpop.f32.mrf.mxu0
        %v1975 = vadd.f32 0.0, %v1974
        %1976 = vmatmul.bf16.gmra.mxu0 %v1754
        %v1977 = vpop.f32.mrf.mxu0
        %v1978 = vadd.f32 0.0, %v1977
        %v1979 = vpop.f32.mrf.mxu0
        %v1980 = vadd.f32 0.0, %v1979
        %1981 = vmatmul.bf16.gmra.mxu0 %v1757
        %v1982 = vpop.f32.mrf.mxu0
        %v1983 = vadd.f32 0.0, %v1982
        %v1984 = vpop.f32.mrf.mxu0
        %v1985 = vadd.f32 0.0, %v1984
        %1986 = vmatmul.bf16.gmra.mxu0 %v1760
        %v1987 = vpop.f32.mrf.mxu0
        %v1988 = vadd.f32 0.0, %v1987
        %v1989 = vpop.f32.mrf.mxu0
        %v1990 = vadd.f32 0.0, %v1989
        %1991 = vmatmul.bf16.gmra.mxu0 %v1763
        %v1992 = vpop.f32.mrf.mxu0
        %v1993 = vadd.f32 0.0, %v1992
        %v1994 = vpop.f32.mrf.mxu0
        %v1995 = vadd.f32 0.0, %v1994
        %1996 = vmatmul.bf16.gmra.mxu0 %v1766
        %v1997 = vpop.f32.mrf.mxu0
        %v1998 = vadd.f32 0.0, %v1997
        %v1999 = vpop.f32.mrf.mxu0
        %v2000 = vadd.f32 0.0, %v1999
        %2001 = vdwg.mxu0
        %2002 = vmatpush.bf16.msra.mxu0 0
        %2003 = vmatpush.bf16.msra.mxu0 0
        %2004 = vmatpush.bf16.msra.mxu0 0
        %2005 = vmatpush.bf16.msra.mxu0 0
        %2006 = vmatpush.bf16.msra.mxu0 %v1852
        %2007 = vmatpush.bf16.msra.mxu0 %v1851
        %2008 = vmatpush.bf16.msra.mxu0 %v1850
        %2009 = vmatpush.bf16.msra.mxu0 %v1849
        %2010 = vmatmul.bf16.gmra.mxu0 %v1866
        %v2011 = vpop.f32.mrf.mxu0
        %v2012 = vadd.f32 %v1923, %v2011
        %v2013 = vpop.f32.mrf.mxu0
        %v2014 = vadd.f32 %v1925, %v2013
        %2015 = vmatmul.bf16.gmra.mxu0 %v1869
        %v2016 = vpop.f32.mrf.mxu0
        %v2017 = vadd.f32 %v1928, %v2016
        %v2018 = vpop.f32.mrf.mxu0
        %v2019 = vadd.f32 %v1930, %v2018
        %2020 = vmatmul.bf16.gmra.mxu0 %v1872
        %v2021 = vpop.f32.mrf.mxu0
        %v2022 = vadd.f32 %v1933, %v2021
        %v2023 = vpop.f32.mrf.mxu0
        %v2024 = vadd.f32 %v1935, %v2023
        %2025 = vmatmul.bf16.gmra.mxu0 %v1875
        %v2026 = vpop.f32.mrf.mxu0
        %v2027 = vadd.f32 %v1938, %v2026
        %v2028 = vpop.f32.mrf.mxu0
        %v2029 = vadd.f32 %v1940, %v2028
        %2030 = vmatmul.bf16.gmra.mxu0 %v1878
        %v2031 = vpop.f32.mrf.mxu0
        %v2032 = vadd.f32 %v1943, %v2031
        %v2033 = vpop.f32.mrf.mxu0
        %v2034 = vadd.f32 %v1945, %v2033
        %2035 = vmatmul.bf16.gmra.mxu0 %v1881
        %v2036 = vpop.f32.mrf.mxu0
        %v2037 = vadd.f32 %v1948, %v2036
        %v2038 = vpop.f32.mrf.mxu0
        %v2039 = vadd.f32 %v1950, %v2038
        %2040 = vmatmul.bf16.gmra.mxu0 %v1884
        %v2041 = vpop.f32.mrf.mxu0
        %v2042 = vadd.f32 %v1953, %v2041
        %v2043 = vpop.f32.mrf.mxu0
        %v2044 = vadd.f32 %v1955, %v2043
        %2045 = vmatmul.bf16.gmra.mxu0 %v1887
        %v2046 = vpop.f32.mrf.mxu0
        %v2047 = vadd.f32 %v1958, %v2046
        %v2048 = vpop.f32.mrf.mxu0
        %v2049 = vadd.f32 %v1960, %v2048
        %2050 = vmatmul.bf16.gmra.mxu0 %v1890
        %v2051 = vpop.f32.mrf.mxu0
        %v2052 = vadd.f32 %v1963, %v2051
        %v2053 = vpop.f32.mrf.mxu0
        %v2054 = vadd.f32 %v1965, %v2053
        %2055 = vmatmul.bf16.gmra.mxu0 %v1893
        %v2056 = vpop.f32.mrf.mxu0
        %v2057 = vadd.f32 %v1968, %v2056
        %v2058 = vpop.f32.mrf.mxu0
        %v2059 = vadd.f32 %v1970, %v2058
        %2060 = vmatmul.bf16.gmra.mxu0 %v1896
        %v2061 = vpop.f32.mrf.mxu0
        %v2062 = vadd.f32 %v1973, %v2061
        %v2063 = vpop.f32.mrf.mxu0
        %v2064 = vadd.f32 %v1975, %v2063
        %2065 = vmatmul.bf16.gmra.mxu0 %v1899
        %v2066 = vpop.f32.mrf.mxu0
        %v2067 = vadd.f32 %v1978, %v2066
        %v2068 = vpop.f32.mrf.mxu0
        %v2069 = vadd.f32 %v1980, %v2068
        %2070 = vmatmul.bf16.gmra.mxu0 %v1902
        %v2071 = vpop.f32.mrf.mxu0
        %v2072 = vadd.f32 %v1983, %v2071
        %v2073 = vpop.f32.mrf.mxu0
        %v2074 = vadd.f32 %v1985, %v2073
        %2075 = vmatmul.bf16.gmra.mxu0 %v1905
        %v2076 = vpop.f32.mrf.mxu0
        %v2077 = vadd.f32 %v1988, %v2076
        %v2078 = vpop.f32.mrf.mxu0
        %v2079 = vadd.f32 %v1990, %v2078
        %2080 = vmatmul.bf16.gmra.mxu0 %v1908
        %v2081 = vpop.f32.mrf.mxu0
        %v2082 = vadd.f32 %v1993, %v2081
        %v2083 = vpop.f32.mrf.mxu0
        %v2084 = vadd.f32 %v1995, %v2083
        %2085 = vmatmul.bf16.gmra.mxu0 %v1911
        %v2086 = vpop.f32.mrf.mxu0
        %v2087 = vadd.f32 %v1998, %v2086
        %v2088 = vpop.f32.mrf.mxu0
        %v2089 = vadd.f32 %v2000, %v2088
        %2090 = vdwg.mxu0
        %v2115 = vunpack.c.l.b16 %v1248
        %v2116 = vunpack.c.l.b16 %v1249
        %v2117 = vunpack.c.l.b16 %v1250
        %v2118 = vunpack.c.l.b16 %v1251
        %v2119 = vunpack.c.l.b16 %v1252
        %v2120 = vunpack.c.l.b16 %v1253
        %v2121 = vunpack.c.l.b16 %v1254
        %v2122 = vunpack.c.l.b16 %v1255
        %v2123 = vunpack.c.l.b16 %v1256
        %v2124 = vunpack.c.l.b16 %v1257
        %v2125 = vunpack.c.l.b16 %v1258
        %v2126 = vunpack.c.l.b16 %v1259
        %v2127 = vunpack.c.l.b16 %v1260
        %v2128 = vunpack.c.l.b16 %v1261
        %v2129 = vunpack.c.l.b16 %v1262
        %v2130 = vunpack.c.l.b16 %v1263
        %v2131 = vunpack.c.l.b16 %v1264
        %v2132 = vunpack.c.l.b16 %v1265
        %v2133 = vunpack.c.l.b16 %v1266
        %v2134 = vunpack.c.l.b16 %v1267
        %v2135 = vunpack.c.l.b16 %v1268
        %v2136 = vunpack.c.l.b16 %v1269
        %v2137 = vunpack.c.l.b16 %v1270
        %v2138 = vunpack.c.l.b16 %v1271
        %v2139 = vpack.c.b16 %v2116, %v2115
        %v2140 = vpack.c.b16 %v2118, %v2117
        %v2141 = vpack.c.b16 %v2120, %v2119
        %v2142 = vpack.c.b16 %v2122, %v2121
        %v2143 = vpack.c.b16 %v2124, %v2123
        %v2144 = vpack.c.b16 %v2126, %v2125
        %v2145 = vpack.c.b16 %v2128, %v2127
        %v2146 = vpack.c.b16 %v2130, %v2129
        %v2147 = vpack.c.b16 %v2132, %v2131
        %v2148 = vpack.c.b16 %v2134, %v2133
        %v2149 = vpack.c.b16 %v2136, %v2135
        %v2150 = vpack.c.b16 %v2138, %v2137
        %v2164 = vsel %vm1199, %v1153, 0
        %v2167 = vsel %vm1199, %v1156, 0
        %v2170 = vsel %vm1199, %v1159, 0
        %v2173 = vsel %vm1199, %v1162, 0
        %v2176 = vsel %vm1199, %v1165, 0
        %v2179 = vsel %vm1199, %v1168, 0
        %v2182 = vsel %vm1199, %v1171, 0
        %v2185 = vsel %vm1199, %v1174, 0
        %v2188 = vsel %vm1199, %v1177, 0
        %v2191 = vsel %vm1199, %v1180, 0
        %v2194 = vsel %vm1199, %v1183, 0
        %v2197 = vsel %vm1199, %v1186, 0
        %v2200 = vsel %vm1199, %v1189, 0
        %v2203 = vsel %vm1199, %v1192, 0
        %v2206 = vsel %vm1199, %v1195, 0
        %v2209 = vsel %vm1199, %v1198, 0
        %2211 = vmatpush.bf16.msra.mxu0 %v2146
        %2212 = vmatpush.bf16.msra.mxu0 %v2145
        %2213 = vmatpush.bf16.msra.mxu0 %v2144
        %2214 = vmatpush.bf16.msra.mxu0 %v2143
        %2215 = vmatpush.bf16.msra.mxu0 %v2142
        %2216 = vmatpush.bf16.msra.mxu0 %v2141
        %2217 = vmatpush.bf16.msra.mxu0 %v2140
        %2218 = vmatpush.bf16.msra.mxu0 %v2139
        %2219 = vmatmul.bf16.gmra.mxu0 %v1201
        %v2220 = vpop.f32.mrf.mxu0
        %v2221 = vadd.f32 %v2012, %v2220
        %v2222 = vpop.f32.mrf.mxu0
        %v2223 = vadd.f32 %v2014, %v2222
        %2224 = vmatmul.bf16.gmra.mxu0 %v1204
        %v2225 = vpop.f32.mrf.mxu0
        %v2226 = vadd.f32 %v2017, %v2225
        %v2227 = vpop.f32.mrf.mxu0
        %v2228 = vadd.f32 %v2019, %v2227
        %2229 = vmatmul.bf16.gmra.mxu0 %v1207
        %v2230 = vpop.f32.mrf.mxu0
        %v2231 = vadd.f32 %v2022, %v2230
        %v2232 = vpop.f32.mrf.mxu0
        %v2233 = vadd.f32 %v2024, %v2232
        %2234 = vmatmul.bf16.gmra.mxu0 %v1210
        %v2235 = vpop.f32.mrf.mxu0
        %v2236 = vadd.f32 %v2027, %v2235
        %v2237 = vpop.f32.mrf.mxu0
        %v2238 = vadd.f32 %v2029, %v2237
        %2239 = vmatmul.bf16.gmra.mxu0 %v1213
        %v2240 = vpop.f32.mrf.mxu0
        %v2241 = vadd.f32 %v2032, %v2240
        %v2242 = vpop.f32.mrf.mxu0
        %v2243 = vadd.f32 %v2034, %v2242
        %2244 = vmatmul.bf16.gmra.mxu0 %v1216
        %v2245 = vpop.f32.mrf.mxu0
        %v2246 = vadd.f32 %v2037, %v2245
        %v2247 = vpop.f32.mrf.mxu0
        %v2248 = vadd.f32 %v2039, %v2247
        %2249 = vmatmul.bf16.gmra.mxu0 %v1219
        %v2250 = vpop.f32.mrf.mxu0
        %v2251 = vadd.f32 %v2042, %v2250
        %v2252 = vpop.f32.mrf.mxu0
        %v2253 = vadd.f32 %v2044, %v2252
        %2254 = vmatmul.bf16.gmra.mxu0 %v1222
        %v2255 = vpop.f32.mrf.mxu0
        %v2256 = vadd.f32 %v2047, %v2255
        %v2257 = vpop.f32.mrf.mxu0
        %v2258 = vadd.f32 %v2049, %v2257
        %2259 = vmatmul.bf16.gmra.mxu0 %v1225
        %v2260 = vpop.f32.mrf.mxu0
        %v2261 = vadd.f32 %v2052, %v2260
        %v2262 = vpop.f32.mrf.mxu0
        %v2263 = vadd.f32 %v2054, %v2262
        %2264 = vmatmul.bf16.gmra.mxu0 %v1228
        %v2265 = vpop.f32.mrf.mxu0
        %v2266 = vadd.f32 %v2057, %v2265
        %v2267 = vpop.f32.mrf.mxu0
        %v2268 = vadd.f32 %v2059, %v2267
        %2269 = vmatmul.bf16.gmra.mxu0 %v1231
        %v2270 = vpop.f32.mrf.mxu0
        %v2271 = vadd.f32 %v2062, %v2270
        %v2272 = vpop.f32.mrf.mxu0
        %v2273 = vadd.f32 %v2064, %v2272
        %2274 = vmatmul.bf16.gmra.mxu0 %v1234
        %v2275 = vpop.f32.mrf.mxu0
        %v2276 = vadd.f32 %v2067, %v2275
        %v2277 = vpop.f32.mrf.mxu0
        %v2278 = vadd.f32 %v2069, %v2277
        %2279 = vmatmul.bf16.gmra.mxu0 %v1237
        %v2280 = vpop.f32.mrf.mxu0
        %v2281 = vadd.f32 %v2072, %v2280
        %v2282 = vpop.f32.mrf.mxu0
        %v2283 = vadd.f32 %v2074, %v2282
        %2284 = vmatmul.bf16.gmra.mxu0 %v1240
        %v2285 = vpop.f32.mrf.mxu0
        %v2286 = vadd.f32 %v2077, %v2285
        %v2287 = vpop.f32.mrf.mxu0
        %v2288 = vadd.f32 %v2079, %v2287
        %2289 = vmatmul.bf16.gmra.mxu0 %v1243
        %v2290 = vpop.f32.mrf.mxu0
        %v2291 = vadd.f32 %v2082, %v2290
        %v2292 = vpop.f32.mrf.mxu0
        %v2293 = vadd.f32 %v2084, %v2292
        %2294 = vmatmul.bf16.gmra.mxu0 %v1246
        %v2295 = vpop.f32.mrf.mxu0
        %v2296 = vadd.f32 %v2087, %v2295
        %v2297 = vpop.f32.mrf.mxu0
        %v2298 = vadd.f32 %v2089, %v2297
        %2299 = vdwg.mxu0
        %2300 = vmatpush.bf16.msra.mxu0 0
        %2301 = vmatpush.bf16.msra.mxu0 0
        %2302 = vmatpush.bf16.msra.mxu0 0
        %2303 = vmatpush.bf16.msra.mxu0 0
        %2304 = vmatpush.bf16.msra.mxu0 %v2150
        %2305 = vmatpush.bf16.msra.mxu0 %v2149
        %2306 = vmatpush.bf16.msra.mxu0 %v2148
        %2307 = vmatpush.bf16.msra.mxu0 %v2147
        %2308 = vmatmul.bf16.gmra.mxu0 %v2164
        %v2309 = vpop.f32.mrf.mxu0
        %v2310 = vadd.f32 %v2221, %v2309
        %v2311 = vpop.f32.mrf.mxu0
        %v2312 = vadd.f32 %v2223, %v2311
        %2313 = vmatmul.bf16.gmra.mxu0 %v2167
        %v2314 = vpop.f32.mrf.mxu0
        %v2315 = vadd.f32 %v2226, %v2314
        %v2316 = vpop.f32.mrf.mxu0
        %v2317 = vadd.f32 %v2228, %v2316
        %2318 = vmatmul.bf16.gmra.mxu0 %v2170
        %v2319 = vpop.f32.mrf.mxu0
        %v2320 = vadd.f32 %v2231, %v2319
        %v2321 = vpop.f32.mrf.mxu0
        %v2322 = vadd.f32 %v2233, %v2321
        %2323 = vmatmul.bf16.gmra.mxu0 %v2173
        %v2324 = vpop.f32.mrf.mxu0
        %v2325 = vadd.f32 %v2236, %v2324
        %v2326 = vpop.f32.mrf.mxu0
        %v2327 = vadd.f32 %v2238, %v2326
        %2328 = vmatmul.bf16.gmra.mxu0 %v2176
        %v2329 = vpop.f32.mrf.mxu0
        %v2330 = vadd.f32 %v2241, %v2329
        %v2331 = vpop.f32.mrf.mxu0
        %v2332 = vadd.f32 %v2243, %v2331
        %2333 = vmatmul.bf16.gmra.mxu0 %v2179
        %v2334 = vpop.f32.mrf.mxu0
        %v2335 = vadd.f32 %v2246, %v2334
        %v2336 = vpop.f32.mrf.mxu0
        %v2337 = vadd.f32 %v2248, %v2336
        %2338 = vmatmul.bf16.gmra.mxu0 %v2182
        %v2339 = vpop.f32.mrf.mxu0
        %v2340 = vadd.f32 %v2251, %v2339
        %v2341 = vpop.f32.mrf.mxu0
        %v2342 = vadd.f32 %v2253, %v2341
        %2343 = vmatmul.bf16.gmra.mxu0 %v2185
        %v2344 = vpop.f32.mrf.mxu0
        %v2345 = vadd.f32 %v2256, %v2344
        %v2346 = vpop.f32.mrf.mxu0
        %v2347 = vadd.f32 %v2258, %v2346
        %2348 = vmatmul.bf16.gmra.mxu0 %v2188
        %v2349 = vpop.f32.mrf.mxu0
        %v2350 = vadd.f32 %v2261, %v2349
        %v2351 = vpop.f32.mrf.mxu0
        %v2352 = vadd.f32 %v2263, %v2351
        %2353 = vmatmul.bf16.gmra.mxu0 %v2191
        %v2354 = vpop.f32.mrf.mxu0
        %v2355 = vadd.f32 %v2266, %v2354
        %v2356 = vpop.f32.mrf.mxu0
        %v2357 = vadd.f32 %v2268, %v2356
        %2358 = vmatmul.bf16.gmra.mxu0 %v2194
        %v2359 = vpop.f32.mrf.mxu0
        %v2360 = vadd.f32 %v2271, %v2359
        %v2361 = vpop.f32.mrf.mxu0
        %v2362 = vadd.f32 %v2273, %v2361
        %2363 = vmatmul.bf16.gmra.mxu0 %v2197
        %v2364 = vpop.f32.mrf.mxu0
        %v2365 = vadd.f32 %v2276, %v2364
        %v2366 = vpop.f32.mrf.mxu0
        %v2367 = vadd.f32 %v2278, %v2366
        %2368 = vmatmul.bf16.gmra.mxu0 %v2200
        %v2369 = vpop.f32.mrf.mxu0
        %v2370 = vadd.f32 %v2281, %v2369
        %v2371 = vpop.f32.mrf.mxu0
        %v2372 = vadd.f32 %v2283, %v2371
        %2373 = vmatmul.bf16.gmra.mxu0 %v2203
        %v2374 = vpop.f32.mrf.mxu0
        %v2375 = vadd.f32 %v2286, %v2374
        %v2376 = vpop.f32.mrf.mxu0
        %v2377 = vadd.f32 %v2288, %v2376
        %2378 = vmatmul.bf16.gmra.mxu0 %v2206
        %v2379 = vpop.f32.mrf.mxu0
        %v2380 = vadd.f32 %v2291, %v2379
        %v2381 = vpop.f32.mrf.mxu0
        %v2382 = vadd.f32 %v2293, %v2381
        %2383 = vmatmul.bf16.gmra.mxu0 %v2209
        %v2384 = vpop.f32.mrf.mxu0
        %v2385 = vadd.f32 %v2296, %v2384
        %v2386 = vpop.f32.mrf.mxu0
        %v2387 = vadd.f32 %v2298, %v2386
        %2388 = vdwg.mxu0
        %s2389 = scalar_lea.vmem [#allocation2], 24
        %v2390 = vld [vmem:[%s2389] sm:$0xf]
        %v2391 = vld [vmem:[%s2389 + $0x4] sm:$0xf]
        %v2392 = vld [vmem:[%s2389 + $0x8] sm:$0x1]
        %v2393 = vld [vmem:[%s2389 + $0xc] sm:$0xf]
        %v2394 = vld [vmem:[%s2389 + $0x10] sm:$0xf]
        %v2395 = vld [vmem:[%s2389 + $0x14] sm:$0x1]
        %v2396 = vld [vmem:[%s2389 + $0x18] sm:$0xf]
        %v2397 = vld [vmem:[%s2389 + $0x1c] sm:$0xf]
        %v2398 = vld [vmem:[%s2389 + $0x20] sm:$0x1]
        %v2399 = vld [vmem:[%s2389 + $0x24] sm:$0xf]
        %v2400 = vld [vmem:[%s2389 + $0x28] sm:$0xf]
        %v2401 = vld [vmem:[%s2389 + $0x2c] sm:$0x1]
        %v2402 = vld [vmem:[%s2389 + $0x30] sm:$0xf]
        %v2403 = vld [vmem:[%s2389 + $0x34] sm:$0xf]
        %v2404 = vld [vmem:[%s2389 + $0x38] sm:$0x1]
        %v2405 = vld [vmem:[%s2389 + $0x3c] sm:$0xf]
        %v2406 = vld [vmem:[%s2389 + $0x40] sm:$0xf]
        %v2407 = vld [vmem:[%s2389 + $0x44] sm:$0x1]
        %v2408 = vld [vmem:[%s2389 + $0x48] sm:$0xf]
        %v2409 = vld [vmem:[%s2389 + $0x4c] sm:$0xf]
        %v2410 = vld [vmem:[%s2389 + $0x50] sm:$0x1]
        %v2411 = vld [vmem:[%s2389 + $0x54] sm:$0xf]
        %v2412 = vld [vmem:[%s2389 + $0x58] sm:$0xf]
        %v2413 = vld [vmem:[%s2389 + $0x5c] sm:$0x1]
        %v2414 = vld [vmem:[%s2389 + $0x60] sm:$0xf]
        %v2415 = vld [vmem:[%s2389 + $0x64] sm:$0xf]
        %v2416 = vld [vmem:[%s2389 + $0x68] sm:$0x1]
        %v2417 = vld [vmem:[%s2389 + $0x6c] sm:$0xf]
        %v2418 = vld [vmem:[%s2389 + $0x70] sm:$0xf]
        %v2419 = vld [vmem:[%s2389 + $0x74] sm:$0x1]
        %v2420 = vld [vmem:[%s2389 + $0x78] sm:$0xf]
        %v2421 = vld [vmem:[%s2389 + $0x7c] sm:$0xf]
        %v2422 = vld [vmem:[%s2389 + $0x80] sm:$0x1]
        %v2423 = vld [vmem:[%s2389 + $0x84] sm:$0xf]
        %v2424 = vld [vmem:[%s2389 + $0x88] sm:$0xf]
        %v2425 = vld [vmem:[%s2389 + $0x8c] sm:$0x1]
        %v2426 = vld [vmem:[%s2389 + $0x90] sm:$0xf]
        %v2427 = vld [vmem:[%s2389 + $0x94] sm:$0xf]
        %v2428 = vld [vmem:[%s2389 + $0x98] sm:$0x1]
        %v2429 = vld [vmem:[%s2389 + $0x9c] sm:$0xf]
        %v2430 = vld [vmem:[%s2389 + $0xa0] sm:$0xf]
        %v2431 = vld [vmem:[%s2389 + $0xa4] sm:$0x1]
        %v2432 = vld [vmem:[%s2389 + $0xa8] sm:$0xf]
        %v2433 = vld [vmem:[%s2389 + $0xac] sm:$0xf]
        %v2434 = vld [vmem:[%s2389 + $0xb0] sm:$0x1]
        %v2435 = vld [vmem:[%s2389 + $0xb4] sm:$0xf]
        %v2436 = vld [vmem:[%s2389 + $0xb8] sm:$0xf]
        %v2437 = vld [vmem:[%s2389 + $0xbc] sm:$0x1]
        %v2470 = vunpack.c.l.b16 %v2390
        %v2471 = vunpack.c.l.b16 %v2391
        %v2472 = vunpack.c.l.b16 %v2393
        %v2473 = vunpack.c.l.b16 %v2394
        %v2474 = vunpack.c.l.b16 %v2396
        %v2475 = vunpack.c.l.b16 %v2397
        %v2476 = vunpack.c.l.b16 %v2399
        %v2477 = vunpack.c.l.b16 %v2400
        %v2478 = vunpack.c.l.b16 %v2402
        %v2479 = vunpack.c.l.b16 %v2403
        %v2480 = vunpack.c.l.b16 %v2405
        %v2481 = vunpack.c.l.b16 %v2406
        %v2482 = vunpack.c.l.b16 %v2408
        %v2483 = vunpack.c.l.b16 %v2409
        %v2484 = vunpack.c.l.b16 %v2411
        %v2485 = vunpack.c.l.b16 %v2412
        %v2486 = vunpack.c.l.b16 %v2414
        %v2487 = vunpack.c.l.b16 %v2415
        %v2488 = vunpack.c.l.b16 %v2417
        %v2489 = vunpack.c.l.b16 %v2418
        %v2490 = vunpack.c.l.b16 %v2420
        %v2491 = vunpack.c.l.b16 %v2421
        %v2492 = vunpack.c.l.b16 %v2423
        %v2493 = vunpack.c.l.b16 %v2424
        %v2494 = vunpack.c.l.b16 %v2426
        %v2495 = vunpack.c.l.b16 %v2427
        %v2496 = vunpack.c.l.b16 %v2429
        %v2497 = vunpack.c.l.b16 %v2430
        %v2498 = vunpack.c.l.b16 %v2432
        %v2499 = vunpack.c.l.b16 %v2433
        %v2500 = vunpack.c.l.b16 %v2435
        %v2501 = vunpack.c.l.b16 %v2436
        %v2502 = vpack.c.b16 %v2471, %v2470
        %v2503 = vpack.c.b16 %v2473, %v2472
        %v2504 = vpack.c.b16 %v2475, %v2474
        %v2505 = vpack.c.b16 %v2477, %v2476
        %v2506 = vpack.c.b16 %v2479, %v2478
        %v2507 = vpack.c.b16 %v2481, %v2480
        %v2508 = vpack.c.b16 %v2483, %v2482
        %v2509 = vpack.c.b16 %v2485, %v2484
        %v2510 = vpack.c.b16 %v2487, %v2486
        %v2511 = vpack.c.b16 %v2489, %v2488
        %v2512 = vpack.c.b16 %v2491, %v2490
        %v2513 = vpack.c.b16 %v2493, %v2492
        %v2514 = vpack.c.b16 %v2495, %v2494
        %v2515 = vpack.c.b16 %v2497, %v2496
        %v2516 = vpack.c.b16 %v2499, %v2498
        %v2517 = vpack.c.b16 %v2501, %v2500
        %v2534 = vunpack.c.l.b16 %v2392
        %v2535 = vunpack.c.l.b16 %v2395
        %v2536 = vunpack.c.l.b16 %v2398
        %v2537 = vunpack.c.l.b16 %v2401
        %v2538 = vunpack.c.l.b16 %v2404
        %v2539 = vunpack.c.l.b16 %v2407
        %v2540 = vunpack.c.l.b16 %v2410
        %v2541 = vunpack.c.l.b16 %v2413
        %v2542 = vunpack.c.l.b16 %v2416
        %v2543 = vunpack.c.l.b16 %v2419
        %v2544 = vunpack.c.l.b16 %v2422
        %v2545 = vunpack.c.l.b16 %v2425
        %v2546 = vunpack.c.l.b16 %v2428
        %v2547 = vunpack.c.l.b16 %v2431
        %v2548 = vunpack.c.l.b16 %v2434
        %v2549 = vunpack.c.l.b16 %v2437
        %v2550 = vpack.c.b16 %v2534, %v2534
        %v2551 = vpack.c.b16 %v2535, %v2535
        %v2552 = vpack.c.b16 %v2536, %v2536
        %v2553 = vpack.c.b16 %v2537, %v2537
        %v2554 = vpack.c.b16 %v2538, %v2538
        %v2555 = vpack.c.b16 %v2539, %v2539
        %v2556 = vpack.c.b16 %v2540, %v2540
        %v2557 = vpack.c.b16 %v2541, %v2541
        %v2558 = vpack.c.b16 %v2542, %v2542
        %v2559 = vpack.c.b16 %v2543, %v2543
        %v2560 = vpack.c.b16 %v2544, %v2544
        %v2561 = vpack.c.b16 %v2545, %v2545
        %v2562 = vpack.c.b16 %v2546, %v2546
        %v2563 = vpack.c.b16 %v2547, %v2547
        %v2564 = vpack.c.b16 %v2548, %v2548
        %v2565 = vpack.c.b16 %v2549, %v2549
        %v2567 = vshrl.u32 %v2502, 16
        %v2569 = vshll.u32 %v2502, 16
        %v2571 = vrot.slane %v2569, 1
        %v2572 = vor.u32 %v2567, %v2571
        %v2574 = vshll.u32 %v2550, 16
        %v2576 = vrot.slane %v2574, 1
        %v2577 = vsel %vm925, %v2572, %v2576
        %v2579 = vshrl.u32 %v2503, 16
        %v2581 = vshll.u32 %v2503, 16
        %v2583 = vrot.slane %v2581, 1
        %v2584 = vor.u32 %v2579, %v2583
        %v2586 = vshll.u32 %v2551, 16
        %v2588 = vrot.slane %v2586, 1
        %v2589 = vsel %vm925, %v2584, %v2588
        %v2591 = vshrl.u32 %v2504, 16
        %v2593 = vshll.u32 %v2504, 16
        %v2595 = vrot.slane %v2593, 1
        %v2596 = vor.u32 %v2591, %v2595
        %v2598 = vshll.u32 %v2552, 16
        %v2600 = vrot.slane %v2598, 1
        %v2601 = vsel %vm925, %v2596, %v2600
        %v2603 = vshrl.u32 %v2505, 16
        %v2605 = vshll.u32 %v2505, 16
        %v2607 = vrot.slane %v2605, 1
        %v2608 = vor.u32 %v2603, %v2607
        %v2610 = vshll.u32 %v2553, 16
        %v2612 = vrot.slane %v2610, 1
        %v2613 = vsel %vm925, %v2608, %v2612
        %v2615 = vshrl.u32 %v2506, 16
        %v2617 = vshll.u32 %v2506, 16
        %v2619 = vrot.slane %v2617, 1
        %v2620 = vor.u32 %v2615, %v2619
        %v2622 = vshll.u32 %v2554, 16
        %v2624 = vrot.slane %v2622, 1
        %v2625 = vsel %vm925, %v2620, %v2624
        %v2627 = vshrl.u32 %v2507, 16
        %v2629 = vshll.u32 %v2507, 16
        %v2631 = vrot.slane %v2629, 1
        %v2632 = vor.u32 %v2627, %v2631
        %v2634 = vshll.u32 %v2555, 16
        %v2636 = vrot.slane %v2634, 1
        %v2637 = vsel %vm925, %v2632, %v2636
        %v2639 = vshrl.u32 %v2508, 16
        %v2641 = vshll.u32 %v2508, 16
        %v2643 = vrot.slane %v2641, 1
        %v2644 = vor.u32 %v2639, %v2643
        %v2646 = vshll.u32 %v2556, 16
        %v2648 = vrot.slane %v2646, 1
        %v2649 = vsel %vm925, %v2644, %v2648
        %v2651 = vshrl.u32 %v2509, 16
        %v2653 = vshll.u32 %v2509, 16
        %v2655 = vrot.slane %v2653, 1
        %v2656 = vor.u32 %v2651, %v2655
        %v2658 = vshll.u32 %v2557, 16
        %v2660 = vrot.slane %v2658, 1
        %v2661 = vsel %vm925, %v2656, %v2660
        %v2663 = vshrl.u32 %v2510, 16
        %v2665 = vshll.u32 %v2510, 16
        %v2667 = vrot.slane %v2665, 1
        %v2668 = vor.u32 %v2663, %v2667
        %v2670 = vshll.u32 %v2558, 16
        %v2672 = vrot.slane %v2670, 1
        %v2673 = vsel %vm925, %v2668, %v2672
        %v2675 = vshrl.u32 %v2511, 16
        %v2677 = vshll.u32 %v2511, 16
        %v2679 = vrot.slane %v2677, 1
        %v2680 = vor.u32 %v2675, %v2679
        %v2682 = vshll.u32 %v2559, 16
        %v2684 = vrot.slane %v2682, 1
        %v2685 = vsel %vm925, %v2680, %v2684
        %v2687 = vshrl.u32 %v2512, 16
        %v2689 = vshll.u32 %v2512, 16
        %v2691 = vrot.slane %v2689, 1
        %v2692 = vor.u32 %v2687, %v2691
        %v2694 = vshll.u32 %v2560, 16
        %v2696 = vrot.slane %v2694, 1
        %v2697 = vsel %vm925, %v2692, %v2696
        %v2699 = vshrl.u32 %v2513, 16
        %v2701 = vshll.u32 %v2513, 16
        %v2703 = vrot.slane %v2701, 1
        %v2704 = vor.u32 %v2699, %v2703
        %v2706 = vshll.u32 %v2561, 16
        %v2708 = vrot.slane %v2706, 1
        %v2709 = vsel %vm925, %v2704, %v2708
        %v2711 = vshrl.u32 %v2514, 16
        %v2713 = vshll.u32 %v2514, 16
        %v2715 = vrot.slane %v2713, 1
        %v2716 = vor.u32 %v2711, %v2715
        %v2718 = vshll.u32 %v2562, 16
        %v2720 = vrot.slane %v2718, 1
        %v2721 = vsel %vm925, %v2716, %v2720
        %v2723 = vshrl.u32 %v2515, 16
        %v2725 = vshll.u32 %v2515, 16
        %v2727 = vrot.slane %v2725, 1
        %v2728 = vor.u32 %v2723, %v2727
        %v2730 = vshll.u32 %v2563, 16
        %v2732 = vrot.slane %v2730, 1
        %v2733 = vsel %vm925, %v2728, %v2732
        %v2735 = vshrl.u32 %v2516, 16
        %v2737 = vshll.u32 %v2516, 16
        %v2739 = vrot.slane %v2737, 1
        %v2740 = vor.u32 %v2735, %v2739
        %v2742 = vshll.u32 %v2564, 16
        %v2744 = vrot.slane %v2742, 1
        %v2745 = vsel %vm925, %v2740, %v2744
        %v2747 = vshrl.u32 %v2517, 16
        %v2749 = vshll.u32 %v2517, 16
        %v2751 = vrot.slane %v2749, 1
        %v2752 = vor.u32 %v2747, %v2751
        %v2754 = vshll.u32 %v2565, 16
        %v2756 = vrot.slane %v2754, 1
        %v2757 = vsel %vm925, %v2752, %v2756
        %2758 = vrot.lane.b32.xlu0 %v2577, 64
        %v2759 = vpop.permute.xlu0 %2758
        %2760 = vrot.lane.b32.xlu0 %v2589, 64
        %v2761 = vpop.permute.xlu0 %2760
        %2762 = vrot.lane.b32.xlu0 %v2601, 64
        %v2763 = vpop.permute.xlu0 %2762
        %2764 = vrot.lane.b32.xlu0 %v2613, 64
        %v2765 = vpop.permute.xlu0 %2764
        %2766 = vrot.lane.b32.xlu0 %v2625, 64
        %v2767 = vpop.permute.xlu0 %2766
        %2768 = vrot.lane.b32.xlu0 %v2637, 64
        %v2769 = vpop.permute.xlu0 %2768
        %2770 = vrot.lane.b32.xlu0 %v2649, 64
        %v2771 = vpop.permute.xlu0 %2770
        %2772 = vrot.lane.b32.xlu0 %v2661, 64
        %v2773 = vpop.permute.xlu0 %2772
        %2774 = vrot.lane.b32.xlu0 %v2673, 64
        %v2775 = vpop.permute.xlu0 %2774
        %2776 = vrot.lane.b32.xlu0 %v2685, 64
        %v2777 = vpop.permute.xlu0 %2776
        %2778 = vrot.lane.b32.xlu0 %v2697, 64
        %v2779 = vpop.permute.xlu0 %2778
        %2780 = vrot.lane.b32.xlu0 %v2709, 64
        %v2781 = vpop.permute.xlu0 %2780
        %2782 = vrot.lane.b32.xlu0 %v2721, 64
        %v2783 = vpop.permute.xlu0 %2782
        %2784 = vrot.lane.b32.xlu0 %v2733, 64
        %v2785 = vpop.permute.xlu0 %2784
        %2786 = vrot.lane.b32.xlu0 %v2745, 64
        %v2787 = vpop.permute.xlu0 %2786
        %2788 = vrot.lane.b32.xlu0 %v2757, 64
        %v2789 = vpop.permute.xlu0 %2788
        %v2790 = vrot.slane %v2502, 1
        %v2791 = vrot.slane %v2550, 1
        %v2792 = vsel %vm1150, %v2790, %v2791
        %v2793 = vrot.slane %v2503, 1
        %v2794 = vrot.slane %v2551, 1
        %v2795 = vsel %vm1150, %v2793, %v2794
        %v2796 = vrot.slane %v2504, 1
        %v2797 = vrot.slane %v2552, 1
        %v2798 = vsel %vm1150, %v2796, %v2797
        %v2799 = vrot.slane %v2505, 1
        %v2800 = vrot.slane %v2553, 1
        %v2801 = vsel %vm1150, %v2799, %v2800
        %v2802 = vrot.slane %v2506, 1
        %v2803 = vrot.slane %v2554, 1
        %v2804 = vsel %vm1150, %v2802, %v2803
        %v2805 = vrot.slane %v2507, 1
        %v2806 = vrot.slane %v2555, 1
        %v2807 = vsel %vm1150, %v2805, %v2806
        %v2808 = vrot.slane %v2508, 1
        %v2809 = vrot.slane %v2556, 1
        %v2810 = vsel %vm1150, %v2808, %v2809
        %v2811 = vrot.slane %v2509, 1
        %v2812 = vrot.slane %v2557, 1
        %v2813 = vsel %vm1150, %v2811, %v2812
        %v2814 = vrot.slane %v2510, 1
        %v2815 = vrot.slane %v2558, 1
        %v2816 = vsel %vm1150, %v2814, %v2815
        %v2817 = vrot.slane %v2511, 1
        %v2818 = vrot.slane %v2559, 1
        %v2819 = vsel %vm1150, %v2817, %v2818
        %v2820 = vrot.slane %v2512, 1
        %v2821 = vrot.slane %v2560, 1
        %v2822 = vsel %vm1150, %v2820, %v2821
        %v2823 = vrot.slane %v2513, 1
        %v2824 = vrot.slane %v2561, 1
        %v2825 = vsel %vm1150, %v2823, %v2824
        %v2826 = vrot.slane %v2514, 1
        %v2827 = vrot.slane %v2562, 1
        %v2828 = vsel %vm1150, %v2826, %v2827
        %v2829 = vrot.slane %v2515, 1
        %v2830 = vrot.slane %v2563, 1
        %v2831 = vsel %vm1150, %v2829, %v2830
        %v2832 = vrot.slane %v2516, 1
        %v2833 = vrot.slane %v2564, 1
        %v2834 = vsel %vm1150, %v2832, %v2833
        %v2835 = vrot.slane %v2517, 1
        %v2836 = vrot.slane %v2565, 1
        %v2837 = vsel %vm1150, %v2835, %v2836
        %v2839 = vsel %vm1199, %v2502, %v2759
        %v2842 = vsel %vm1199, %v2503, %v2761
        %v2845 = vsel %vm1199, %v2504, %v2763
        %v2848 = vsel %vm1199, %v2505, %v2765
        %v2851 = vsel %vm1199, %v2506, %v2767
        %v2854 = vsel %vm1199, %v2507, %v2769
        %v2857 = vsel %vm1199, %v2508, %v2771
        %v2860 = vsel %vm1199, %v2509, %v2773
        %v2863 = vsel %vm1199, %v2510, %v2775
        %v2866 = vsel %vm1199, %v2511, %v2777
        %v2869 = vsel %vm1199, %v2512, %v2779
        %v2872 = vsel %vm1199, %v2513, %v2781
        %v2875 = vsel %vm1199, %v2514, %v2783
        %v2878 = vsel %vm1199, %v2515, %v2785
        %v2881 = vsel %vm1199, %v2516, %v2787
        %v2884 = vsel %vm1199, %v2517, %v2789
        %s2886 = scalar_lea.vmem %s1, 192
        %v2887 = vld [vmem:[%s2886] sm:$0xf]
        %v2888 = vld [vmem:[%s2886 + $0x4] sm:$0xf]
        %v2889 = vld [vmem:[%s2886 + $0x8] sm:$0xf]
        %v2890 = vld [vmem:[%s2886 + $0xc] sm:$0xf]
        %v2891 = vld [vmem:[%s2886 + $0x10] sm:$0xf]
        %v2892 = vld [vmem:[%s2886 + $0x14] sm:$0xf]
        %v2893 = vld [vmem:[%s2886 + $0x18] sm:$0xf]
        %v2894 = vld [vmem:[%s2886 + $0x1c] sm:$0xf]
        %v2895 = vld [vmem:[%s2886 + $0x20] sm:$0xf]
        %v2896 = vld [vmem:[%s2886 + $0x24] sm:$0xf]
        %v2897 = vld [vmem:[%s2886 + $0x28] sm:$0xf]
        %v2898 = vld [vmem:[%s2886 + $0x2c] sm:$0xf]
        %v2899 = vld [vmem:[%s2886 + $0x30] sm:$0xf]
        %v2900 = vld [vmem:[%s2886 + $0x34] sm:$0xf]
        %v2901 = vld [vmem:[%s2886 + $0x38] sm:$0xf]
        %v2902 = vld [vmem:[%s2886 + $0x3c] sm:$0xf]
        %v2903 = vld [vmem:[%s2886 + $0x40] sm:$0xf]
        %v2904 = vld [vmem:[%s2886 + $0x44] sm:$0xf]
        %v2905 = vld [vmem:[%s2886 + $0x48] sm:$0xf]
        %v2906 = vld [vmem:[%s2886 + $0x4c] sm:$0xf]
        %v2907 = vld [vmem:[%s2886 + $0x50] sm:$0xf]
        %v2908 = vld [vmem:[%s2886 + $0x54] sm:$0xf]
        %v2909 = vld [vmem:[%s2886 + $0x58] sm:$0xf]
        %v2910 = vld [vmem:[%s2886 + $0x5c] sm:$0xf]
        %v2935 = vunpack.c.l.b16 %v2887
        %v2936 = vunpack.c.l.b16 %v2888
        %v2937 = vunpack.c.l.b16 %v2889
        %v2938 = vunpack.c.l.b16 %v2890
        %v2939 = vunpack.c.l.b16 %v2891
        %v2940 = vunpack.c.l.b16 %v2892
        %v2941 = vunpack.c.l.b16 %v2893
        %v2942 = vunpack.c.l.b16 %v2894
        %v2943 = vunpack.c.l.b16 %v2895
        %v2944 = vunpack.c.l.b16 %v2896
        %v2945 = vunpack.c.l.b16 %v2897
        %v2946 = vunpack.c.l.b16 %v2898
        %v2947 = vunpack.c.l.b16 %v2899
        %v2948 = vunpack.c.l.b16 %v2900
        %v2949 = vunpack.c.l.b16 %v2901
        %v2950 = vunpack.c.l.b16 %v2902
        %v2951 = vunpack.c.l.b16 %v2903
        %v2952 = vunpack.c.l.b16 %v2904
        %v2953 = vunpack.c.l.b16 %v2905
        %v2954 = vunpack.c.l.b16 %v2906
        %v2955 = vunpack.c.l.b16 %v2907
        %v2956 = vunpack.c.l.b16 %v2908
        %v2957 = vunpack.c.l.b16 %v2909
        %v2958 = vunpack.c.l.b16 %v2910
        %v2959 = vpack.c.b16 %v2936, %v2935
        %v2960 = vpack.c.b16 %v2938, %v2937
        %v2961 = vpack.c.b16 %v2940, %v2939
        %v2962 = vpack.c.b16 %v2942, %v2941
        %v2963 = vpack.c.b16 %v2944, %v2943
        %v2964 = vpack.c.b16 %v2946, %v2945
        %v2965 = vpack.c.b16 %v2948, %v2947
        %v2966 = vpack.c.b16 %v2950, %v2949
        %v2967 = vpack.c.b16 %v2952, %v2951
        %v2968 = vpack.c.b16 %v2954, %v2953
        %v2969 = vpack.c.b16 %v2956, %v2955
        %v2970 = vpack.c.b16 %v2958, %v2957
        %v2984 = vsel %vm1199, %v2792, 0
        %v2987 = vsel %vm1199, %v2795, 0
        %v2990 = vsel %vm1199, %v2798, 0
        %v2993 = vsel %vm1199, %v2801, 0
        %v2996 = vsel %vm1199, %v2804, 0
        %v2999 = vsel %vm1199, %v2807, 0
        %v3002 = vsel %vm1199, %v2810, 0
        %v3005 = vsel %vm1199, %v2813, 0
        %v3008 = vsel %vm1199, %v2816, 0
        %v3011 = vsel %vm1199, %v2819, 0
        %v3014 = vsel %vm1199, %v2822, 0
        %v3017 = vsel %vm1199, %v2825, 0
        %v3020 = vsel %vm1199, %v2828, 0
        %v3023 = vsel %vm1199, %v2831, 0
        %v3026 = vsel %vm1199, %v2834, 0
        %v3029 = vsel %vm1199, %v2837, 0
        %3031 = vmatpush.bf16.msra.mxu0 %v2966
        %3032 = vmatpush.bf16.msra.mxu0 %v2965
        %3033 = vmatpush.bf16.msra.mxu0 %v2964
        %3034 = vmatpush.bf16.msra.mxu0 %v2963
        %3035 = vmatpush.bf16.msra.mxu0 %v2962
        %3036 = vmatpush.bf16.msra.mxu0 %v2961
        %3037 = vmatpush.bf16.msra.mxu0 %v2960
        %3038 = vmatpush.bf16.msra.mxu0 %v2959
        %3039 = vmatmul.bf16.gmra.mxu0 %v2839
        %v3040 = vpop.f32.mrf.mxu0
        %v3041 = vadd.f32 0.0, %v3040
        %v3042 = vpop.f32.mrf.mxu0
        %v3043 = vadd.f32 0.0, %v3042
        %3044 = vmatmul.bf16.gmra.mxu0 %v2842
        %v3045 = vpop.f32.mrf.mxu0
        %v3046 = vadd.f32 0.0, %v3045
        %v3047 = vpop.f32.mrf.mxu0
        %v3048 = vadd.f32 0.0, %v3047
        %3049 = vmatmul.bf16.gmra.mxu0 %v2845
        %v3050 = vpop.f32.mrf.mxu0
        %v3051 = vadd.f32 0.0, %v3050
        %v3052 = vpop.f32.mrf.mxu0
        %v3053 = vadd.f32 0.0, %v3052
        %3054 = vmatmul.bf16.gmra.mxu0 %v2848
        %v3055 = vpop.f32.mrf.mxu0
        %v3056 = vadd.f32 0.0, %v3055
        %v3057 = vpop.f32.mrf.mxu0
        %v3058 = vadd.f32 0.0, %v3057
        %3059 = vmatmul.bf16.gmra.mxu0 %v2851
        %v3060 = vpop.f32.mrf.mxu0
        %v3061 = vadd.f32 0.0, %v3060
        %v3062 = vpop.f32.mrf.mxu0
        %v3063 = vadd.f32 0.0, %v3062
        %3064 = vmatmul.bf16.gmra.mxu0 %v2854
        %v3065 = vpop.f32.mrf.mxu0
        %v3066 = vadd.f32 0.0, %v3065
        %v3067 = vpop.f32.mrf.mxu0
        %v3068 = vadd.f32 0.0, %v3067
        %3069 = vmatmul.bf16.gmra.mxu0 %v2857
        %v3070 = vpop.f32.mrf.mxu0
        %v3071 = vadd.f32 0.0, %v3070
        %v3072 = vpop.f32.mrf.mxu0
        %v3073 = vadd.f32 0.0, %v3072
        %3074 = vmatmul.bf16.gmra.mxu0 %v2860
        %v3075 = vpop.f32.mrf.mxu0
        %v3076 = vadd.f32 0.0, %v3075
        %v3077 = vpop.f32.mrf.mxu0
        %v3078 = vadd.f32 0.0, %v3077
        %3079 = vmatmul.bf16.gmra.mxu0 %v2863
        %v3080 = vpop.f32.mrf.mxu0
        %v3081 = vadd.f32 0.0, %v3080
        %v3082 = vpop.f32.mrf.mxu0
        %v3083 = vadd.f32 0.0, %v3082
        %3084 = vmatmul.bf16.gmra.mxu0 %v2866
        %v3085 = vpop.f32.mrf.mxu0
        %v3086 = vadd.f32 0.0, %v3085
        %v3087 = vpop.f32.mrf.mxu0
        %v3088 = vadd.f32 0.0, %v3087
        %3089 = vmatmul.bf16.gmra.mxu0 %v2869
        %v3090 = vpop.f32.mrf.mxu0
        %v3091 = vadd.f32 0.0, %v3090
        %v3092 = vpop.f32.mrf.mxu0
        %v3093 = vadd.f32 0.0, %v3092
        %3094 = vmatmul.bf16.gmra.mxu0 %v2872
        %v3095 = vpop.f32.mrf.mxu0
        %v3096 = vadd.f32 0.0, %v3095
        %v3097 = vpop.f32.mrf.mxu0
        %v3098 = vadd.f32 0.0, %v3097
        %3099 = vmatmul.bf16.gmra.mxu0 %v2875
        %v3100 = vpop.f32.mrf.mxu0
        %v3101 = vadd.f32 0.0, %v3100
        %v3102 = vpop.f32.mrf.mxu0
        %v3103 = vadd.f32 0.0, %v3102
        %3104 = vmatmul.bf16.gmra.mxu0 %v2878
        %v3105 = vpop.f32.mrf.mxu0
        %v3106 = vadd.f32 0.0, %v3105
        %v3107 = vpop.f32.mrf.mxu0
        %v3108 = vadd.f32 0.0, %v3107
        %3109 = vmatmul.bf16.gmra.mxu0 %v2881
        %v3110 = vpop.f32.mrf.mxu0
        %v3111 = vadd.f32 0.0, %v3110
        %v3112 = vpop.f32.mrf.mxu0
        %v3113 = vadd.f32 0.0, %v3112
        %3114 = vmatmul.bf16.gmra.mxu0 %v2884
        %v3115 = vpop.f32.mrf.mxu0
        %v3116 = vadd.f32 0.0, %v3115
        %v3117 = vpop.f32.mrf.mxu0
        %v3118 = vadd.f32 0.0, %v3117
        %3119 = vdwg.mxu0
        %3120 = vmatpush.bf16.msra.mxu0 0
        %3121 = vmatpush.bf16.msra.mxu0 0
        %3122 = vmatpush.bf16.msra.mxu0 0
        %3123 = vmatpush.bf16.msra.mxu0 0
        %3124 = vmatpush.bf16.msra.mxu0 %v2970
        %3125 = vmatpush.bf16.msra.mxu0 %v2969
        %3126 = vmatpush.bf16.msra.mxu0 %v2968
        %3127 = vmatpush.bf16.msra.mxu0 %v2967
        %3128 = vmatmul.bf16.gmra.mxu0 %v2984
        %v3129 = vpop.f32.mrf.mxu0
        %v3130 = vadd.f32 %v3041, %v3129
        %v3131 = vpop.f32.mrf.mxu0
        %v3132 = vadd.f32 %v3043, %v3131
        %3133 = vmatmul.bf16.gmra.mxu0 %v2987
        %v3134 = vpop.f32.mrf.mxu0
        %v3135 = vadd.f32 %v3046, %v3134
        %v3136 = vpop.f32.mrf.mxu0
        %v3137 = vadd.f32 %v3048, %v3136
        %3138 = vmatmul.bf16.gmra.mxu0 %v2990
        %v3139 = vpop.f32.mrf.mxu0
        %v3140 = vadd.f32 %v3051, %v3139
        %v3141 = vpop.f32.mrf.mxu0
        %v3142 = vadd.f32 %v3053, %v3141
        %3143 = vmatmul.bf16.gmra.mxu0 %v2993
        %v3144 = vpop.f32.mrf.mxu0
        %v3145 = vadd.f32 %v3056, %v3144
        %v3146 = vpop.f32.mrf.mxu0
        %v3147 = vadd.f32 %v3058, %v3146
        %3148 = vmatmul.bf16.gmra.mxu0 %v2996
        %v3149 = vpop.f32.mrf.mxu0
        %v3150 = vadd.f32 %v3061, %v3149
        %v3151 = vpop.f32.mrf.mxu0
        %v3152 = vadd.f32 %v3063, %v3151
        %3153 = vmatmul.bf16.gmra.mxu0 %v2999
        %v3154 = vpop.f32.mrf.mxu0
        %v3155 = vadd.f32 %v3066, %v3154
        %v3156 = vpop.f32.mrf.mxu0
        %v3157 = vadd.f32 %v3068, %v3156
        %3158 = vmatmul.bf16.gmra.mxu0 %v3002
        %v3159 = vpop.f32.mrf.mxu0
        %v3160 = vadd.f32 %v3071, %v3159
        %v3161 = vpop.f32.mrf.mxu0
        %v3162 = vadd.f32 %v3073, %v3161
        %3163 = vmatmul.bf16.gmra.mxu0 %v3005
        %v3164 = vpop.f32.mrf.mxu0
        %v3165 = vadd.f32 %v3076, %v3164
        %v3166 = vpop.f32.mrf.mxu0
        %v3167 = vadd.f32 %v3078, %v3166
        %3168 = vmatmul.bf16.gmra.mxu0 %v3008
        %v3169 = vpop.f32.mrf.mxu0
        %v3170 = vadd.f32 %v3081, %v3169
        %v3171 = vpop.f32.mrf.mxu0
        %v3172 = vadd.f32 %v3083, %v3171
        %3173 = vmatmul.bf16.gmra.mxu0 %v3011
        %v3174 = vpop.f32.mrf.mxu0
        %v3175 = vadd.f32 %v3086, %v3174
        %v3176 = vpop.f32.mrf.mxu0
        %v3177 = vadd.f32 %v3088, %v3176
        %3178 = vmatmul.bf16.gmra.mxu0 %v3014
        %v3179 = vpop.f32.mrf.mxu0
        %v3180 = vadd.f32 %v3091, %v3179
        %v3181 = vpop.f32.mrf.mxu0
        %v3182 = vadd.f32 %v3093, %v3181
        %3183 = vmatmul.bf16.gmra.mxu0 %v3017
        %v3184 = vpop.f32.mrf.mxu0
        %v3185 = vadd.f32 %v3096, %v3184
        %v3186 = vpop.f32.mrf.mxu0
        %v3187 = vadd.f32 %v3098, %v3186
        %3188 = vmatmul.bf16.gmra.mxu0 %v3020
        %v3189 = vpop.f32.mrf.mxu0
        %v3190 = vadd.f32 %v3101, %v3189
        %v3191 = vpop.f32.mrf.mxu0
        %v3192 = vadd.f32 %v3103, %v3191
        %3193 = vmatmul.bf16.gmra.mxu0 %v3023
        %v3194 = vpop.f32.mrf.mxu0
        %v3195 = vadd.f32 %v3106, %v3194
        %v3196 = vpop.f32.mrf.mxu0
        %v3197 = vadd.f32 %v3108, %v3196
        %3198 = vmatmul.bf16.gmra.mxu0 %v3026
        %v3199 = vpop.f32.mrf.mxu0
        %v3200 = vadd.f32 %v3111, %v3199
        %v3201 = vpop.f32.mrf.mxu0
        %v3202 = vadd.f32 %v3113, %v3201
        %3203 = vmatmul.bf16.gmra.mxu0 %v3029
        %v3204 = vpop.f32.mrf.mxu0
        %v3205 = vadd.f32 %v3116, %v3204
        %v3206 = vpop.f32.mrf.mxu0
        %v3207 = vadd.f32 %v3118, %v3206
        %3208 = vdwg.mxu0
        %v3209 = vadd.f32 %v2310, %v3130
        %v3210 = vadd.f32 %v2312, %v3132
        %v3211 = vadd.f32 %v2315, %v3135
        %v3212 = vadd.f32 %v2317, %v3137
        %v3213 = vadd.f32 %v2320, %v3140
        %v3214 = vadd.f32 %v2322, %v3142
        %v3215 = vadd.f32 %v2325, %v3145
        %v3216 = vadd.f32 %v2327, %v3147
        %v3217 = vadd.f32 %v2330, %v3150
        %v3218 = vadd.f32 %v2332, %v3152
        %v3219 = vadd.f32 %v2335, %v3155
        %v3220 = vadd.f32 %v2337, %v3157
        %v3221 = vadd.f32 %v2340, %v3160
        %v3222 = vadd.f32 %v2342, %v3162
        %v3223 = vadd.f32 %v2345, %v3165
        %v3224 = vadd.f32 %v2347, %v3167
        %v3225 = vadd.f32 %v2350, %v3170
        %v3226 = vadd.f32 %v2352, %v3172
        %v3227 = vadd.f32 %v2355, %v3175
        %v3228 = vadd.f32 %v2357, %v3177
        %v3229 = vadd.f32 %v2360, %v3180
        %v3230 = vadd.f32 %v2362, %v3182
        %v3231 = vadd.f32 %v2365, %v3185
        %v3232 = vadd.f32 %v2367, %v3187
        %v3233 = vadd.f32 %v2370, %v3190
        %v3234 = vadd.f32 %v2372, %v3192
        %v3235 = vadd.f32 %v2375, %v3195
        %v3236 = vadd.f32 %v2377, %v3197
        %v3237 = vadd.f32 %v2380, %v3200
        %v3238 = vadd.f32 %v2382, %v3202
        %v3239 = vadd.f32 %v2385, %v3205
        %v3240 = vadd.f32 %v2387, %v3207
        %v3241 = vld [vmem:[%s3] sm:$0x1]
        %v3243 = vperm.slane %v3241, 0
        %v3245 = vadd.f32 %v3209, %v3243
        %v3246 = vadd.f32 %v3210, %v3243
        %v3247 = vadd.f32 %v3211, %v3243
        %v3248 = vadd.f32 %v3212, %v3243
        %v3249 = vadd.f32 %v3213, %v3243
        %v3250 = vadd.f32 %v3214, %v3243
        %v3251 = vadd.f32 %v3215, %v3243
        %v3252 = vadd.f32 %v3216, %v3243
        %v3253 = vadd.f32 %v3217, %v3243
        %v3254 = vadd.f32 %v3218, %v3243
        %v3255 = vadd.f32 %v3219, %v3243
        %v3256 = vadd.f32 %v3220, %v3243
        %v3257 = vadd.f32 %v3221, %v3243
        %v3258 = vadd.f32 %v3222, %v3243
        %v3259 = vadd.f32 %v3223, %v3243
        %v3260 = vadd.f32 %v3224, %v3243
        %v3261 = vadd.f32 %v3225, %v3243
        %v3262 = vadd.f32 %v3226, %v3243
        %v3263 = vadd.f32 %v3227, %v3243
        %v3264 = vadd.f32 %v3228, %v3243
        %v3265 = vadd.f32 %v3229, %v3243
        %v3266 = vadd.f32 %v3230, %v3243
        %v3267 = vadd.f32 %v3231, %v3243
        %v3268 = vadd.f32 %v3232, %v3243
        %v3269 = vadd.f32 %v3233, %v3243
        %v3270 = vadd.f32 %v3234, %v3243
        %v3271 = vadd.f32 %v3235, %v3243
        %v3272 = vadd.f32 %v3236, %v3243
        %v3273 = vadd.f32 %v3237, %v3243
        %v3274 = vadd.f32 %v3238, %v3243
        %v3275 = vadd.f32 %v3239, %v3243
        %v3276 = vadd.f32 %v3240, %v3243
        %v3277 = vmax.f32 %v3245, 0.0
        %v3278 = vmax.f32 %v3246, 0.0
        %v3279 = vmax.f32 %v3247, 0.0
        %v3280 = vmax.f32 %v3248, 0.0
        %v3281 = vmax.f32 %v3249, 0.0
        %v3282 = vmax.f32 %v3250, 0.0
        %v3283 = vmax.f32 %v3251, 0.0
        %v3284 = vmax.f32 %v3252, 0.0
        %v3285 = vmax.f32 %v3253, 0.0
        %v3286 = vmax.f32 %v3254, 0.0
        %v3287 = vmax.f32 %v3255, 0.0
        %v3288 = vmax.f32 %v3256, 0.0
        %v3289 = vmax.f32 %v3257, 0.0
        %v3290 = vmax.f32 %v3258, 0.0
        %v3291 = vmax.f32 %v3259, 0.0
        %v3292 = vmax.f32 %v3260, 0.0
        %v3293 = vmax.f32 %v3261, 0.0
        %v3294 = vmax.f32 %v3262, 0.0
        %v3295 = vmax.f32 %v3263, 0.0
        %v3296 = vmax.f32 %v3264, 0.0
        %v3297 = vmax.f32 %v3265, 0.0
        %v3298 = vmax.f32 %v3266, 0.0
        %v3299 = vmax.f32 %v3267, 0.0
        %v3300 = vmax.f32 %v3268, 0.0
        %v3301 = vmax.f32 %v3269, 0.0
        %v3302 = vmax.f32 %v3270, 0.0
        %v3303 = vmax.f32 %v3271, 0.0
        %v3304 = vmax.f32 %v3272, 0.0
        %v3305 = vmax.f32 %v3273, 0.0
        %v3306 = vmax.f32 %v3274, 0.0
        %v3307 = vmax.f32 %v3275, 0.0
        %v3308 = vmax.f32 %v3276, 0.0
        %v3309 = vpack.c.bf16 %v3277, %v3277
        %v3310 = vpack.c.bf16 %v3278, %v3278
        %v3311 = vpack.c.bf16 %v3279, %v3279
        %v3312 = vpack.c.bf16 %v3280, %v3280
        %v3313 = vpack.c.bf16 %v3281, %v3281
        %v3314 = vpack.c.bf16 %v3282, %v3282
        %v3315 = vpack.c.bf16 %v3283, %v3283
        %v3316 = vpack.c.bf16 %v3284, %v3284
        %v3317 = vpack.c.bf16 %v3285, %v3285
        %v3318 = vpack.c.bf16 %v3286, %v3286
        %v3319 = vpack.c.bf16 %v3287, %v3287
        %v3320 = vpack.c.bf16 %v3288, %v3288
        %v3321 = vpack.c.bf16 %v3289, %v3289
        %v3322 = vpack.c.bf16 %v3290, %v3290
        %v3323 = vpack.c.bf16 %v3291, %v3291
        %v3324 = vpack.c.bf16 %v3292, %v3292
        %v3325 = vpack.c.bf16 %v3293, %v3293
        %v3326 = vpack.c.bf16 %v3294, %v3294
        %v3327 = vpack.c.bf16 %v3295, %v3295
        %v3328 = vpack.c.bf16 %v3296, %v3296
        %v3329 = vpack.c.bf16 %v3297, %v3297
        %v3330 = vpack.c.bf16 %v3298, %v3298
        %v3331 = vpack.c.bf16 %v3299, %v3299
        %v3332 = vpack.c.bf16 %v3300, %v3300
        %v3333 = vpack.c.bf16 %v3301, %v3301
        %v3334 = vpack.c.bf16 %v3302, %v3302
        %v3335 = vpack.c.bf16 %v3303, %v3303
        %v3336 = vpack.c.bf16 %v3304, %v3304
        %v3337 = vpack.c.bf16 %v3305, %v3305
        %v3338 = vpack.c.bf16 %v3306, %v3306
        %v3339 = vpack.c.bf16 %v3307, %v3307
        %v3340 = vpack.c.bf16 %v3308, %v3308
        %v3373 = vunpack.c.l.b16 %v3309
        %v3374 = vunpack.c.l.b16 %v3310
        %v3375 = vunpack.c.l.b16 %v3311
        %v3376 = vunpack.c.l.b16 %v3312
        %v3377 = vunpack.c.l.b16 %v3313
        %v3378 = vunpack.c.l.b16 %v3314
        %v3379 = vunpack.c.l.b16 %v3315
        %v3380 = vunpack.c.l.b16 %v3316
        %v3381 = vunpack.c.l.b16 %v3317
        %v3382 = vunpack.c.l.b16 %v3318
        %v3383 = vunpack.c.l.b16 %v3319
        %v3384 = vunpack.c.l.b16 %v3320
        %v3385 = vunpack.c.l.b16 %v3321
        %v3386 = vunpack.c.l.b16 %v3322
        %v3387 = vunpack.c.l.b16 %v3323
        %v3388 = vunpack.c.l.b16 %v3324
        %v3389 = vunpack.c.l.b16 %v3325
        %v3390 = vunpack.c.l.b16 %v3326
        %v3391 = vunpack.c.l.b16 %v3327
        %v3392 = vunpack.c.l.b16 %v3328
        %v3393 = vunpack.c.l.b16 %v3329
        %v3394 = vunpack.c.l.b16 %v3330
        %v3395 = vunpack.c.l.b16 %v3331
        %v3396 = vunpack.c.l.b16 %v3332
        %v3397 = vunpack.c.l.b16 %v3333
        %v3398 = vunpack.c.l.b16 %v3334
        %v3399 = vunpack.c.l.b16 %v3335
        %v3400 = vunpack.c.l.b16 %v3336
        %v3401 = vunpack.c.l.b16 %v3337
        %v3402 = vunpack.c.l.b16 %v3338
        %v3403 = vunpack.c.l.b16 %v3339
        %v3404 = vunpack.c.l.b16 %v3340
        %v3405 = vpack.c.b16 %v3374, %v3373
        %v3406 = vpack.c.b16 %v3376, %v3375
        %v3407 = vpack.c.b16 %v3378, %v3377
        %v3408 = vpack.c.b16 %v3380, %v3379
        %v3409 = vpack.c.b16 %v3382, %v3381
        %v3410 = vpack.c.b16 %v3384, %v3383
        %v3411 = vpack.c.b16 %v3386, %v3385
        %v3412 = vpack.c.b16 %v3388, %v3387
        %v3413 = vpack.c.b16 %v3390, %v3389
        %v3414 = vpack.c.b16 %v3392, %v3391
        %v3415 = vpack.c.b16 %v3394, %v3393
        %v3416 = vpack.c.b16 %v3396, %v3395
        %v3417 = vpack.c.b16 %v3398, %v3397
        %v3418 = vpack.c.b16 %v3400, %v3399
        %v3419 = vpack.c.b16 %v3402, %v3401
        %v3420 = vpack.c.b16 %v3404, %v3403
        %v3422 = vshrl.u32 %v3405, 16
        %v3424 = vrot.slane %v3422, 7
        %v3425 = vshll.u32 %v3405, 16
        %v3427 = vor.u32 %v3424, %v3425
        %v3429 = vshrl.u32 %v3406, 16
        %v3431 = vrot.slane %v3429, 7
        %v3432 = vshll.u32 %v3406, 16
        %v3434 = vor.u32 %v3431, %v3432
        %v3436 = vshrl.u32 %v3407, 16
        %v3438 = vrot.slane %v3436, 7
        %v3439 = vshll.u32 %v3407, 16
        %v3441 = vor.u32 %v3438, %v3439
        %v3443 = vshrl.u32 %v3408, 16
        %v3445 = vrot.slane %v3443, 7
        %v3446 = vshll.u32 %v3408, 16
        %v3448 = vor.u32 %v3445, %v3446
        %v3450 = vshrl.u32 %v3409, 16
        %v3452 = vrot.slane %v3450, 7
        %v3453 = vshll.u32 %v3409, 16
        %v3455 = vor.u32 %v3452, %v3453
        %v3457 = vshrl.u32 %v3410, 16
        %v3459 = vrot.slane %v3457, 7
        %v3460 = vshll.u32 %v3410, 16
        %v3462 = vor.u32 %v3459, %v3460
        %v3464 = vshrl.u32 %v3411, 16
        %v3466 = vrot.slane %v3464, 7
        %v3467 = vshll.u32 %v3411, 16
        %v3469 = vor.u32 %v3466, %v3467
        %v3471 = vshrl.u32 %v3412, 16
        %v3473 = vrot.slane %v3471, 7
        %v3474 = vshll.u32 %v3412, 16
        %v3476 = vor.u32 %v3473, %v3474
        %v3478 = vshrl.u32 %v3413, 16
        %v3480 = vrot.slane %v3478, 7
        %v3481 = vshll.u32 %v3413, 16
        %v3483 = vor.u32 %v3480, %v3481
        %v3485 = vshrl.u32 %v3414, 16
        %v3487 = vrot.slane %v3485, 7
        %v3488 = vshll.u32 %v3414, 16
        %v3490 = vor.u32 %v3487, %v3488
        %v3492 = vshrl.u32 %v3415, 16
        %v3494 = vrot.slane %v3492, 7
        %v3495 = vshll.u32 %v3415, 16
        %v3497 = vor.u32 %v3494, %v3495
        %v3499 = vshrl.u32 %v3416, 16
        %v3501 = vrot.slane %v3499, 7
        %v3502 = vshll.u32 %v3416, 16
        %v3504 = vor.u32 %v3501, %v3502
        %v3506 = vshrl.u32 %v3417, 16
        %v3508 = vrot.slane %v3506, 7
        %v3509 = vshll.u32 %v3417, 16
        %v3511 = vor.u32 %v3508, %v3509
        %v3513 = vshrl.u32 %v3418, 16
        %v3515 = vrot.slane %v3513, 7
        %v3516 = vshll.u32 %v3418, 16
        %v3518 = vor.u32 %v3515, %v3516
        %v3520 = vshrl.u32 %v3419, 16
        %v3522 = vrot.slane %v3520, 7
        %v3523 = vshll.u32 %v3419, 16
        %v3525 = vor.u32 %v3522, %v3523
        %v3527 = vshrl.u32 %v3420, 16
        %v3529 = vrot.slane %v3527, 7
        %v3530 = vshll.u32 %v3420, 16
        %v3532 = vor.u32 %v3529, %v3530
        %v3565 = vsel %vm482, 0, %v3427
        %v3566 = vsel %vm482, 0, %v3434
        %v3567 = vsel %vm482, 0, %v3441
        %v3568 = vsel %vm482, 0, %v3448
        %v3569 = vsel %vm482, 0, %v3455
        %v3570 = vsel %vm482, 0, %v3462
        %v3571 = vsel %vm482, 0, %v3469
        %v3572 = vsel %vm482, 0, %v3476
        %v3573 = vsel %vm482, 0, %v3483
        %v3574 = vsel %vm482, 0, %v3490
        %v3575 = vsel %vm482, 0, %v3497
        %v3576 = vsel %vm482, 0, %v3504
        %v3577 = vsel %vm482, 0, %v3511
        %v3578 = vsel %vm482, 0, %v3518
        %v3579 = vsel %vm482, 0, %v3525
        %v3580 = vsel %vm482, 0, %v3532
        %v3581 = vsel %vm482, %v3424, 0
        %v3582 = vsel %vm482, %v3431, 0
        %v3583 = vsel %vm482, %v3438, 0
        %v3584 = vsel %vm482, %v3445, 0
        %v3585 = vsel %vm482, %v3452, 0
        %v3586 = vsel %vm482, %v3459, 0
        %v3587 = vsel %vm482, %v3466, 0
        %v3588 = vsel %vm482, %v3473, 0
        %v3589 = vsel %vm482, %v3480, 0
        %v3590 = vsel %vm482, %v3487, 0
        %v3591 = vsel %vm482, %v3494, 0
        %v3592 = vsel %vm482, %v3501, 0
        %v3593 = vsel %vm482, %v3508, 0
        %v3594 = vsel %vm482, %v3515, 0
        %v3595 = vsel %vm482, %v3522, 0
        %v3596 = vsel %vm482, %v3529, 0
        %v3629 = vunpack.c.l.b16 %v3565
        %v3630 = vunpack.c.h.b16 %v3565
        %v3631 = vunpack.c.l.b16 %v3581
        %v3632 = vunpack.c.l.b16 %v3566
        %v3633 = vunpack.c.h.b16 %v3566
        %v3634 = vunpack.c.l.b16 %v3582
        %v3635 = vunpack.c.l.b16 %v3567
        %v3636 = vunpack.c.h.b16 %v3567
        %v3637 = vunpack.c.l.b16 %v3583
        %v3638 = vunpack.c.l.b16 %v3568
        %v3639 = vunpack.c.h.b16 %v3568
        %v3640 = vunpack.c.l.b16 %v3584
        %v3641 = vunpack.c.l.b16 %v3569
        %v3642 = vunpack.c.h.b16 %v3569
        %v3643 = vunpack.c.l.b16 %v3585
        %v3644 = vunpack.c.l.b16 %v3570
        %v3645 = vunpack.c.h.b16 %v3570
        %v3646 = vunpack.c.l.b16 %v3586
        %v3647 = vunpack.c.l.b16 %v3571
        %v3648 = vunpack.c.h.b16 %v3571
        %v3649 = vunpack.c.l.b16 %v3587
        %v3650 = vunpack.c.l.b16 %v3572
        %v3651 = vunpack.c.h.b16 %v3572
        %v3652 = vunpack.c.l.b16 %v3588
        %v3653 = vunpack.c.l.b16 %v3573
        %v3654 = vunpack.c.h.b16 %v3573
        %v3655 = vunpack.c.l.b16 %v3589
        %v3656 = vunpack.c.l.b16 %v3574
        %v3657 = vunpack.c.h.b16 %v3574
        %v3658 = vunpack.c.l.b16 %v3590
        %v3659 = vunpack.c.l.b16 %v3575
        %v3660 = vunpack.c.h.b16 %v3575
        %v3661 = vunpack.c.l.b16 %v3591
        %v3662 = vunpack.c.l.b16 %v3576
        %v3663 = vunpack.c.h.b16 %v3576
        %v3664 = vunpack.c.l.b16 %v3592
        %v3665 = vunpack.c.l.b16 %v3577
        %v3666 = vunpack.c.h.b16 %v3577
        %v3667 = vunpack.c.l.b16 %v3593
        %v3668 = vunpack.c.l.b16 %v3578
        %v3669 = vunpack.c.h.b16 %v3578
        %v3670 = vunpack.c.l.b16 %v3594
        %v3671 = vunpack.c.l.b16 %v3579
        %v3672 = vunpack.c.h.b16 %v3579
        %v3673 = vunpack.c.l.b16 %v3595
        %v3674 = vunpack.c.l.b16 %v3580
        %v3675 = vunpack.c.h.b16 %v3580
        %v3676 = vunpack.c.l.b16 %v3596
        %v3677 = vpack.c.b16 %v3629, %v3629
        %v3678 = vpack.c.b16 %v3630, %v3630
        %v3679 = vpack.c.b16 %v3631, %v3631
        %v3680 = vpack.c.b16 %v3632, %v3632
        %v3681 = vpack.c.b16 %v3633, %v3633
        %v3682 = vpack.c.b16 %v3634, %v3634
        %v3683 = vpack.c.b16 %v3635, %v3635
        %v3684 = vpack.c.b16 %v3636, %v3636
        %v3685 = vpack.c.b16 %v3637, %v3637
        %v3686 = vpack.c.b16 %v3638, %v3638
        %v3687 = vpack.c.b16 %v3639, %v3639
        %v3688 = vpack.c.b16 %v3640, %v3640
        %v3689 = vpack.c.b16 %v3641, %v3641
        %v3690 = vpack.c.b16 %v3642, %v3642
        %v3691 = vpack.c.b16 %v3643, %v3643
        %v3692 = vpack.c.b16 %v3644, %v3644
        %v3693 = vpack.c.b16 %v3645, %v3645
        %v3694 = vpack.c.b16 %v3646, %v3646
        %v3695 = vpack.c.b16 %v3647, %v3647
        %v3696 = vpack.c.b16 %v3648, %v3648
        %v3697 = vpack.c.b16 %v3649, %v3649
        %v3698 = vpack.c.b16 %v3650, %v3650
        %v3699 = vpack.c.b16 %v3651, %v3651
        %v3700 = vpack.c.b16 %v3652, %v3652
        %v3701 = vpack.c.b16 %v3653, %v3653
        %v3702 = vpack.c.b16 %v3654, %v3654
        %v3703 = vpack.c.b16 %v3655, %v3655
        %v3704 = vpack.c.b16 %v3656, %v3656
        %v3705 = vpack.c.b16 %v3657, %v3657
        %v3706 = vpack.c.b16 %v3658, %v3658
        %v3707 = vpack.c.b16 %v3659, %v3659
        %v3708 = vpack.c.b16 %v3660, %v3660
        %v3709 = vpack.c.b16 %v3661, %v3661
        %v3710 = vpack.c.b16 %v3662, %v3662
        %v3711 = vpack.c.b16 %v3663, %v3663
        %v3712 = vpack.c.b16 %v3664, %v3664
        %v3713 = vpack.c.b16 %v3665, %v3665
        %v3714 = vpack.c.b16 %v3666, %v3666
        %v3715 = vpack.c.b16 %v3667, %v3667
        %v3716 = vpack.c.b16 %v3668, %v3668
        %v3717 = vpack.c.b16 %v3669, %v3669
        %v3718 = vpack.c.b16 %v3670, %v3670
        %v3719 = vpack.c.b16 %v3671, %v3671
        %v3720 = vpack.c.b16 %v3672, %v3672
        %v3721 = vpack.c.b16 %v3673, %v3673
        %v3722 = vpack.c.b16 %v3674, %v3674
        %v3723 = vpack.c.b16 %v3675, %v3675
        %v3724 = vpack.c.b16 %v3676, %v3676
        %s3773 = scalar_lea.vmem [#allocation3], 12
        %3774 = vst.msk [vmem:[%s3773] sm:$0xf] %vm692, %v3677
        %3775 = vst.msk [vmem:[%s3773 + $0x4] sm:$0xf] %vm692, %v3678
        %3776 = vst.msk [vmem:[%s3773 + $0x8] sm:$0x1] %vm695, %v3679
        %3777 = vst.msk [vmem:[%s3773 + $0xc] sm:$0xf] %vm692, %v3680
        %3778 = vst.msk [vmem:[%s3773 + $0x10] sm:$0xf] %vm692, %v3681
        %3779 = vst.msk [vmem:[%s3773 + $0x14] sm:$0x1] %vm695, %v3682
        %3780 = vst.msk [vmem:[%s3773 + $0x18] sm:$0xf] %vm692, %v3683
        %3781 = vst.msk [vmem:[%s3773 + $0x1c] sm:$0xf] %vm692, %v3684
        %3782 = vst.msk [vmem:[%s3773 + $0x20] sm:$0x1] %vm695, %v3685
        %3783 = vst.msk [vmem:[%s3773 + $0x24] sm:$0xf] %vm692, %v3686
        %3784 = vst.msk [vmem:[%s3773 + $0x28] sm:$0xf] %vm692, %v3687
        %3785 = vst.msk [vmem:[%s3773 + $0x2c] sm:$0x1] %vm695, %v3688
        %3786 = vst.msk [vmem:[%s3773 + $0x30] sm:$0xf] %vm692, %v3689
        %3787 = vst.msk [vmem:[%s3773 + $0x34] sm:$0xf] %vm692, %v3690
        %3788 = vst.msk [vmem:[%s3773 + $0x38] sm:$0x1] %vm695, %v3691
        %3789 = vst.msk [vmem:[%s3773 + $0x3c] sm:$0xf] %vm692, %v3692
        %3790 = vst.msk [vmem:[%s3773 + $0x40] sm:$0xf] %vm692, %v3693
        %3791 = vst.msk [vmem:[%s3773 + $0x44] sm:$0x1] %vm695, %v3694
        %3792 = vst.msk [vmem:[%s3773 + $0x48] sm:$0xf] %vm692, %v3695
        %3793 = vst.msk [vmem:[%s3773 + $0x4c] sm:$0xf] %vm692, %v3696
        %3794 = vst.msk [vmem:[%s3773 + $0x50] sm:$0x1] %vm695, %v3697
        %3795 = vst.msk [vmem:[%s3773 + $0x54] sm:$0xf] %vm692, %v3698
        %3796 = vst.msk [vmem:[%s3773 + $0x58] sm:$0xf] %vm692, %v3699
        %3797 = vst.msk [vmem:[%s3773 + $0x5c] sm:$0x1] %vm695, %v3700
        %3798 = vst.msk [vmem:[%s3773 + $0x60] sm:$0xf] %vm692, %v3701
        %3799 = vst.msk [vmem:[%s3773 + $0x64] sm:$0xf] %vm692, %v3702
        %3800 = vst.msk [vmem:[%s3773 + $0x68] sm:$0x1] %vm695, %v3703
        %3801 = vst.msk [vmem:[%s3773 + $0x6c] sm:$0xf] %vm692, %v3704
        %3802 = vst.msk [vmem:[%s3773 + $0x70] sm:$0xf] %vm692, %v3705
        %3803 = vst.msk [vmem:[%s3773 + $0x74] sm:$0x1] %vm695, %v3706
        %3804 = vst.msk [vmem:[%s3773 + $0x78] sm:$0xf] %vm692, %v3707
        %3805 = vst.msk [vmem:[%s3773 + $0x7c] sm:$0xf] %vm692, %v3708
        %3806 = vst.msk [vmem:[%s3773 + $0x80] sm:$0x1] %vm695, %v3709
        %3807 = vst.msk [vmem:[%s3773 + $0x84] sm:$0xf] %vm692, %v3710
        %3808 = vst.msk [vmem:[%s3773 + $0x88] sm:$0xf] %vm692, %v3711
        %3809 = vst.msk [vmem:[%s3773 + $0x8c] sm:$0x1] %vm695, %v3712
        %3810 = vst.msk [vmem:[%s3773 + $0x90] sm:$0xf] %vm692, %v3713
        %3811 = vst.msk [vmem:[%s3773 + $0x94] sm:$0xf] %vm692, %v3714
        %3812 = vst.msk [vmem:[%s3773 + $0x98] sm:$0x1] %vm695, %v3715
        %3813 = vst.msk [vmem:[%s3773 + $0x9c] sm:$0xf] %vm692, %v3716
        %3814 = vst.msk [vmem:[%s3773 + $0xa0] sm:$0xf] %vm692, %v3717
        %3815 = vst.msk [vmem:[%s3773 + $0xa4] sm:$0x1] %vm695, %v3718
        %3816 = vst.msk [vmem:[%s3773 + $0xa8] sm:$0xf] %vm692, %v3719
        %3817 = vst.msk [vmem:[%s3773 + $0xac] sm:$0xf] %vm692, %v3720
        %3818 = vst.msk [vmem:[%s3773 + $0xb0] sm:$0x1] %vm695, %v3721
        %3819 = vst.msk [vmem:[%s3773 + $0xb4] sm:$0xf] %vm692, %v3722
        %3820 = vst.msk [vmem:[%s3773 + $0xb8] sm:$0xf] %vm692, %v3723
        %3821 = vst.msk [vmem:[%s3773 + $0xbc] sm:$0x1] %vm695, %v3724
        %3822 = vst.msk [vmem:[#allocation3] sm:$0xf] %vm692, 0
        %3823 = vst.msk [vmem:[#allocation3 + $0x4] sm:$0xf] %vm692, 0
        %3824 = vst.msk [vmem:[#allocation3 + $0x8] sm:$0x1] %vm695, 0
        %s3825 = scalar_lea.vmem [#allocation3], 204
        %3826 = vst.msk [vmem:[%s3825] sm:$0xf] %vm692, 0
        %3827 = vst.msk [vmem:[%s3825 + $0x4] sm:$0xf] %vm692, 0
        %3828 = vst.msk [vmem:[%s3825 + $0x8] sm:$0x1] %vm695, 0
        %v3829 = vld [vmem:[#allocation3] sm:$0xf]
        %v3830 = vld [vmem:[#allocation3 + $0x4] sm:$0xf]
        %v3831 = vld [vmem:[#allocation3 + $0x8] sm:$0x1]
        %v3832 = vld [vmem:[#allocation3 + $0xc] sm:$0xf]
        %v3833 = vld [vmem:[#allocation3 + $0x10] sm:$0xf]
        %v3834 = vld [vmem:[#allocation3 + $0x14] sm:$0x1]
        %v3835 = vld [vmem:[#allocation3 + $0x18] sm:$0xf]
        %v3836 = vld [vmem:[#allocation3 + $0x1c] sm:$0xf]
        %v3837 = vld [vmem:[#allocation3 + $0x20] sm:$0x1]
        %v3838 = vld [vmem:[#allocation3 + $0x24] sm:$0xf]
        %v3839 = vld [vmem:[#allocation3 + $0x28] sm:$0xf]
        %v3840 = vld [vmem:[#allocation3 + $0x2c] sm:$0x1]
        %v3841 = vld [vmem:[#allocation3 + $0x30] sm:$0xf]
        %v3842 = vld [vmem:[#allocation3 + $0x34] sm:$0xf]
        %v3843 = vld [vmem:[#allocation3 + $0x38] sm:$0x1]
        %v3844 = vld [vmem:[#allocation3 + $0x3c] sm:$0xf]
        %v3845 = vld [vmem:[#allocation3 + $0x40] sm:$0xf]
        %v3846 = vld [vmem:[#allocation3 + $0x44] sm:$0x1]
        %v3847 = vld [vmem:[#allocation3 + $0x48] sm:$0xf]
        %v3848 = vld [vmem:[#allocation3 + $0x4c] sm:$0xf]
        %v3849 = vld [vmem:[#allocation3 + $0x50] sm:$0x1]
        %v3850 = vld [vmem:[#allocation3 + $0x54] sm:$0xf]
        %v3851 = vld [vmem:[#allocation3 + $0x58] sm:$0xf]
        %v3852 = vld [vmem:[#allocation3 + $0x5c] sm:$0x1]
        %v3853 = vld [vmem:[#allocation3 + $0x60] sm:$0xf]
        %v3854 = vld [vmem:[#allocation3 + $0x64] sm:$0xf]
        %v3855 = vld [vmem:[#allocation3 + $0x68] sm:$0x1]
        %v3856 = vld [vmem:[#allocation3 + $0x6c] sm:$0xf]
        %v3857 = vld [vmem:[#allocation3 + $0x70] sm:$0xf]
        %v3858 = vld [vmem:[#allocation3 + $0x74] sm:$0x1]
        %v3859 = vld [vmem:[#allocation3 + $0x78] sm:$0xf]
        %v3860 = vld [vmem:[#allocation3 + $0x7c] sm:$0xf]
        %v3861 = vld [vmem:[#allocation3 + $0x80] sm:$0x1]
        %v3862 = vld [vmem:[#allocation3 + $0x84] sm:$0xf]
        %v3863 = vld [vmem:[#allocation3 + $0x88] sm:$0xf]
        %v3864 = vld [vmem:[#allocation3 + $0x8c] sm:$0x1]
        %v3865 = vld [vmem:[#allocation3 + $0x90] sm:$0xf]
        %v3866 = vld [vmem:[#allocation3 + $0x94] sm:$0xf]
        %v3867 = vld [vmem:[#allocation3 + $0x98] sm:$0x1]
        %v3868 = vld [vmem:[#allocation3 + $0x9c] sm:$0xf]
        %v3869 = vld [vmem:[#allocation3 + $0xa0] sm:$0xf]
        %v3870 = vld [vmem:[#allocation3 + $0xa4] sm:$0x1]
        %v3871 = vld [vmem:[#allocation3 + $0xa8] sm:$0xf]
        %v3872 = vld [vmem:[#allocation3 + $0xac] sm:$0xf]
        %v3873 = vld [vmem:[#allocation3 + $0xb0] sm:$0x1]
        %v3874 = vld [vmem:[#allocation3 + $0xb4] sm:$0xf]
        %v3875 = vld [vmem:[#allocation3 + $0xb8] sm:$0xf]
        %v3876 = vld [vmem:[#allocation3 + $0xbc] sm:$0x1]
        %v3909 = vunpack.c.l.b16 %v3829
        %v3910 = vunpack.c.l.b16 %v3830
        %v3911 = vunpack.c.l.b16 %v3832
        %v3912 = vunpack.c.l.b16 %v3833
        %v3913 = vunpack.c.l.b16 %v3835
        %v3914 = vunpack.c.l.b16 %v3836
        %v3915 = vunpack.c.l.b16 %v3838
        %v3916 = vunpack.c.l.b16 %v3839
        %v3917 = vunpack.c.l.b16 %v3841
        %v3918 = vunpack.c.l.b16 %v3842
        %v3919 = vunpack.c.l.b16 %v3844
        %v3920 = vunpack.c.l.b16 %v3845
        %v3921 = vunpack.c.l.b16 %v3847
        %v3922 = vunpack.c.l.b16 %v3848
        %v3923 = vunpack.c.l.b16 %v3850
        %v3924 = vunpack.c.l.b16 %v3851
        %v3925 = vunpack.c.l.b16 %v3853
        %v3926 = vunpack.c.l.b16 %v3854
        %v3927 = vunpack.c.l.b16 %v3856
        %v3928 = vunpack.c.l.b16 %v3857
        %v3929 = vunpack.c.l.b16 %v3859
        %v3930 = vunpack.c.l.b16 %v3860
        %v3931 = vunpack.c.l.b16 %v3862
        %v3932 = vunpack.c.l.b16 %v3863
        %v3933 = vunpack.c.l.b16 %v3865
        %v3934 = vunpack.c.l.b16 %v3866
        %v3935 = vunpack.c.l.b16 %v3868
        %v3936 = vunpack.c.l.b16 %v3869
        %v3937 = vunpack.c.l.b16 %v3871
        %v3938 = vunpack.c.l.b16 %v3872
        %v3939 = vunpack.c.l.b16 %v3874
        %v3940 = vunpack.c.l.b16 %v3875
        %v3941 = vpack.c.b16 %v3910, %v3909
        %v3942 = vpack.c.b16 %v3912, %v3911
        %v3943 = vpack.c.b16 %v3914, %v3913
        %v3944 = vpack.c.b16 %v3916, %v3915
        %v3945 = vpack.c.b16 %v3918, %v3917
        %v3946 = vpack.c.b16 %v3920, %v3919
        %v3947 = vpack.c.b16 %v3922, %v3921
        %v3948 = vpack.c.b16 %v3924, %v3923
        %v3949 = vpack.c.b16 %v3926, %v3925
        %v3950 = vpack.c.b16 %v3928, %v3927
        %v3951 = vpack.c.b16 %v3930, %v3929
        %v3952 = vpack.c.b16 %v3932, %v3931
        %v3953 = vpack.c.b16 %v3934, %v3933
        %v3954 = vpack.c.b16 %v3936, %v3935
        %v3955 = vpack.c.b16 %v3938, %v3937
        %v3956 = vpack.c.b16 %v3940, %v3939
        %v3973 = vunpack.c.l.b16 %v3831
        %v3974 = vunpack.c.l.b16 %v3834
        %v3975 = vunpack.c.l.b16 %v3837
        %v3976 = vunpack.c.l.b16 %v3840
        %v3977 = vunpack.c.l.b16 %v3843
        %v3978 = vunpack.c.l.b16 %v3846
        %v3979 = vunpack.c.l.b16 %v3849
        %v3980 = vunpack.c.l.b16 %v3852
        %v3981 = vunpack.c.l.b16 %v3855
        %v3982 = vunpack.c.l.b16 %v3858
        %v3983 = vunpack.c.l.b16 %v3861
        %v3984 = vunpack.c.l.b16 %v3864
        %v3985 = vunpack.c.l.b16 %v3867
        %v3986 = vunpack.c.l.b16 %v3870
        %v3987 = vunpack.c.l.b16 %v3873
        %v3988 = vunpack.c.l.b16 %v3876
        %v3989 = vpack.c.b16 %v3973, %v3973
        %v3990 = vpack.c.b16 %v3974, %v3974
        %v3991 = vpack.c.b16 %v3975, %v3975
        %v3992 = vpack.c.b16 %v3976, %v3976
        %v3993 = vpack.c.b16 %v3977, %v3977
        %v3994 = vpack.c.b16 %v3978, %v3978
        %v3995 = vpack.c.b16 %v3979, %v3979
        %v3996 = vpack.c.b16 %v3980, %v3980
        %v3997 = vpack.c.b16 %v3981, %v3981
        %v3998 = vpack.c.b16 %v3982, %v3982
        %v3999 = vpack.c.b16 %v3983, %v3983
        %v4000 = vpack.c.b16 %v3984, %v3984
        %v4001 = vpack.c.b16 %v3985, %v3985
        %v4002 = vpack.c.b16 %v3986, %v3986
        %v4003 = vpack.c.b16 %v3987, %v3987
        %v4004 = vpack.c.b16 %v3988, %v3988
        %v4006 = vshrl.u32 %v3941, 16
        %v4008 = vshll.u32 %v3941, 16
        %v4010 = vrot.slane %v4008, 1
        %v4011 = vor.u32 %v4006, %v4010
        %v4013 = vshll.u32 %v3989, 16
        %v4015 = vrot.slane %v4013, 1
        %v4016 = vsel %vm925, %v4011, %v4015
        %v4018 = vshrl.u32 %v3942, 16
        %v4020 = vshll.u32 %v3942, 16
        %v4022 = vrot.slane %v4020, 1
        %v4023 = vor.u32 %v4018, %v4022
        %v4025 = vshll.u32 %v3990, 16
        %v4027 = vrot.slane %v4025, 1
        %v4028 = vsel %vm925, %v4023, %v4027
        %v4030 = vshrl.u32 %v3943, 16
        %v4032 = vshll.u32 %v3943, 16
        %v4034 = vrot.slane %v4032, 1
        %v4035 = vor.u32 %v4030, %v4034
        %v4037 = vshll.u32 %v3991, 16
        %v4039 = vrot.slane %v4037, 1
        %v4040 = vsel %vm925, %v4035, %v4039
        %v4042 = vshrl.u32 %v3944, 16
        %v4044 = vshll.u32 %v3944, 16
        %v4046 = vrot.slane %v4044, 1
        %v4047 = vor.u32 %v4042, %v4046
        %v4049 = vshll.u32 %v3992, 16
        %v4051 = vrot.slane %v4049, 1
        %v4052 = vsel %vm925, %v4047, %v4051
        %v4054 = vshrl.u32 %v3945, 16
        %v4056 = vshll.u32 %v3945, 16
        %v4058 = vrot.slane %v4056, 1
        %v4059 = vor.u32 %v4054, %v4058
        %v4061 = vshll.u32 %v3993, 16
        %v4063 = vrot.slane %v4061, 1
        %v4064 = vsel %vm925, %v4059, %v4063
        %v4066 = vshrl.u32 %v3946, 16
        %v4068 = vshll.u32 %v3946, 16
        %v4070 = vrot.slane %v4068, 1
        %v4071 = vor.u32 %v4066, %v4070
        %v4073 = vshll.u32 %v3994, 16
        %v4075 = vrot.slane %v4073, 1
        %v4076 = vsel %vm925, %v4071, %v4075
        %v4078 = vshrl.u32 %v3947, 16
        %v4080 = vshll.u32 %v3947, 16
        %v4082 = vrot.slane %v4080, 1
        %v4083 = vor.u32 %v4078, %v4082
        %v4085 = vshll.u32 %v3995, 16
        %v4087 = vrot.slane %v4085, 1
        %v4088 = vsel %vm925, %v4083, %v4087
        %v4090 = vshrl.u32 %v3948, 16
        %v4092 = vshll.u32 %v3948, 16
        %v4094 = vrot.slane %v4092, 1
        %v4095 = vor.u32 %v4090, %v4094
        %v4097 = vshll.u32 %v3996, 16
        %v4099 = vrot.slane %v4097, 1
        %v4100 = vsel %vm925, %v4095, %v4099
        %v4102 = vshrl.u32 %v3949, 16
        %v4104 = vshll.u32 %v3949, 16
        %v4106 = vrot.slane %v4104, 1
        %v4107 = vor.u32 %v4102, %v4106
        %v4109 = vshll.u32 %v3997, 16
        %v4111 = vrot.slane %v4109, 1
        %v4112 = vsel %vm925, %v4107, %v4111
        %v4114 = vshrl.u32 %v3950, 16
        %v4116 = vshll.u32 %v3950, 16
        %v4118 = vrot.slane %v4116, 1
        %v4119 = vor.u32 %v4114, %v4118
        %v4121 = vshll.u32 %v3998, 16
        %v4123 = vrot.slane %v4121, 1
        %v4124 = vsel %vm925, %v4119, %v4123
        %v4126 = vshrl.u32 %v3951, 16
        %v4128 = vshll.u32 %v3951, 16
        %v4130 = vrot.slane %v4128, 1
        %v4131 = vor.u32 %v4126, %v4130
        %v4133 = vshll.u32 %v3999, 16
        %v4135 = vrot.slane %v4133, 1
        %v4136 = vsel %vm925, %v4131, %v4135
        %v4138 = vshrl.u32 %v3952, 16
        %v4140 = vshll.u32 %v3952, 16
        %v4142 = vrot.slane %v4140, 1
        %v4143 = vor.u32 %v4138, %v4142
        %v4145 = vshll.u32 %v4000, 16
        %v4147 = vrot.slane %v4145, 1
        %v4148 = vsel %vm925, %v4143, %v4147
        %v4150 = vshrl.u32 %v3953, 16
        %v4152 = vshll.u32 %v3953, 16
        %v4154 = vrot.slane %v4152, 1
        %v4155 = vor.u32 %v4150, %v4154
        %v4157 = vshll.u32 %v4001, 16
        %v4159 = vrot.slane %v4157, 1
        %v4160 = vsel %vm925, %v4155, %v4159
        %v4162 = vshrl.u32 %v3954, 16
        %v4164 = vshll.u32 %v3954, 16
        %v4166 = vrot.slane %v4164, 1
        %v4167 = vor.u32 %v4162, %v4166
        %v4169 = vshll.u32 %v4002, 16
        %v4171 = vrot.slane %v4169, 1
        %v4172 = vsel %vm925, %v4167, %v4171
        %v4174 = vshrl.u32 %v3955, 16
        %v4176 = vshll.u32 %v3955, 16
        %v4178 = vrot.slane %v4176, 1
        %v4179 = vor.u32 %v4174, %v4178
        %v4181 = vshll.u32 %v4003, 16
        %v4183 = vrot.slane %v4181, 1
        %v4184 = vsel %vm925, %v4179, %v4183
        %v4186 = vshrl.u32 %v3956, 16
        %v4188 = vshll.u32 %v3956, 16
        %v4190 = vrot.slane %v4188, 1
        %v4191 = vor.u32 %v4186, %v4190
        %v4193 = vshll.u32 %v4004, 16
        %v4195 = vrot.slane %v4193, 1
        %v4196 = vsel %vm925, %v4191, %v4195
        %4197 = vrot.lane.b32.xlu0 %v4016, 64
        %v4198 = vpop.permute.xlu0 %4197
        %4199 = vrot.lane.b32.xlu0 %v4028, 64
        %v4200 = vpop.permute.xlu0 %4199
        %4201 = vrot.lane.b32.xlu0 %v4040, 64
        %v4202 = vpop.permute.xlu0 %4201
        %4203 = vrot.lane.b32.xlu0 %v4052, 64
        %v4204 = vpop.permute.xlu0 %4203
        %4205 = vrot.lane.b32.xlu0 %v4064, 64
        %v4206 = vpop.permute.xlu0 %4205
        %4207 = vrot.lane.b32.xlu0 %v4076, 64
        %v4208 = vpop.permute.xlu0 %4207
        %4209 = vrot.lane.b32.xlu0 %v4088, 64
        %v4210 = vpop.permute.xlu0 %4209
        %4211 = vrot.lane.b32.xlu0 %v4100, 64
        %v4212 = vpop.permute.xlu0 %4211
        %4213 = vrot.lane.b32.xlu0 %v4112, 64
        %v4214 = vpop.permute.xlu0 %4213
        %4215 = vrot.lane.b32.xlu0 %v4124, 64
        %v4216 = vpop.permute.xlu0 %4215
        %4217 = vrot.lane.b32.xlu0 %v4136, 64
        %v4218 = vpop.permute.xlu0 %4217
        %4219 = vrot.lane.b32.xlu0 %v4148, 64
        %v4220 = vpop.permute.xlu0 %4219
        %4221 = vrot.lane.b32.xlu0 %v4160, 64
        %v4222 = vpop.permute.xlu0 %4221
        %4223 = vrot.lane.b32.xlu0 %v4172, 64
        %v4224 = vpop.permute.xlu0 %4223
        %4225 = vrot.lane.b32.xlu0 %v4184, 64
        %v4226 = vpop.permute.xlu0 %4225
        %4227 = vrot.lane.b32.xlu0 %v4196, 64
        %v4228 = vpop.permute.xlu0 %4227
        %v4229 = vrot.slane %v3941, 1
        %v4230 = vrot.slane %v3989, 1
        %v4231 = vsel %vm1150, %v4229, %v4230
        %v4232 = vrot.slane %v3942, 1
        %v4233 = vrot.slane %v3990, 1
        %v4234 = vsel %vm1150, %v4232, %v4233
        %v4235 = vrot.slane %v3943, 1
        %v4236 = vrot.slane %v3991, 1
        %v4237 = vsel %vm1150, %v4235, %v4236
        %v4238 = vrot.slane %v3944, 1
        %v4239 = vrot.slane %v3992, 1
        %v4240 = vsel %vm1150, %v4238, %v4239
        %v4241 = vrot.slane %v3945, 1
        %v4242 = vrot.slane %v3993, 1
        %v4243 = vsel %vm1150, %v4241, %v4242
        %v4244 = vrot.slane %v3946, 1
        %v4245 = vrot.slane %v3994, 1
        %v4246 = vsel %vm1150, %v4244, %v4245
        %v4247 = vrot.slane %v3947, 1
        %v4248 = vrot.slane %v3995, 1
        %v4249 = vsel %vm1150, %v4247, %v4248
        %v4250 = vrot.slane %v3948, 1
        %v4251 = vrot.slane %v3996, 1
        %v4252 = vsel %vm1150, %v4250, %v4251
        %v4253 = vrot.slane %v3949, 1
        %v4254 = vrot.slane %v3997, 1
        %v4255 = vsel %vm1150, %v4253, %v4254
        %v4256 = vrot.slane %v3950, 1
        %v4257 = vrot.slane %v3998, 1
        %v4258 = vsel %vm1150, %v4256, %v4257
        %v4259 = vrot.slane %v3951, 1
        %v4260 = vrot.slane %v3999, 1
        %v4261 = vsel %vm1150, %v4259, %v4260
        %v4262 = vrot.slane %v3952, 1
        %v4263 = vrot.slane %v4000, 1
        %v4264 = vsel %vm1150, %v4262, %v4263
        %v4265 = vrot.slane %v3953, 1
        %v4266 = vrot.slane %v4001, 1
        %v4267 = vsel %vm1150, %v4265, %v4266
        %v4268 = vrot.slane %v3954, 1
        %v4269 = vrot.slane %v4002, 1
        %v4270 = vsel %vm1150, %v4268, %v4269
        %v4271 = vrot.slane %v3955, 1
        %v4272 = vrot.slane %v4003, 1
        %v4273 = vsel %vm1150, %v4271, %v4272
        %v4274 = vrot.slane %v3956, 1
        %v4275 = vrot.slane %v4004, 1
        %v4276 = vsel %vm1150, %v4274, %v4275
        %v4278 = vsel %vm1199, %v3941, %v4198
        %v4281 = vsel %vm1199, %v3942, %v4200
        %v4284 = vsel %vm1199, %v3943, %v4202
        %v4287 = vsel %vm1199, %v3944, %v4204
        %v4290 = vsel %vm1199, %v3945, %v4206
        %v4293 = vsel %vm1199, %v3946, %v4208
        %v4296 = vsel %vm1199, %v3947, %v4210
        %v4299 = vsel %vm1199, %v3948, %v4212
        %v4302 = vsel %vm1199, %v3949, %v4214
        %v4305 = vsel %vm1199, %v3950, %v4216
        %v4308 = vsel %vm1199, %v3951, %v4218
        %v4311 = vsel %vm1199, %v3952, %v4220
        %v4314 = vsel %vm1199, %v3953, %v4222
        %v4317 = vsel %vm1199, %v3954, %v4224
        %v4320 = vsel %vm1199, %v3955, %v4226
        %v4323 = vsel %vm1199, %v3956, %v4228
        %v4325 = vld [vmem:[%s2] sm:$0xf]
        %v4326 = vld [vmem:[%s2 + $0x4] sm:$0xf]
        %v4327 = vld [vmem:[%s2 + $0x8] sm:$0xf]
        %v4328 = vld [vmem:[%s2 + $0xc] sm:$0xf]
        %v4329 = vld [vmem:[%s2 + $0x10] sm:$0xf]
        %v4330 = vld [vmem:[%s2 + $0x14] sm:$0xf]
        %v4331 = vld [vmem:[%s2 + $0x18] sm:$0xf]
        %v4332 = vld [vmem:[%s2 + $0x1c] sm:$0xf]
        %v4333 = vld [vmem:[%s2 + $0x20] sm:$0xf]
        %v4334 = vld [vmem:[%s2 + $0x24] sm:$0xf]
        %v4335 = vld [vmem:[%s2 + $0x28] sm:$0xf]
        %v4336 = vld [vmem:[%s2 + $0x2c] sm:$0xf]
        %v4337 = vld [vmem:[%s2 + $0x30] sm:$0xf]
        %v4338 = vld [vmem:[%s2 + $0x34] sm:$0xf]
        %v4339 = vld [vmem:[%s2 + $0x38] sm:$0xf]
        %v4340 = vld [vmem:[%s2 + $0x3c] sm:$0xf]
        %v4341 = vld [vmem:[%s2 + $0x40] sm:$0xf]
        %v4342 = vld [vmem:[%s2 + $0x44] sm:$0xf]
        %v4343 = vld [vmem:[%s2 + $0x48] sm:$0xf]
        %v4344 = vld [vmem:[%s2 + $0x4c] sm:$0xf]
        %v4345 = vld [vmem:[%s2 + $0x50] sm:$0xf]
        %v4346 = vld [vmem:[%s2 + $0x54] sm:$0xf]
        %v4347 = vld [vmem:[%s2 + $0x58] sm:$0xf]
        %v4348 = vld [vmem:[%s2 + $0x5c] sm:$0xf]
        %v4349 = vld [vmem:[%s3773] sm:$0xf]
        %v4350 = vld [vmem:[%s3773 + $0x4] sm:$0xf]
        %v4351 = vld [vmem:[%s3773 + $0x8] sm:$0x1]
        %v4352 = vld [vmem:[%s3773 + $0xc] sm:$0xf]
        %v4353 = vld [vmem:[%s3773 + $0x10] sm:$0xf]
        %v4354 = vld [vmem:[%s3773 + $0x14] sm:$0x1]
        %v4355 = vld [vmem:[%s3773 + $0x18] sm:$0xf]
        %v4356 = vld [vmem:[%s3773 + $0x1c] sm:$0xf]
        %v4357 = vld [vmem:[%s3773 + $0x20] sm:$0x1]
        %v4358 = vld [vmem:[%s3773 + $0x24] sm:$0xf]
        %v4359 = vld [vmem:[%s3773 + $0x28] sm:$0xf]
        %v4360 = vld [vmem:[%s3773 + $0x2c] sm:$0x1]
        %v4361 = vld [vmem:[%s3773 + $0x30] sm:$0xf]
        %v4362 = vld [vmem:[%s3773 + $0x34] sm:$0xf]
        %v4363 = vld [vmem:[%s3773 + $0x38] sm:$0x1]
        %v4364 = vld [vmem:[%s3773 + $0x3c] sm:$0xf]
        %v4365 = vld [vmem:[%s3773 + $0x40] sm:$0xf]
        %v4366 = vld [vmem:[%s3773 + $0x44] sm:$0x1]
        %v4367 = vld [vmem:[%s3773 + $0x48] sm:$0xf]
        %v4368 = vld [vmem:[%s3773 + $0x4c] sm:$0xf]
        %v4369 = vld [vmem:[%s3773 + $0x50] sm:$0x1]
        %v4370 = vld [vmem:[%s3773 + $0x54] sm:$0xf]
        %v4371 = vld [vmem:[%s3773 + $0x58] sm:$0xf]
        %v4372 = vld [vmem:[%s3773 + $0x5c] sm:$0x1]
        %v4373 = vld [vmem:[%s3773 + $0x60] sm:$0xf]
        %v4374 = vld [vmem:[%s3773 + $0x64] sm:$0xf]
        %v4375 = vld [vmem:[%s3773 + $0x68] sm:$0x1]
        %v4376 = vld [vmem:[%s3773 + $0x6c] sm:$0xf]
        %v4377 = vld [vmem:[%s3773 + $0x70] sm:$0xf]
        %v4378 = vld [vmem:[%s3773 + $0x74] sm:$0x1]
        %v4379 = vld [vmem:[%s3773 + $0x78] sm:$0xf]
        %v4380 = vld [vmem:[%s3773 + $0x7c] sm:$0xf]
        %v4381 = vld [vmem:[%s3773 + $0x80] sm:$0x1]
        %v4382 = vld [vmem:[%s3773 + $0x84] sm:$0xf]
        %v4383 = vld [vmem:[%s3773 + $0x88] sm:$0xf]
        %v4384 = vld [vmem:[%s3773 + $0x8c] sm:$0x1]
        %v4385 = vld [vmem:[%s3773 + $0x90] sm:$0xf]
        %v4386 = vld [vmem:[%s3773 + $0x94] sm:$0xf]
        %v4387 = vld [vmem:[%s3773 + $0x98] sm:$0x1]
        %v4388 = vld [vmem:[%s3773 + $0x9c] sm:$0xf]
        %v4389 = vld [vmem:[%s3773 + $0xa0] sm:$0xf]
        %v4390 = vld [vmem:[%s3773 + $0xa4] sm:$0x1]
        %v4391 = vld [vmem:[%s3773 + $0xa8] sm:$0xf]
        %v4392 = vld [vmem:[%s3773 + $0xac] sm:$0xf]
        %v4393 = vld [vmem:[%s3773 + $0xb0] sm:$0x1]
        %v4394 = vld [vmem:[%s3773 + $0xb4] sm:$0xf]
        %v4395 = vld [vmem:[%s3773 + $0xb8] sm:$0xf]
        %v4396 = vld [vmem:[%s3773 + $0xbc] sm:$0x1]
        %v4429 = vunpack.c.l.b16 %v4349
        %v4430 = vunpack.c.l.b16 %v4350
        %v4431 = vunpack.c.l.b16 %v4352
        %v4432 = vunpack.c.l.b16 %v4353
        %v4433 = vunpack.c.l.b16 %v4355
        %v4434 = vunpack.c.l.b16 %v4356
        %v4435 = vunpack.c.l.b16 %v4358
        %v4436 = vunpack.c.l.b16 %v4359
        %v4437 = vunpack.c.l.b16 %v4361
        %v4438 = vunpack.c.l.b16 %v4362
        %v4439 = vunpack.c.l.b16 %v4364
        %v4440 = vunpack.c.l.b16 %v4365
        %v4441 = vunpack.c.l.b16 %v4367
        %v4442 = vunpack.c.l.b16 %v4368
        %v4443 = vunpack.c.l.b16 %v4370
        %v4444 = vunpack.c.l.b16 %v4371
        %v4445 = vunpack.c.l.b16 %v4373
        %v4446 = vunpack.c.l.b16 %v4374
        %v4447 = vunpack.c.l.b16 %v4376
        %v4448 = vunpack.c.l.b16 %v4377
        %v4449 = vunpack.c.l.b16 %v4379
        %v4450 = vunpack.c.l.b16 %v4380
        %v4451 = vunpack.c.l.b16 %v4382
        %v4452 = vunpack.c.l.b16 %v4383
        %v4453 = vunpack.c.l.b16 %v4385
        %v4454 = vunpack.c.l.b16 %v4386
        %v4455 = vunpack.c.l.b16 %v4388
        %v4456 = vunpack.c.l.b16 %v4389
        %v4457 = vunpack.c.l.b16 %v4391
        %v4458 = vunpack.c.l.b16 %v4392
        %v4459 = vunpack.c.l.b16 %v4394
        %v4460 = vunpack.c.l.b16 %v4395
        %v4461 = vpack.c.b16 %v4430, %v4429
        %v4462 = vpack.c.b16 %v4432, %v4431
        %v4463 = vpack.c.b16 %v4434, %v4433
        %v4464 = vpack.c.b16 %v4436, %v4435
        %v4465 = vpack.c.b16 %v4438, %v4437
        %v4466 = vpack.c.b16 %v4440, %v4439
        %v4467 = vpack.c.b16 %v4442, %v4441
        %v4468 = vpack.c.b16 %v4444, %v4443
        %v4469 = vpack.c.b16 %v4446, %v4445
        %v4470 = vpack.c.b16 %v4448, %v4447
        %v4471 = vpack.c.b16 %v4450, %v4449
        %v4472 = vpack.c.b16 %v4452, %v4451
        %v4473 = vpack.c.b16 %v4454, %v4453
        %v4474 = vpack.c.b16 %v4456, %v4455
        %v4475 = vpack.c.b16 %v4458, %v4457
        %v4476 = vpack.c.b16 %v4460, %v4459
        %v4493 = vunpack.c.l.b16 %v4351
        %v4494 = vunpack.c.l.b16 %v4354
        %v4495 = vunpack.c.l.b16 %v4357
        %v4496 = vunpack.c.l.b16 %v4360
        %v4497 = vunpack.c.l.b16 %v4363
        %v4498 = vunpack.c.l.b16 %v4366
        %v4499 = vunpack.c.l.b16 %v4369
        %v4500 = vunpack.c.l.b16 %v4372
        %v4501 = vunpack.c.l.b16 %v4375
        %v4502 = vunpack.c.l.b16 %v4378
        %v4503 = vunpack.c.l.b16 %v4381
        %v4504 = vunpack.c.l.b16 %v4384
        %v4505 = vunpack.c.l.b16 %v4387
        %v4506 = vunpack.c.l.b16 %v4390
        %v4507 = vunpack.c.l.b16 %v4393
        %v4508 = vunpack.c.l.b16 %v4396
        %v4509 = vpack.c.b16 %v4493, %v4493
        %v4510 = vpack.c.b16 %v4494, %v4494
        %v4511 = vpack.c.b16 %v4495, %v4495
        %v4512 = vpack.c.b16 %v4496, %v4496
        %v4513 = vpack.c.b16 %v4497, %v4497
        %v4514 = vpack.c.b16 %v4498, %v4498
        %v4515 = vpack.c.b16 %v4499, %v4499
        %v4516 = vpack.c.b16 %v4500, %v4500
        %v4517 = vpack.c.b16 %v4501, %v4501
        %v4518 = vpack.c.b16 %v4502, %v4502
        %v4519 = vpack.c.b16 %v4503, %v4503
        %v4520 = vpack.c.b16 %v4504, %v4504
        %v4521 = vpack.c.b16 %v4505, %v4505
        %v4522 = vpack.c.b16 %v4506, %v4506
        %v4523 = vpack.c.b16 %v4507, %v4507
        %v4524 = vpack.c.b16 %v4508, %v4508
        %v4526 = vshrl.u32 %v4461, 16
        %v4528 = vshll.u32 %v4461, 16
        %v4530 = vrot.slane %v4528, 1
        %v4531 = vor.u32 %v4526, %v4530
        %v4533 = vshll.u32 %v4509, 16
        %v4535 = vrot.slane %v4533, 1
        %v4536 = vsel %vm925, %v4531, %v4535
        %v4538 = vshrl.u32 %v4462, 16
        %v4540 = vshll.u32 %v4462, 16
        %v4542 = vrot.slane %v4540, 1
        %v4543 = vor.u32 %v4538, %v4542
        %v4545 = vshll.u32 %v4510, 16
        %v4547 = vrot.slane %v4545, 1
        %v4548 = vsel %vm925, %v4543, %v4547
        %v4550 = vshrl.u32 %v4463, 16
        %v4552 = vshll.u32 %v4463, 16
        %v4554 = vrot.slane %v4552, 1
        %v4555 = vor.u32 %v4550, %v4554
        %v4557 = vshll.u32 %v4511, 16
        %v4559 = vrot.slane %v4557, 1
        %v4560 = vsel %vm925, %v4555, %v4559
        %v4562 = vshrl.u32 %v4464, 16
        %v4564 = vshll.u32 %v4464, 16
        %v4566 = vrot.slane %v4564, 1
        %v4567 = vor.u32 %v4562, %v4566
        %v4569 = vshll.u32 %v4512, 16
        %v4571 = vrot.slane %v4569, 1
        %v4572 = vsel %vm925, %v4567, %v4571
        %v4574 = vshrl.u32 %v4465, 16
        %v4576 = vshll.u32 %v4465, 16
        %v4578 = vrot.slane %v4576, 1
        %v4579 = vor.u32 %v4574, %v4578
        %v4581 = vshll.u32 %v4513, 16
        %v4583 = vrot.slane %v4581, 1
        %v4584 = vsel %vm925, %v4579, %v4583
        %v4586 = vshrl.u32 %v4466, 16
        %v4588 = vshll.u32 %v4466, 16
        %v4590 = vrot.slane %v4588, 1
        %v4591 = vor.u32 %v4586, %v4590
        %v4593 = vshll.u32 %v4514, 16
        %v4595 = vrot.slane %v4593, 1
        %v4596 = vsel %vm925, %v4591, %v4595
        %v4598 = vshrl.u32 %v4467, 16
        %v4600 = vshll.u32 %v4467, 16
        %v4602 = vrot.slane %v4600, 1
        %v4603 = vor.u32 %v4598, %v4602
        %v4605 = vshll.u32 %v4515, 16
        %v4607 = vrot.slane %v4605, 1
        %v4608 = vsel %vm925, %v4603, %v4607
        %v4610 = vshrl.u32 %v4468, 16
        %v4612 = vshll.u32 %v4468, 16
        %v4614 = vrot.slane %v4612, 1
        %v4615 = vor.u32 %v4610, %v4614
        %v4617 = vshll.u32 %v4516, 16
        %v4619 = vrot.slane %v4617, 1
        %v4620 = vsel %vm925, %v4615, %v4619
        %v4622 = vshrl.u32 %v4469, 16
        %v4624 = vshll.u32 %v4469, 16
        %v4626 = vrot.slane %v4624, 1
        %v4627 = vor.u32 %v4622, %v4626
        %v4629 = vshll.u32 %v4517, 16
        %v4631 = vrot.slane %v4629, 1
        %v4632 = vsel %vm925, %v4627, %v4631
        %v4634 = vshrl.u32 %v4470, 16
        %v4636 = vshll.u32 %v4470, 16
        %v4638 = vrot.slane %v4636, 1
        %v4639 = vor.u32 %v4634, %v4638
        %v4641 = vshll.u32 %v4518, 16
        %v4643 = vrot.slane %v4641, 1
        %v4644 = vsel %vm925, %v4639, %v4643
        %v4646 = vshrl.u32 %v4471, 16
        %v4648 = vshll.u32 %v4471, 16
        %v4650 = vrot.slane %v4648, 1
        %v4651 = vor.u32 %v4646, %v4650
        %v4653 = vshll.u32 %v4519, 16
        %v4655 = vrot.slane %v4653, 1
        %v4656 = vsel %vm925, %v4651, %v4655
        %v4658 = vshrl.u32 %v4472, 16
        %v4660 = vshll.u32 %v4472, 16
        %v4662 = vrot.slane %v4660, 1
        %v4663 = vor.u32 %v4658, %v4662
        %v4665 = vshll.u32 %v4520, 16
        %v4667 = vrot.slane %v4665, 1
        %v4668 = vsel %vm925, %v4663, %v4667
        %v4670 = vshrl.u32 %v4473, 16
        %v4672 = vshll.u32 %v4473, 16
        %v4674 = vrot.slane %v4672, 1
        %v4675 = vor.u32 %v4670, %v4674
        %v4677 = vshll.u32 %v4521, 16
        %v4679 = vrot.slane %v4677, 1
        %v4680 = vsel %vm925, %v4675, %v4679
        %v4682 = vshrl.u32 %v4474, 16
        %v4684 = vshll.u32 %v4474, 16
        %v4686 = vrot.slane %v4684, 1
        %v4687 = vor.u32 %v4682, %v4686
        %v4689 = vshll.u32 %v4522, 16
        %v4691 = vrot.slane %v4689, 1
        %v4692 = vsel %vm925, %v4687, %v4691
        %v4694 = vshrl.u32 %v4475, 16
        %v4696 = vshll.u32 %v4475, 16
        %v4698 = vrot.slane %v4696, 1
        %v4699 = vor.u32 %v4694, %v4698
        %v4701 = vshll.u32 %v4523, 16
        %v4703 = vrot.slane %v4701, 1
        %v4704 = vsel %vm925, %v4699, %v4703
        %v4706 = vshrl.u32 %v4476, 16
        %v4708 = vshll.u32 %v4476, 16
        %v4710 = vrot.slane %v4708, 1
        %v4711 = vor.u32 %v4706, %v4710
        %v4713 = vshll.u32 %v4524, 16
        %v4715 = vrot.slane %v4713, 1
        %v4716 = vsel %vm925, %v4711, %v4715
        %4717 = vrot.lane.b32.xlu0 %v4536, 64
        %v4718 = vpop.permute.xlu0 %4717
        %4719 = vrot.lane.b32.xlu0 %v4548, 64
        %v4720 = vpop.permute.xlu0 %4719
        %4721 = vrot.lane.b32.xlu0 %v4560, 64
        %v4722 = vpop.permute.xlu0 %4721
        %4723 = vrot.lane.b32.xlu0 %v4572, 64
        %v4724 = vpop.permute.xlu0 %4723
        %4725 = vrot.lane.b32.xlu0 %v4584, 64
        %v4726 = vpop.permute.xlu0 %4725
        %4727 = vrot.lane.b32.xlu0 %v4596, 64
        %v4728 = vpop.permute.xlu0 %4727
        %4729 = vrot.lane.b32.xlu0 %v4608, 64
        %v4730 = vpop.permute.xlu0 %4729
        %4731 = vrot.lane.b32.xlu0 %v4620, 64
        %v4732 = vpop.permute.xlu0 %4731
        %4733 = vrot.lane.b32.xlu0 %v4632, 64
        %v4734 = vpop.permute.xlu0 %4733
        %4735 = vrot.lane.b32.xlu0 %v4644, 64
        %v4736 = vpop.permute.xlu0 %4735
        %4737 = vrot.lane.b32.xlu0 %v4656, 64
        %v4738 = vpop.permute.xlu0 %4737
        %4739 = vrot.lane.b32.xlu0 %v4668, 64
        %v4740 = vpop.permute.xlu0 %4739
        %4741 = vrot.lane.b32.xlu0 %v4680, 64
        %v4742 = vpop.permute.xlu0 %4741
        %4743 = vrot.lane.b32.xlu0 %v4692, 64
        %v4744 = vpop.permute.xlu0 %4743
        %4745 = vrot.lane.b32.xlu0 %v4704, 64
        %v4746 = vpop.permute.xlu0 %4745
        %4747 = vrot.lane.b32.xlu0 %v4716, 64
        %v4748 = vpop.permute.xlu0 %4747
        %v4749 = vrot.slane %v4461, 1
        %v4750 = vrot.slane %v4509, 1
        %v4751 = vsel %vm1150, %v4749, %v4750
        %v4752 = vrot.slane %v4462, 1
        %v4753 = vrot.slane %v4510, 1
        %v4754 = vsel %vm1150, %v4752, %v4753
        %v4755 = vrot.slane %v4463, 1
        %v4756 = vrot.slane %v4511, 1
        %v4757 = vsel %vm1150, %v4755, %v4756
        %v4758 = vrot.slane %v4464, 1
        %v4759 = vrot.slane %v4512, 1
        %v4760 = vsel %vm1150, %v4758, %v4759
        %v4761 = vrot.slane %v4465, 1
        %v4762 = vrot.slane %v4513, 1
        %v4763 = vsel %vm1150, %v4761, %v4762
        %v4764 = vrot.slane %v4466, 1
        %v4765 = vrot.slane %v4514, 1
        %v4766 = vsel %vm1150, %v4764, %v4765
        %v4767 = vrot.slane %v4467, 1
        %v4768 = vrot.slane %v4515, 1
        %v4769 = vsel %vm1150, %v4767, %v4768
        %v4770 = vrot.slane %v4468, 1
        %v4771 = vrot.slane %v4516, 1
        %v4772 = vsel %vm1150, %v4770, %v4771
        %v4773 = vrot.slane %v4469, 1
        %v4774 = vrot.slane %v4517, 1
        %v4775 = vsel %vm1150, %v4773, %v4774
        %v4776 = vrot.slane %v4470, 1
        %v4777 = vrot.slane %v4518, 1
        %v4778 = vsel %vm1150, %v4776, %v4777
        %v4779 = vrot.slane %v4471, 1
        %v4780 = vrot.slane %v4519, 1
        %v4781 = vsel %vm1150, %v4779, %v4780
        %v4782 = vrot.slane %v4472, 1
        %v4783 = vrot.slane %v4520, 1
        %v4784 = vsel %vm1150, %v4782, %v4783
        %v4785 = vrot.slane %v4473, 1
        %v4786 = vrot.slane %v4521, 1
        %v4787 = vsel %vm1150, %v4785, %v4786
        %v4788 = vrot.slane %v4474, 1
        %v4789 = vrot.slane %v4522, 1
        %v4790 = vsel %vm1150, %v4788, %v4789
        %v4791 = vrot.slane %v4475, 1
        %v4792 = vrot.slane %v4523, 1
        %v4793 = vsel %vm1150, %v4791, %v4792
        %v4794 = vrot.slane %v4476, 1
        %v4795 = vrot.slane %v4524, 1
        %v4796 = vsel %vm1150, %v4794, %v4795
        %v4798 = vsel %vm1199, %v4461, %v4718
        %v4801 = vsel %vm1199, %v4462, %v4720
        %v4804 = vsel %vm1199, %v4463, %v4722
        %v4807 = vsel %vm1199, %v4464, %v4724
        %v4810 = vsel %vm1199, %v4465, %v4726
        %v4813 = vsel %vm1199, %v4466, %v4728
        %v4816 = vsel %vm1199, %v4467, %v4730
        %v4819 = vsel %vm1199, %v4468, %v4732
        %v4822 = vsel %vm1199, %v4469, %v4734
        %v4825 = vsel %vm1199, %v4470, %v4736
        %v4828 = vsel %vm1199, %v4471, %v4738
        %v4831 = vsel %vm1199, %v4472, %v4740
        %v4834 = vsel %vm1199, %v4473, %v4742
        %v4837 = vsel %vm1199, %v4474, %v4744
        %v4840 = vsel %vm1199, %v4475, %v4746
        %v4843 = vsel %vm1199, %v4476, %v4748
        %s4845 = scalar_lea.vmem %s2, 96
        %v4846 = vld [vmem:[%s4845] sm:$0xf]
        %v4847 = vld [vmem:[%s4845 + $0x4] sm:$0xf]
        %v4848 = vld [vmem:[%s4845 + $0x8] sm:$0xf]
        %v4849 = vld [vmem:[%s4845 + $0xc] sm:$0xf]
        %v4850 = vld [vmem:[%s4845 + $0x10] sm:$0xf]
        %v4851 = vld [vmem:[%s4845 + $0x14] sm:$0xf]
        %v4852 = vld [vmem:[%s4845 + $0x18] sm:$0xf]
        %v4853 = vld [vmem:[%s4845 + $0x1c] sm:$0xf]
        %v4854 = vld [vmem:[%s4845 + $0x20] sm:$0xf]
        %v4855 = vld [vmem:[%s4845 + $0x24] sm:$0xf]
        %v4856 = vld [vmem:[%s4845 + $0x28] sm:$0xf]
        %v4857 = vld [vmem:[%s4845 + $0x2c] sm:$0xf]
        %v4858 = vld [vmem:[%s4845 + $0x30] sm:$0xf]
        %v4859 = vld [vmem:[%s4845 + $0x34] sm:$0xf]
        %v4860 = vld [vmem:[%s4845 + $0x38] sm:$0xf]
        %v4861 = vld [vmem:[%s4845 + $0x3c] sm:$0xf]
        %v4862 = vld [vmem:[%s4845 + $0x40] sm:$0xf]
        %v4863 = vld [vmem:[%s4845 + $0x44] sm:$0xf]
        %v4864 = vld [vmem:[%s4845 + $0x48] sm:$0xf]
        %v4865 = vld [vmem:[%s4845 + $0x4c] sm:$0xf]
        %v4866 = vld [vmem:[%s4845 + $0x50] sm:$0xf]
        %v4867 = vld [vmem:[%s4845 + $0x54] sm:$0xf]
        %v4868 = vld [vmem:[%s4845 + $0x58] sm:$0xf]
        %v4869 = vld [vmem:[%s4845 + $0x5c] sm:$0xf]
        %v4894 = vunpack.c.l.b16 %v4846
        %v4895 = vunpack.c.l.b16 %v4847
        %v4896 = vunpack.c.l.b16 %v4848
        %v4897 = vunpack.c.l.b16 %v4849
        %v4898 = vunpack.c.l.b16 %v4850
        %v4899 = vunpack.c.l.b16 %v4851
        %v4900 = vunpack.c.l.b16 %v4852
        %v4901 = vunpack.c.l.b16 %v4853
        %v4902 = vunpack.c.l.b16 %v4854
        %v4903 = vunpack.c.l.b16 %v4855
        %v4904 = vunpack.c.l.b16 %v4856
        %v4905 = vunpack.c.l.b16 %v4857
        %v4906 = vunpack.c.l.b16 %v4858
        %v4907 = vunpack.c.l.b16 %v4859
        %v4908 = vunpack.c.l.b16 %v4860
        %v4909 = vunpack.c.l.b16 %v4861
        %v4910 = vunpack.c.l.b16 %v4862
        %v4911 = vunpack.c.l.b16 %v4863
        %v4912 = vunpack.c.l.b16 %v4864
        %v4913 = vunpack.c.l.b16 %v4865
        %v4914 = vunpack.c.l.b16 %v4866
        %v4915 = vunpack.c.l.b16 %v4867
        %v4916 = vunpack.c.l.b16 %v4868
        %v4917 = vunpack.c.l.b16 %v4869
        %v4918 = vpack.c.b16 %v4895, %v4894
        %v4919 = vpack.c.b16 %v4897, %v4896
        %v4920 = vpack.c.b16 %v4899, %v4898
        %v4921 = vpack.c.b16 %v4901, %v4900
        %v4922 = vpack.c.b16 %v4903, %v4902
        %v4923 = vpack.c.b16 %v4905, %v4904
        %v4924 = vpack.c.b16 %v4907, %v4906
        %v4925 = vpack.c.b16 %v4909, %v4908
        %v4926 = vpack.c.b16 %v4911, %v4910
        %v4927 = vpack.c.b16 %v4913, %v4912
        %v4928 = vpack.c.b16 %v4915, %v4914
        %v4929 = vpack.c.b16 %v4917, %v4916
        %v4943 = vsel %vm1199, %v4751, 0
        %v4946 = vsel %vm1199, %v4754, 0
        %v4949 = vsel %vm1199, %v4757, 0
        %v4952 = vsel %vm1199, %v4760, 0
        %v4955 = vsel %vm1199, %v4763, 0
        %v4958 = vsel %vm1199, %v4766, 0
        %v4961 = vsel %vm1199, %v4769, 0
        %v4964 = vsel %vm1199, %v4772, 0
        %v4967 = vsel %vm1199, %v4775, 0
        %v4970 = vsel %vm1199, %v4778, 0
        %v4973 = vsel %vm1199, %v4781, 0
        %v4976 = vsel %vm1199, %v4784, 0
        %v4979 = vsel %vm1199, %v4787, 0
        %v4982 = vsel %vm1199, %v4790, 0
        %v4985 = vsel %vm1199, %v4793, 0
        %v4988 = vsel %vm1199, %v4796, 0
        %4990 = vmatpush.bf16.msra.mxu0 %v4925
        %4991 = vmatpush.bf16.msra.mxu0 %v4924
        %4992 = vmatpush.bf16.msra.mxu0 %v4923
        %4993 = vmatpush.bf16.msra.mxu0 %v4922
        %4994 = vmatpush.bf16.msra.mxu0 %v4921
        %4995 = vmatpush.bf16.msra.mxu0 %v4920
        %4996 = vmatpush.bf16.msra.mxu0 %v4919
        %4997 = vmatpush.bf16.msra.mxu0 %v4918
        %4998 = vmatmul.bf16.gmra.mxu0 %v4798
        %v4999 = vpop.f32.mrf.mxu0
        %v5000 = vadd.f32 0.0, %v4999
        %v5001 = vpop.f32.mrf.mxu0
        %v5002 = vadd.f32 0.0, %v5001
        %5003 = vmatmul.bf16.gmra.mxu0 %v4801
        %v5004 = vpop.f32.mrf.mxu0
        %v5005 = vadd.f32 0.0, %v5004
        %v5006 = vpop.f32.mrf.mxu0
        %v5007 = vadd.f32 0.0, %v5006
        %5008 = vmatmul.bf16.gmra.mxu0 %v4804
        %v5009 = vpop.f32.mrf.mxu0
        %v5010 = vadd.f32 0.0, %v5009
        %v5011 = vpop.f32.mrf.mxu0
        %v5012 = vadd.f32 0.0, %v5011
        %5013 = vmatmul.bf16.gmra.mxu0 %v4807
        %v5014 = vpop.f32.mrf.mxu0
        %v5015 = vadd.f32 0.0, %v5014
        %v5016 = vpop.f32.mrf.mxu0
        %v5017 = vadd.f32 0.0, %v5016
        %5018 = vmatmul.bf16.gmra.mxu0 %v4810
        %v5019 = vpop.f32.mrf.mxu0
        %v5020 = vadd.f32 0.0, %v5019
        %v5021 = vpop.f32.mrf.mxu0
        %v5022 = vadd.f32 0.0, %v5021
        %5023 = vmatmul.bf16.gmra.mxu0 %v4813
        %v5024 = vpop.f32.mrf.mxu0
        %v5025 = vadd.f32 0.0, %v5024
        %v5026 = vpop.f32.mrf.mxu0
        %v5027 = vadd.f32 0.0, %v5026
        %5028 = vmatmul.bf16.gmra.mxu0 %v4816
        %v5029 = vpop.f32.mrf.mxu0
        %v5030 = vadd.f32 0.0, %v5029
        %v5031 = vpop.f32.mrf.mxu0
        %v5032 = vadd.f32 0.0, %v5031
        %5033 = vmatmul.bf16.gmra.mxu0 %v4819
        %v5034 = vpop.f32.mrf.mxu0
        %v5035 = vadd.f32 0.0, %v5034
        %v5036 = vpop.f32.mrf.mxu0
        %v5037 = vadd.f32 0.0, %v5036
        %5038 = vmatmul.bf16.gmra.mxu0 %v4822
        %v5039 = vpop.f32.mrf.mxu0
        %v5040 = vadd.f32 0.0, %v5039
        %v5041 = vpop.f32.mrf.mxu0
        %v5042 = vadd.f32 0.0, %v5041
        %5043 = vmatmul.bf16.gmra.mxu0 %v4825
        %v5044 = vpop.f32.mrf.mxu0
        %v5045 = vadd.f32 0.0, %v5044
        %v5046 = vpop.f32.mrf.mxu0
        %v5047 = vadd.f32 0.0, %v5046
        %5048 = vmatmul.bf16.gmra.mxu0 %v4828
        %v5049 = vpop.f32.mrf.mxu0
        %v5050 = vadd.f32 0.0, %v5049
        %v5051 = vpop.f32.mrf.mxu0
        %v5052 = vadd.f32 0.0, %v5051
        %5053 = vmatmul.bf16.gmra.mxu0 %v4831
        %v5054 = vpop.f32.mrf.mxu0
        %v5055 = vadd.f32 0.0, %v5054
        %v5056 = vpop.f32.mrf.mxu0
        %v5057 = vadd.f32 0.0, %v5056
        %5058 = vmatmul.bf16.gmra.mxu0 %v4834
        %v5059 = vpop.f32.mrf.mxu0
        %v5060 = vadd.f32 0.0, %v5059
        %v5061 = vpop.f32.mrf.mxu0
        %v5062 = vadd.f32 0.0, %v5061
        %5063 = vmatmul.bf16.gmra.mxu0 %v4837
        %v5064 = vpop.f32.mrf.mxu0
        %v5065 = vadd.f32 0.0, %v5064
        %v5066 = vpop.f32.mrf.mxu0
        %v5067 = vadd.f32 0.0, %v5066
        %5068 = vmatmul.bf16.gmra.mxu0 %v4840
        %v5069 = vpop.f32.mrf.mxu0
        %v5070 = vadd.f32 0.0, %v5069
        %v5071 = vpop.f32.mrf.mxu0
        %v5072 = vadd.f32 0.0, %v5071
        %5073 = vmatmul.bf16.gmra.mxu0 %v4843
        %v5074 = vpop.f32.mrf.mxu0
        %v5075 = vadd.f32 0.0, %v5074
        %v5076 = vpop.f32.mrf.mxu0
        %v5077 = vadd.f32 0.0, %v5076
        %5078 = vdwg.mxu0
        %5079 = vmatpush.bf16.msra.mxu0 0
        %5080 = vmatpush.bf16.msra.mxu0 0
        %5081 = vmatpush.bf16.msra.mxu0 0
        %5082 = vmatpush.bf16.msra.mxu0 0
        %5083 = vmatpush.bf16.msra.mxu0 %v4929
        %5084 = vmatpush.bf16.msra.mxu0 %v4928
        %5085 = vmatpush.bf16.msra.mxu0 %v4927
        %5086 = vmatpush.bf16.msra.mxu0 %v4926
        %5087 = vmatmul.bf16.gmra.mxu0 %v4943
        %v5088 = vpop.f32.mrf.mxu0
        %v5089 = vadd.f32 %v5000, %v5088
        %v5090 = vpop.f32.mrf.mxu0
        %v5091 = vadd.f32 %v5002, %v5090
        %5092 = vmatmul.bf16.gmra.mxu0 %v4946
        %v5093 = vpop.f32.mrf.mxu0
        %v5094 = vadd.f32 %v5005, %v5093
        %v5095 = vpop.f32.mrf.mxu0
        %v5096 = vadd.f32 %v5007, %v5095
        %5097 = vmatmul.bf16.gmra.mxu0 %v4949
        %v5098 = vpop.f32.mrf.mxu0
        %v5099 = vadd.f32 %v5010, %v5098
        %v5100 = vpop.f32.mrf.mxu0
        %v5101 = vadd.f32 %v5012, %v5100
        %5102 = vmatmul.bf16.gmra.mxu0 %v4952
        %v5103 = vpop.f32.mrf.mxu0
        %v5104 = vadd.f32 %v5015, %v5103
        %v5105 = vpop.f32.mrf.mxu0
        %v5106 = vadd.f32 %v5017, %v5105
        %5107 = vmatmul.bf16.gmra.mxu0 %v4955
        %v5108 = vpop.f32.mrf.mxu0
        %v5109 = vadd.f32 %v5020, %v5108
        %v5110 = vpop.f32.mrf.mxu0
        %v5111 = vadd.f32 %v5022, %v5110
        %5112 = vmatmul.bf16.gmra.mxu0 %v4958
        %v5113 = vpop.f32.mrf.mxu0
        %v5114 = vadd.f32 %v5025, %v5113
        %v5115 = vpop.f32.mrf.mxu0
        %v5116 = vadd.f32 %v5027, %v5115
        %5117 = vmatmul.bf16.gmra.mxu0 %v4961
        %v5118 = vpop.f32.mrf.mxu0
        %v5119 = vadd.f32 %v5030, %v5118
        %v5120 = vpop.f32.mrf.mxu0
        %v5121 = vadd.f32 %v5032, %v5120
        %5122 = vmatmul.bf16.gmra.mxu0 %v4964
        %v5123 = vpop.f32.mrf.mxu0
        %v5124 = vadd.f32 %v5035, %v5123
        %v5125 = vpop.f32.mrf.mxu0
        %v5126 = vadd.f32 %v5037, %v5125
        %5127 = vmatmul.bf16.gmra.mxu0 %v4967
        %v5128 = vpop.f32.mrf.mxu0
        %v5129 = vadd.f32 %v5040, %v5128
        %v5130 = vpop.f32.mrf.mxu0
        %v5131 = vadd.f32 %v5042, %v5130
        %5132 = vmatmul.bf16.gmra.mxu0 %v4970
        %v5133 = vpop.f32.mrf.mxu0
        %v5134 = vadd.f32 %v5045, %v5133
        %v5135 = vpop.f32.mrf.mxu0
        %v5136 = vadd.f32 %v5047, %v5135
        %5137 = vmatmul.bf16.gmra.mxu0 %v4973
        %v5138 = vpop.f32.mrf.mxu0
        %v5139 = vadd.f32 %v5050, %v5138
        %v5140 = vpop.f32.mrf.mxu0
        %v5141 = vadd.f32 %v5052, %v5140
        %5142 = vmatmul.bf16.gmra.mxu0 %v4976
        %v5143 = vpop.f32.mrf.mxu0
        %v5144 = vadd.f32 %v5055, %v5143
        %v5145 = vpop.f32.mrf.mxu0
        %v5146 = vadd.f32 %v5057, %v5145
        %5147 = vmatmul.bf16.gmra.mxu0 %v4979
        %v5148 = vpop.f32.mrf.mxu0
        %v5149 = vadd.f32 %v5060, %v5148
        %v5150 = vpop.f32.mrf.mxu0
        %v5151 = vadd.f32 %v5062, %v5150
        %5152 = vmatmul.bf16.gmra.mxu0 %v4982
        %v5153 = vpop.f32.mrf.mxu0
        %v5154 = vadd.f32 %v5065, %v5153
        %v5155 = vpop.f32.mrf.mxu0
        %v5156 = vadd.f32 %v5067, %v5155
        %5157 = vmatmul.bf16.gmra.mxu0 %v4985
        %v5158 = vpop.f32.mrf.mxu0
        %v5159 = vadd.f32 %v5070, %v5158
        %v5160 = vpop.f32.mrf.mxu0
        %v5161 = vadd.f32 %v5072, %v5160
        %5162 = vmatmul.bf16.gmra.mxu0 %v4988
        %v5163 = vpop.f32.mrf.mxu0
        %v5164 = vadd.f32 %v5075, %v5163
        %v5165 = vpop.f32.mrf.mxu0
        %v5166 = vadd.f32 %v5077, %v5165
        %5167 = vdwg.mxu0
        %v5192 = vunpack.c.l.b16 %v4325
        %v5193 = vunpack.c.l.b16 %v4326
        %v5194 = vunpack.c.l.b16 %v4327
        %v5195 = vunpack.c.l.b16 %v4328
        %v5196 = vunpack.c.l.b16 %v4329
        %v5197 = vunpack.c.l.b16 %v4330
        %v5198 = vunpack.c.l.b16 %v4331
        %v5199 = vunpack.c.l.b16 %v4332
        %v5200 = vunpack.c.l.b16 %v4333
        %v5201 = vunpack.c.l.b16 %v4334
        %v5202 = vunpack.c.l.b16 %v4335
        %v5203 = vunpack.c.l.b16 %v4336
        %v5204 = vunpack.c.l.b16 %v4337
        %v5205 = vunpack.c.l.b16 %v4338
        %v5206 = vunpack.c.l.b16 %v4339
        %v5207 = vunpack.c.l.b16 %v4340
        %v5208 = vunpack.c.l.b16 %v4341
        %v5209 = vunpack.c.l.b16 %v4342
        %v5210 = vunpack.c.l.b16 %v4343
        %v5211 = vunpack.c.l.b16 %v4344
        %v5212 = vunpack.c.l.b16 %v4345
        %v5213 = vunpack.c.l.b16 %v4346
        %v5214 = vunpack.c.l.b16 %v4347
        %v5215 = vunpack.c.l.b16 %v4348
        %v5216 = vpack.c.b16 %v5193, %v5192
        %v5217 = vpack.c.b16 %v5195, %v5194
        %v5218 = vpack.c.b16 %v5197, %v5196
        %v5219 = vpack.c.b16 %v5199, %v5198
        %v5220 = vpack.c.b16 %v5201, %v5200
        %v5221 = vpack.c.b16 %v5203, %v5202
        %v5222 = vpack.c.b16 %v5205, %v5204
        %v5223 = vpack.c.b16 %v5207, %v5206
        %v5224 = vpack.c.b16 %v5209, %v5208
        %v5225 = vpack.c.b16 %v5211, %v5210
        %v5226 = vpack.c.b16 %v5213, %v5212
        %v5227 = vpack.c.b16 %v5215, %v5214
        %v5241 = vsel %vm1199, %v4231, 0
        %v5244 = vsel %vm1199, %v4234, 0
        %v5247 = vsel %vm1199, %v4237, 0
        %v5250 = vsel %vm1199, %v4240, 0
        %v5253 = vsel %vm1199, %v4243, 0
        %v5256 = vsel %vm1199, %v4246, 0
        %v5259 = vsel %vm1199, %v4249, 0
        %v5262 = vsel %vm1199, %v4252, 0
        %v5265 = vsel %vm1199, %v4255, 0
        %v5268 = vsel %vm1199, %v4258, 0
        %v5271 = vsel %vm1199, %v4261, 0
        %v5274 = vsel %vm1199, %v4264, 0
        %v5277 = vsel %vm1199, %v4267, 0
        %v5280 = vsel %vm1199, %v4270, 0
        %v5283 = vsel %vm1199, %v4273, 0
        %v5286 = vsel %vm1199, %v4276, 0
        %5288 = vmatpush.bf16.msra.mxu0 %v5223
        %5289 = vmatpush.bf16.msra.mxu0 %v5222
        %5290 = vmatpush.bf16.msra.mxu0 %v5221
        %5291 = vmatpush.bf16.msra.mxu0 %v5220
        %5292 = vmatpush.bf16.msra.mxu0 %v5219
        %5293 = vmatpush.bf16.msra.mxu0 %v5218
        %5294 = vmatpush.bf16.msra.mxu0 %v5217
        %5295 = vmatpush.bf16.msra.mxu0 %v5216
        %5296 = vmatmul.bf16.gmra.mxu0 %v4278
        %v5297 = vpop.f32.mrf.mxu0
        %v5298 = vadd.f32 %v5089, %v5297
        %v5299 = vpop.f32.mrf.mxu0
        %v5300 = vadd.f32 %v5091, %v5299
        %5301 = vmatmul.bf16.gmra.mxu0 %v4281
        %v5302 = vpop.f32.mrf.mxu0
        %v5303 = vadd.f32 %v5094, %v5302
        %v5304 = vpop.f32.mrf.mxu0
        %v5305 = vadd.f32 %v5096, %v5304
        %5306 = vmatmul.bf16.gmra.mxu0 %v4284
        %v5307 = vpop.f32.mrf.mxu0
        %v5308 = vadd.f32 %v5099, %v5307
        %v5309 = vpop.f32.mrf.mxu0
        %v5310 = vadd.f32 %v5101, %v5309
        %5311 = vmatmul.bf16.gmra.mxu0 %v4287
        %v5312 = vpop.f32.mrf.mxu0
        %v5313 = vadd.f32 %v5104, %v5312
        %v5314 = vpop.f32.mrf.mxu0
        %v5315 = vadd.f32 %v5106, %v5314
        %5316 = vmatmul.bf16.gmra.mxu0 %v4290
        %v5317 = vpop.f32.mrf.mxu0
        %v5318 = vadd.f32 %v5109, %v5317
        %v5319 = vpop.f32.mrf.mxu0
        %v5320 = vadd.f32 %v5111, %v5319
        %5321 = vmatmul.bf16.gmra.mxu0 %v4293
        %v5322 = vpop.f32.mrf.mxu0
        %v5323 = vadd.f32 %v5114, %v5322
        %v5324 = vpop.f32.mrf.mxu0
        %v5325 = vadd.f32 %v5116, %v5324
        %5326 = vmatmul.bf16.gmra.mxu0 %v4296
        %v5327 = vpop.f32.mrf.mxu0
        %v5328 = vadd.f32 %v5119, %v5327
        %v5329 = vpop.f32.mrf.mxu0
        %v5330 = vadd.f32 %v5121, %v5329
        %5331 = vmatmul.bf16.gmra.mxu0 %v4299
        %v5332 = vpop.f32.mrf.mxu0
        %v5333 = vadd.f32 %v5124, %v5332
        %v5334 = vpop.f32.mrf.mxu0
        %v5335 = vadd.f32 %v5126, %v5334
        %5336 = vmatmul.bf16.gmra.mxu0 %v4302
        %v5337 = vpop.f32.mrf.mxu0
        %v5338 = vadd.f32 %v5129, %v5337
        %v5339 = vpop.f32.mrf.mxu0
        %v5340 = vadd.f32 %v5131, %v5339
        %5341 = vmatmul.bf16.gmra.mxu0 %v4305
        %v5342 = vpop.f32.mrf.mxu0
        %v5343 = vadd.f32 %v5134, %v5342
        %v5344 = vpop.f32.mrf.mxu0
        %v5345 = vadd.f32 %v5136, %v5344
        %5346 = vmatmul.bf16.gmra.mxu0 %v4308
        %v5347 = vpop.f32.mrf.mxu0
        %v5348 = vadd.f32 %v5139, %v5347
        %v5349 = vpop.f32.mrf.mxu0
        %v5350 = vadd.f32 %v5141, %v5349
        %5351 = vmatmul.bf16.gmra.mxu0 %v4311
        %v5352 = vpop.f32.mrf.mxu0
        %v5353 = vadd.f32 %v5144, %v5352
        %v5354 = vpop.f32.mrf.mxu0
        %v5355 = vadd.f32 %v5146, %v5354
        %5356 = vmatmul.bf16.gmra.mxu0 %v4314
        %v5357 = vpop.f32.mrf.mxu0
        %v5358 = vadd.f32 %v5149, %v5357
        %v5359 = vpop.f32.mrf.mxu0
        %v5360 = vadd.f32 %v5151, %v5359
        %5361 = vmatmul.bf16.gmra.mxu0 %v4317
        %v5362 = vpop.f32.mrf.mxu0
        %v5363 = vadd.f32 %v5154, %v5362
        %v5364 = vpop.f32.mrf.mxu0
        %v5365 = vadd.f32 %v5156, %v5364
        %5366 = vmatmul.bf16.gmra.mxu0 %v4320
        %v5367 = vpop.f32.mrf.mxu0
        %v5368 = vadd.f32 %v5159, %v5367
        %v5369 = vpop.f32.mrf.mxu0
        %v5370 = vadd.f32 %v5161, %v5369
        %5371 = vmatmul.bf16.gmra.mxu0 %v4323
        %v5372 = vpop.f32.mrf.mxu0
        %v5373 = vadd.f32 %v5164, %v5372
        %v5374 = vpop.f32.mrf.mxu0
        %v5375 = vadd.f32 %v5166, %v5374
        %5376 = vdwg.mxu0
        %5377 = vmatpush.bf16.msra.mxu0 0
        %5378 = vmatpush.bf16.msra.mxu0 0
        %5379 = vmatpush.bf16.msra.mxu0 0
        %5380 = vmatpush.bf16.msra.mxu0 0
        %5381 = vmatpush.bf16.msra.mxu0 %v5227
        %5382 = vmatpush.bf16.msra.mxu0 %v5226
        %5383 = vmatpush.bf16.msra.mxu0 %v5225
        %5384 = vmatpush.bf16.msra.mxu0 %v5224
        %5385 = vmatmul.bf16.gmra.mxu0 %v5241
        %v5386 = vpop.f32.mrf.mxu0
        %v5387 = vadd.f32 %v5298, %v5386
        %v5388 = vpop.f32.mrf.mxu0
        %v5389 = vadd.f32 %v5300, %v5388
        %5390 = vmatmul.bf16.gmra.mxu0 %v5244
        %v5391 = vpop.f32.mrf.mxu0
        %v5392 = vadd.f32 %v5303, %v5391
        %v5393 = vpop.f32.mrf.mxu0
        %v5394 = vadd.f32 %v5305, %v5393
        %5395 = vmatmul.bf16.gmra.mxu0 %v5247
        %v5396 = vpop.f32.mrf.mxu0
        %v5397 = vadd.f32 %v5308, %v5396
        %v5398 = vpop.f32.mrf.mxu0
        %v5399 = vadd.f32 %v5310, %v5398
        %5400 = vmatmul.bf16.gmra.mxu0 %v5250
        %v5401 = vpop.f32.mrf.mxu0
        %v5402 = vadd.f32 %v5313, %v5401
        %v5403 = vpop.f32.mrf.mxu0
        %v5404 = vadd.f32 %v5315, %v5403
        %5405 = vmatmul.bf16.gmra.mxu0 %v5253
        %v5406 = vpop.f32.mrf.mxu0
        %v5407 = vadd.f32 %v5318, %v5406
        %v5408 = vpop.f32.mrf.mxu0
        %v5409 = vadd.f32 %v5320, %v5408
        %5410 = vmatmul.bf16.gmra.mxu0 %v5256
        %v5411 = vpop.f32.mrf.mxu0
        %v5412 = vadd.f32 %v5323, %v5411
        %v5413 = vpop.f32.mrf.mxu0
        %v5414 = vadd.f32 %v5325, %v5413
        %5415 = vmatmul.bf16.gmra.mxu0 %v5259
        %v5416 = vpop.f32.mrf.mxu0
        %v5417 = vadd.f32 %v5328, %v5416
        %v5418 = vpop.f32.mrf.mxu0
        %v5419 = vadd.f32 %v5330, %v5418
        %5420 = vmatmul.bf16.gmra.mxu0 %v5262
        %v5421 = vpop.f32.mrf.mxu0
        %v5422 = vadd.f32 %v5333, %v5421
        %v5423 = vpop.f32.mrf.mxu0
        %v5424 = vadd.f32 %v5335, %v5423
        %5425 = vmatmul.bf16.gmra.mxu0 %v5265
        %v5426 = vpop.f32.mrf.mxu0
        %v5427 = vadd.f32 %v5338, %v5426
        %v5428 = vpop.f32.mrf.mxu0
        %v5429 = vadd.f32 %v5340, %v5428
        %5430 = vmatmul.bf16.gmra.mxu0 %v5268
        %v5431 = vpop.f32.mrf.mxu0
        %v5432 = vadd.f32 %v5343, %v5431
        %v5433 = vpop.f32.mrf.mxu0
        %v5434 = vadd.f32 %v5345, %v5433
        %5435 = vmatmul.bf16.gmra.mxu0 %v5271
        %v5436 = vpop.f32.mrf.mxu0
        %v5437 = vadd.f32 %v5348, %v5436
        %v5438 = vpop.f32.mrf.mxu0
        %v5439 = vadd.f32 %v5350, %v5438
        %5440 = vmatmul.bf16.gmra.mxu0 %v5274
        %v5441 = vpop.f32.mrf.mxu0
        %v5442 = vadd.f32 %v5353, %v5441
        %v5443 = vpop.f32.mrf.mxu0
        %v5444 = vadd.f32 %v5355, %v5443
        %5445 = vmatmul.bf16.gmra.mxu0 %v5277
        %v5446 = vpop.f32.mrf.mxu0
        %v5447 = vadd.f32 %v5358, %v5446
        %v5448 = vpop.f32.mrf.mxu0
        %v5449 = vadd.f32 %v5360, %v5448
        %5450 = vmatmul.bf16.gmra.mxu0 %v5280
        %v5451 = vpop.f32.mrf.mxu0
        %v5452 = vadd.f32 %v5363, %v5451
        %v5453 = vpop.f32.mrf.mxu0
        %v5454 = vadd.f32 %v5365, %v5453
        %5455 = vmatmul.bf16.gmra.mxu0 %v5283
        %v5456 = vpop.f32.mrf.mxu0
        %v5457 = vadd.f32 %v5368, %v5456
        %v5458 = vpop.f32.mrf.mxu0
        %v5459 = vadd.f32 %v5370, %v5458
        %5460 = vmatmul.bf16.gmra.mxu0 %v5286
        %v5461 = vpop.f32.mrf.mxu0
        %v5462 = vadd.f32 %v5373, %v5461
        %v5463 = vpop.f32.mrf.mxu0
        %v5464 = vadd.f32 %v5375, %v5463
        %5465 = vdwg.mxu0
        %s5466 = scalar_lea.vmem [#allocation3], 24
        %v5467 = vld [vmem:[%s5466] sm:$0xf]
        %v5468 = vld [vmem:[%s5466 + $0x4] sm:$0xf]
        %v5469 = vld [vmem:[%s5466 + $0x8] sm:$0x1]
        %v5470 = vld [vmem:[%s5466 + $0xc] sm:$0xf]
        %v5471 = vld [vmem:[%s5466 + $0x10] sm:$0xf]
        %v5472 = vld [vmem:[%s5466 + $0x14] sm:$0x1]
        %v5473 = vld [vmem:[%s5466 + $0x18] sm:$0xf]
        %v5474 = vld [vmem:[%s5466 + $0x1c] sm:$0xf]
        %v5475 = vld [vmem:[%s5466 + $0x20] sm:$0x1]
        %v5476 = vld [vmem:[%s5466 + $0x24] sm:$0xf]
        %v5477 = vld [vmem:[%s5466 + $0x28] sm:$0xf]
        %v5478 = vld [vmem:[%s5466 + $0x2c] sm:$0x1]
        %v5479 = vld [vmem:[%s5466 + $0x30] sm:$0xf]
        %v5480 = vld [vmem:[%s5466 + $0x34] sm:$0xf]
        %v5481 = vld [vmem:[%s5466 + $0x38] sm:$0x1]
        %v5482 = vld [vmem:[%s5466 + $0x3c] sm:$0xf]
        %v5483 = vld [vmem:[%s5466 + $0x40] sm:$0xf]
        %v5484 = vld [vmem:[%s5466 + $0x44] sm:$0x1]
        %v5485 = vld [vmem:[%s5466 + $0x48] sm:$0xf]
        %v5486 = vld [vmem:[%s5466 + $0x4c] sm:$0xf]
        %v5487 = vld [vmem:[%s5466 + $0x50] sm:$0x1]
        %v5488 = vld [vmem:[%s5466 + $0x54] sm:$0xf]
        %v5489 = vld [vmem:[%s5466 + $0x58] sm:$0xf]
        %v5490 = vld [vmem:[%s5466 + $0x5c] sm:$0x1]
        %v5491 = vld [vmem:[%s5466 + $0x60] sm:$0xf]
        %v5492 = vld [vmem:[%s5466 + $0x64] sm:$0xf]
        %v5493 = vld [vmem:[%s5466 + $0x68] sm:$0x1]
        %v5494 = vld [vmem:[%s5466 + $0x6c] sm:$0xf]
        %v5495 = vld [vmem:[%s5466 + $0x70] sm:$0xf]
        %v5496 = vld [vmem:[%s5466 + $0x74] sm:$0x1]
        %v5497 = vld [vmem:[%s5466 + $0x78] sm:$0xf]
        %v5498 = vld [vmem:[%s5466 + $0x7c] sm:$0xf]
        %v5499 = vld [vmem:[%s5466 + $0x80] sm:$0x1]
        %v5500 = vld [vmem:[%s5466 + $0x84] sm:$0xf]
        %v5501 = vld [vmem:[%s5466 + $0x88] sm:$0xf]
        %v5502 = vld [vmem:[%s5466 + $0x8c] sm:$0x1]
        %v5503 = vld [vmem:[%s5466 + $0x90] sm:$0xf]
        %v5504 = vld [vmem:[%s5466 + $0x94] sm:$0xf]
        %v5505 = vld [vmem:[%s5466 + $0x98] sm:$0x1]
        %v5506 = vld [vmem:[%s5466 + $0x9c] sm:$0xf]
        %v5507 = vld [vmem:[%s5466 + $0xa0] sm:$0xf]
        %v5508 = vld [vmem:[%s5466 + $0xa4] sm:$0x1]
        %v5509 = vld [vmem:[%s5466 + $0xa8] sm:$0xf]
        %v5510 = vld [vmem:[%s5466 + $0xac] sm:$0xf]
        %v5511 = vld [vmem:[%s5466 + $0xb0] sm:$0x1]
        %v5512 = vld [vmem:[%s5466 + $0xb4] sm:$0xf]
        %v5513 = vld [vmem:[%s5466 + $0xb8] sm:$0xf]
        %v5514 = vld [vmem:[%s5466 + $0xbc] sm:$0x1]
        %v5547 = vunpack.c.l.b16 %v5467
        %v5548 = vunpack.c.l.b16 %v5468
        %v5549 = vunpack.c.l.b16 %v5470
        %v5550 = vunpack.c.l.b16 %v5471
        %v5551 = vunpack.c.l.b16 %v5473
        %v5552 = vunpack.c.l.b16 %v5474
        %v5553 = vunpack.c.l.b16 %v5476
        %v5554 = vunpack.c.l.b16 %v5477
        %v5555 = vunpack.c.l.b16 %v5479
        %v5556 = vunpack.c.l.b16 %v5480
        %v5557 = vunpack.c.l.b16 %v5482
        %v5558 = vunpack.c.l.b16 %v5483
        %v5559 = vunpack.c.l.b16 %v5485
        %v5560 = vunpack.c.l.b16 %v5486
        %v5561 = vunpack.c.l.b16 %v5488
        %v5562 = vunpack.c.l.b16 %v5489
        %v5563 = vunpack.c.l.b16 %v5491
        %v5564 = vunpack.c.l.b16 %v5492
        %v5565 = vunpack.c.l.b16 %v5494
        %v5566 = vunpack.c.l.b16 %v5495
        %v5567 = vunpack.c.l.b16 %v5497
        %v5568 = vunpack.c.l.b16 %v5498
        %v5569 = vunpack.c.l.b16 %v5500
        %v5570 = vunpack.c.l.b16 %v5501
        %v5571 = vunpack.c.l.b16 %v5503
        %v5572 = vunpack.c.l.b16 %v5504
        %v5573 = vunpack.c.l.b16 %v5506
        %v5574 = vunpack.c.l.b16 %v5507
        %v5575 = vunpack.c.l.b16 %v5509
        %v5576 = vunpack.c.l.b16 %v5510
        %v5577 = vunpack.c.l.b16 %v5512
        %v5578 = vunpack.c.l.b16 %v5513
        %v5579 = vpack.c.b16 %v5548, %v5547
        %v5580 = vpack.c.b16 %v5550, %v5549
        %v5581 = vpack.c.b16 %v5552, %v5551
        %v5582 = vpack.c.b16 %v5554, %v5553
        %v5583 = vpack.c.b16 %v5556, %v5555
        %v5584 = vpack.c.b16 %v5558, %v5557
        %v5585 = vpack.c.b16 %v5560, %v5559
        %v5586 = vpack.c.b16 %v5562, %v5561
        %v5587 = vpack.c.b16 %v5564, %v5563
        %v5588 = vpack.c.b16 %v5566, %v5565
        %v5589 = vpack.c.b16 %v5568, %v5567
        %v5590 = vpack.c.b16 %v5570, %v5569
        %v5591 = vpack.c.b16 %v5572, %v5571
        %v5592 = vpack.c.b16 %v5574, %v5573
        %v5593 = vpack.c.b16 %v5576, %v5575
        %v5594 = vpack.c.b16 %v5578, %v5577
        %v5611 = vunpack.c.l.b16 %v5469
        %v5612 = vunpack.c.l.b16 %v5472
        %v5613 = vunpack.c.l.b16 %v5475
        %v5614 = vunpack.c.l.b16 %v5478
        %v5615 = vunpack.c.l.b16 %v5481
        %v5616 = vunpack.c.l.b16 %v5484
        %v5617 = vunpack.c.l.b16 %v5487
        %v5618 = vunpack.c.l.b16 %v5490
        %v5619 = vunpack.c.l.b16 %v5493
        %v5620 = vunpack.c.l.b16 %v5496
        %v5621 = vunpack.c.l.b16 %v5499
        %v5622 = vunpack.c.l.b16 %v5502
        %v5623 = vunpack.c.l.b16 %v5505
        %v5624 = vunpack.c.l.b16 %v5508
        %v5625 = vunpack.c.l.b16 %v5511
        %v5626 = vunpack.c.l.b16 %v5514
        %v5627 = vpack.c.b16 %v5611, %v5611
        %v5628 = vpack.c.b16 %v5612, %v5612
        %v5629 = vpack.c.b16 %v5613, %v5613
        %v5630 = vpack.c.b16 %v5614, %v5614
        %v5631 = vpack.c.b16 %v5615, %v5615
        %v5632 = vpack.c.b16 %v5616, %v5616
        %v5633 = vpack.c.b16 %v5617, %v5617
        %v5634 = vpack.c.b16 %v5618, %v5618
        %v5635 = vpack.c.b16 %v5619, %v5619
        %v5636 = vpack.c.b16 %v5620, %v5620
        %v5637 = vpack.c.b16 %v5621, %v5621
        %v5638 = vpack.c.b16 %v5622, %v5622
        %v5639 = vpack.c.b16 %v5623, %v5623
        %v5640 = vpack.c.b16 %v5624, %v5624
        %v5641 = vpack.c.b16 %v5625, %v5625
        %v5642 = vpack.c.b16 %v5626, %v5626
        %v5644 = vshrl.u32 %v5579, 16
        %v5646 = vshll.u32 %v5579, 16
        %v5648 = vrot.slane %v5646, 1
        %v5649 = vor.u32 %v5644, %v5648
        %v5651 = vshll.u32 %v5627, 16
        %v5653 = vrot.slane %v5651, 1
        %v5654 = vsel %vm925, %v5649, %v5653
        %v5656 = vshrl.u32 %v5580, 16
        %v5658 = vshll.u32 %v5580, 16
        %v5660 = vrot.slane %v5658, 1
        %v5661 = vor.u32 %v5656, %v5660
        %v5663 = vshll.u32 %v5628, 16
        %v5665 = vrot.slane %v5663, 1
        %v5666 = vsel %vm925, %v5661, %v5665
        %v5668 = vshrl.u32 %v5581, 16
        %v5670 = vshll.u32 %v5581, 16
        %v5672 = vrot.slane %v5670, 1
        %v5673 = vor.u32 %v5668, %v5672
        %v5675 = vshll.u32 %v5629, 16
        %v5677 = vrot.slane %v5675, 1
        %v5678 = vsel %vm925, %v5673, %v5677
        %v5680 = vshrl.u32 %v5582, 16
        %v5682 = vshll.u32 %v5582, 16
        %v5684 = vrot.slane %v5682, 1
        %v5685 = vor.u32 %v5680, %v5684
        %v5687 = vshll.u32 %v5630, 16
        %v5689 = vrot.slane %v5687, 1
        %v5690 = vsel %vm925, %v5685, %v5689
        %v5692 = vshrl.u32 %v5583, 16
        %v5694 = vshll.u32 %v5583, 16
        %v5696 = vrot.slane %v5694, 1
        %v5697 = vor.u32 %v5692, %v5696
        %v5699 = vshll.u32 %v5631, 16
        %v5701 = vrot.slane %v5699, 1
        %v5702 = vsel %vm925, %v5697, %v5701
        %v5704 = vshrl.u32 %v5584, 16
        %v5706 = vshll.u32 %v5584, 16
        %v5708 = vrot.slane %v5706, 1
        %v5709 = vor.u32 %v5704, %v5708
        %v5711 = vshll.u32 %v5632, 16
        %v5713 = vrot.slane %v5711, 1
        %v5714 = vsel %vm925, %v5709, %v5713
        %v5716 = vshrl.u32 %v5585, 16
        %v5718 = vshll.u32 %v5585, 16
        %v5720 = vrot.slane %v5718, 1
        %v5721 = vor.u32 %v5716, %v5720
        %v5723 = vshll.u32 %v5633, 16
        %v5725 = vrot.slane %v5723, 1
        %v5726 = vsel %vm925, %v5721, %v5725
        %v5728 = vshrl.u32 %v5586, 16
        %v5730 = vshll.u32 %v5586, 16
        %v5732 = vrot.slane %v5730, 1
        %v5733 = vor.u32 %v5728, %v5732
        %v5735 = vshll.u32 %v5634, 16
        %v5737 = vrot.slane %v5735, 1
        %v5738 = vsel %vm925, %v5733, %v5737
        %v5740 = vshrl.u32 %v5587, 16
        %v5742 = vshll.u32 %v5587, 16
        %v5744 = vrot.slane %v5742, 1
        %v5745 = vor.u32 %v5740, %v5744
        %v5747 = vshll.u32 %v5635, 16
        %v5749 = vrot.slane %v5747, 1
        %v5750 = vsel %vm925, %v5745, %v5749
        %v5752 = vshrl.u32 %v5588, 16
        %v5754 = vshll.u32 %v5588, 16
        %v5756 = vrot.slane %v5754, 1
        %v5757 = vor.u32 %v5752, %v5756
        %v5759 = vshll.u32 %v5636, 16
        %v5761 = vrot.slane %v5759, 1
        %v5762 = vsel %vm925, %v5757, %v5761
        %v5764 = vshrl.u32 %v5589, 16
        %v5766 = vshll.u32 %v5589, 16
        %v5768 = vrot.slane %v5766, 1
        %v5769 = vor.u32 %v5764, %v5768
        %v5771 = vshll.u32 %v5637, 16
        %v5773 = vrot.slane %v5771, 1
        %v5774 = vsel %vm925, %v5769, %v5773
        %v5776 = vshrl.u32 %v5590, 16
        %v5778 = vshll.u32 %v5590, 16
        %v5780 = vrot.slane %v5778, 1
        %v5781 = vor.u32 %v5776, %v5780
        %v5783 = vshll.u32 %v5638, 16
        %v5785 = vrot.slane %v5783, 1
        %v5786 = vsel %vm925, %v5781, %v5785
        %v5788 = vshrl.u32 %v5591, 16
        %v5790 = vshll.u32 %v5591, 16
        %v5792 = vrot.slane %v5790, 1
        %v5793 = vor.u32 %v5788, %v5792
        %v5795 = vshll.u32 %v5639, 16
        %v5797 = vrot.slane %v5795, 1
        %v5798 = vsel %vm925, %v5793, %v5797
        %v5800 = vshrl.u32 %v5592, 16
        %v5802 = vshll.u32 %v5592, 16
        %v5804 = vrot.slane %v5802, 1
        %v5805 = vor.u32 %v5800, %v5804
        %v5807 = vshll.u32 %v5640, 16
        %v5809 = vrot.slane %v5807, 1
        %v5810 = vsel %vm925, %v5805, %v5809
        %v5812 = vshrl.u32 %v5593, 16
        %v5814 = vshll.u32 %v5593, 16
        %v5816 = vrot.slane %v5814, 1
        %v5817 = vor.u32 %v5812, %v5816
        %v5819 = vshll.u32 %v5641, 16
        %v5821 = vrot.slane %v5819, 1
        %v5822 = vsel %vm925, %v5817, %v5821
        %v5824 = vshrl.u32 %v5594, 16
        %v5826 = vshll.u32 %v5594, 16
        %v5828 = vrot.slane %v5826, 1
        %v5829 = vor.u32 %v5824, %v5828
        %v5831 = vshll.u32 %v5642, 16
        %v5833 = vrot.slane %v5831, 1
        %v5834 = vsel %vm925, %v5829, %v5833
        %5835 = vrot.lane.b32.xlu0 %v5654, 64
        %v5836 = vpop.permute.xlu0 %5835
        %5837 = vrot.lane.b32.xlu0 %v5666, 64
        %v5838 = vpop.permute.xlu0 %5837
        %5839 = vrot.lane.b32.xlu0 %v5678, 64
        %v5840 = vpop.permute.xlu0 %5839
        %5841 = vrot.lane.b32.xlu0 %v5690, 64
        %v5842 = vpop.permute.xlu0 %5841
        %5843 = vrot.lane.b32.xlu0 %v5702, 64
        %v5844 = vpop.permute.xlu0 %5843
        %5845 = vrot.lane.b32.xlu0 %v5714, 64
        %v5846 = vpop.permute.xlu0 %5845
        %5847 = vrot.lane.b32.xlu0 %v5726, 64
        %v5848 = vpop.permute.xlu0 %5847
        %5849 = vrot.lane.b32.xlu0 %v5738, 64
        %v5850 = vpop.permute.xlu0 %5849
        %5851 = vrot.lane.b32.xlu0 %v5750, 64
        %v5852 = vpop.permute.xlu0 %5851
        %5853 = vrot.lane.b32.xlu0 %v5762, 64
        %v5854 = vpop.permute.xlu0 %5853
        %5855 = vrot.lane.b32.xlu0 %v5774, 64
        %v5856 = vpop.permute.xlu0 %5855
        %5857 = vrot.lane.b32.xlu0 %v5786, 64
        %v5858 = vpop.permute.xlu0 %5857
        %5859 = vrot.lane.b32.xlu0 %v5798, 64
        %v5860 = vpop.permute.xlu0 %5859
        %5861 = vrot.lane.b32.xlu0 %v5810, 64
        %v5862 = vpop.permute.xlu0 %5861
        %5863 = vrot.lane.b32.xlu0 %v5822, 64
        %v5864 = vpop.permute.xlu0 %5863
        %5865 = vrot.lane.b32.xlu0 %v5834, 64
        %v5866 = vpop.permute.xlu0 %5865
        %v5867 = vrot.slane %v5579, 1
        %v5868 = vrot.slane %v5627, 1
        %v5869 = vsel %vm1150, %v5867, %v5868
        %v5870 = vrot.slane %v5580, 1
        %v5871 = vrot.slane %v5628, 1
        %v5872 = vsel %vm1150, %v5870, %v5871
        %v5873 = vrot.slane %v5581, 1
        %v5874 = vrot.slane %v5629, 1
        %v5875 = vsel %vm1150, %v5873, %v5874
        %v5876 = vrot.slane %v5582, 1
        %v5877 = vrot.slane %v5630, 1
        %v5878 = vsel %vm1150, %v5876, %v5877
        %v5879 = vrot.slane %v5583, 1
        %v5880 = vrot.slane %v5631, 1
        %v5881 = vsel %vm1150, %v5879, %v5880
        %v5882 = vrot.slane %v5584, 1
        %v5883 = vrot.slane %v5632, 1
        %v5884 = vsel %vm1150, %v5882, %v5883
        %v5885 = vrot.slane %v5585, 1
        %v5886 = vrot.slane %v5633, 1
        %v5887 = vsel %vm1150, %v5885, %v5886
        %v5888 = vrot.slane %v5586, 1
        %v5889 = vrot.slane %v5634, 1
        %v5890 = vsel %vm1150, %v5888, %v5889
        %v5891 = vrot.slane %v5587, 1
        %v5892 = vrot.slane %v5635, 1
        %v5893 = vsel %vm1150, %v5891, %v5892
        %v5894 = vrot.slane %v5588, 1
        %v5895 = vrot.slane %v5636, 1
        %v5896 = vsel %vm1150, %v5894, %v5895
        %v5897 = vrot.slane %v5589, 1
        %v5898 = vrot.slane %v5637, 1
        %v5899 = vsel %vm1150, %v5897, %v5898
        %v5900 = vrot.slane %v5590, 1
        %v5901 = vrot.slane %v5638, 1
        %v5902 = vsel %vm1150, %v5900, %v5901
        %v5903 = vrot.slane %v5591, 1
        %v5904 = vrot.slane %v5639, 1
        %v5905 = vsel %vm1150, %v5903, %v5904
        %v5906 = vrot.slane %v5592, 1
        %v5907 = vrot.slane %v5640, 1
        %v5908 = vsel %vm1150, %v5906, %v5907
        %v5909 = vrot.slane %v5593, 1
        %v5910 = vrot.slane %v5641, 1
        %v5911 = vsel %vm1150, %v5909, %v5910
        %v5912 = vrot.slane %v5594, 1
        %v5913 = vrot.slane %v5642, 1
        %v5914 = vsel %vm1150, %v5912, %v5913
        %v5916 = vsel %vm1199, %v5579, %v5836
        %v5919 = vsel %vm1199, %v5580, %v5838
        %v5922 = vsel %vm1199, %v5581, %v5840
        %v5925 = vsel %vm1199, %v5582, %v5842
        %v5928 = vsel %vm1199, %v5583, %v5844
        %v5931 = vsel %vm1199, %v5584, %v5846
        %v5934 = vsel %vm1199, %v5585, %v5848
        %v5937 = vsel %vm1199, %v5586, %v5850
        %v5940 = vsel %vm1199, %v5587, %v5852
        %v5943 = vsel %vm1199, %v5588, %v5854
        %v5946 = vsel %vm1199, %v5589, %v5856
        %v5949 = vsel %vm1199, %v5590, %v5858
        %v5952 = vsel %vm1199, %v5591, %v5860
        %v5955 = vsel %vm1199, %v5592, %v5862
        %v5958 = vsel %vm1199, %v5593, %v5864
        %v5961 = vsel %vm1199, %v5594, %v5866
        %s5963 = scalar_lea.vmem %s2, 192
        %v5964 = vld [vmem:[%s5963] sm:$0xf]
        %v5965 = vld [vmem:[%s5963 + $0x4] sm:$0xf]
        %v5966 = vld [vmem:[%s5963 + $0x8] sm:$0xf]
        %v5967 = vld [vmem:[%s5963 + $0xc] sm:$0xf]
        %v5968 = vld [vmem:[%s5963 + $0x10] sm:$0xf]
        %v5969 = vld [vmem:[%s5963 + $0x14] sm:$0xf]
        %v5970 = vld [vmem:[%s5963 + $0x18] sm:$0xf]
        %v5971 = vld [vmem:[%s5963 + $0x1c] sm:$0xf]
        %v5972 = vld [vmem:[%s5963 + $0x20] sm:$0xf]
        %v5973 = vld [vmem:[%s5963 + $0x24] sm:$0xf]
        %v5974 = vld [vmem:[%s5963 + $0x28] sm:$0xf]
        %v5975 = vld [vmem:[%s5963 + $0x2c] sm:$0xf]
        %v5976 = vld [vmem:[%s5963 + $0x30] sm:$0xf]
        %v5977 = vld [vmem:[%s5963 + $0x34] sm:$0xf]
        %v5978 = vld [vmem:[%s5963 + $0x38] sm:$0xf]
        %v5979 = vld [vmem:[%s5963 + $0x3c] sm:$0xf]
        %v5980 = vld [vmem:[%s5963 + $0x40] sm:$0xf]
        %v5981 = vld [vmem:[%s5963 + $0x44] sm:$0xf]
        %v5982 = vld [vmem:[%s5963 + $0x48] sm:$0xf]
        %v5983 = vld [vmem:[%s5963 + $0x4c] sm:$0xf]
        %v5984 = vld [vmem:[%s5963 + $0x50] sm:$0xf]
        %v5985 = vld [vmem:[%s5963 + $0x54] sm:$0xf]
        %v5986 = vld [vmem:[%s5963 + $0x58] sm:$0xf]
        %v5987 = vld [vmem:[%s5963 + $0x5c] sm:$0xf]
        %v6012 = vunpack.c.l.b16 %v5964
        %v6013 = vunpack.c.l.b16 %v5965
        %v6014 = vunpack.c.l.b16 %v5966
        %v6015 = vunpack.c.l.b16 %v5967
        %v6016 = vunpack.c.l.b16 %v5968
        %v6017 = vunpack.c.l.b16 %v5969
        %v6018 = vunpack.c.l.b16 %v5970
        %v6019 = vunpack.c.l.b16 %v5971
        %v6020 = vunpack.c.l.b16 %v5972
        %v6021 = vunpack.c.l.b16 %v5973
        %v6022 = vunpack.c.l.b16 %v5974
        %v6023 = vunpack.c.l.b16 %v5975
        %v6024 = vunpack.c.l.b16 %v5976
        %v6025 = vunpack.c.l.b16 %v5977
        %v6026 = vunpack.c.l.b16 %v5978
        %v6027 = vunpack.c.l.b16 %v5979
        %v6028 = vunpack.c.l.b16 %v5980
        %v6029 = vunpack.c.l.b16 %v5981
        %v6030 = vunpack.c.l.b16 %v5982
        %v6031 = vunpack.c.l.b16 %v5983
        %v6032 = vunpack.c.l.b16 %v5984
        %v6033 = vunpack.c.l.b16 %v5985
        %v6034 = vunpack.c.l.b16 %v5986
        %v6035 = vunpack.c.l.b16 %v5987
        %v6036 = vpack.c.b16 %v6013, %v6012
        %v6037 = vpack.c.b16 %v6015, %v6014
        %v6038 = vpack.c.b16 %v6017, %v6016
        %v6039 = vpack.c.b16 %v6019, %v6018
        %v6040 = vpack.c.b16 %v6021, %v6020
        %v6041 = vpack.c.b16 %v6023, %v6022
        %v6042 = vpack.c.b16 %v6025, %v6024
        %v6043 = vpack.c.b16 %v6027, %v6026
        %v6044 = vpack.c.b16 %v6029, %v6028
        %v6045 = vpack.c.b16 %v6031, %v6030
        %v6046 = vpack.c.b16 %v6033, %v6032
        %v6047 = vpack.c.b16 %v6035, %v6034
        %v6061 = vsel %vm1199, %v5869, 0
        %v6064 = vsel %vm1199, %v5872, 0
        %v6067 = vsel %vm1199, %v5875, 0
        %v6070 = vsel %vm1199, %v5878, 0
        %v6073 = vsel %vm1199, %v5881, 0
        %v6076 = vsel %vm1199, %v5884, 0
        %v6079 = vsel %vm1199, %v5887, 0
        %v6082 = vsel %vm1199, %v5890, 0
        %v6085 = vsel %vm1199, %v5893, 0
        %v6088 = vsel %vm1199, %v5896, 0
        %v6091 = vsel %vm1199, %v5899, 0
        %v6094 = vsel %vm1199, %v5902, 0
        %v6097 = vsel %vm1199, %v5905, 0
        %v6100 = vsel %vm1199, %v5908, 0
        %v6103 = vsel %vm1199, %v5911, 0
        %v6106 = vsel %vm1199, %v5914, 0
        %6108 = vmatpush.bf16.msra.mxu0 %v6043
        %6109 = vmatpush.bf16.msra.mxu0 %v6042
        %6110 = vmatpush.bf16.msra.mxu0 %v6041
        %6111 = vmatpush.bf16.msra.mxu0 %v6040
        %6112 = vmatpush.bf16.msra.mxu0 %v6039
        %6113 = vmatpush.bf16.msra.mxu0 %v6038
        %6114 = vmatpush.bf16.msra.mxu0 %v6037
        %6115 = vmatpush.bf16.msra.mxu0 %v6036
        %6116 = vmatmul.bf16.gmra.mxu0 %v5916
        %v6117 = vpop.f32.mrf.mxu0
        %v6118 = vadd.f32 0.0, %v6117
        %v6119 = vpop.f32.mrf.mxu0
        %v6120 = vadd.f32 0.0, %v6119
        %6121 = vmatmul.bf16.gmra.mxu0 %v5919
        %v6122 = vpop.f32.mrf.mxu0
        %v6123 = vadd.f32 0.0, %v6122
        %v6124 = vpop.f32.mrf.mxu0
        %v6125 = vadd.f32 0.0, %v6124
        %6126 = vmatmul.bf16.gmra.mxu0 %v5922
        %v6127 = vpop.f32.mrf.mxu0
        %v6128 = vadd.f32 0.0, %v6127
        %v6129 = vpop.f32.mrf.mxu0
        %v6130 = vadd.f32 0.0, %v6129
        %6131 = vmatmul.bf16.gmra.mxu0 %v5925
        %v6132 = vpop.f32.mrf.mxu0
        %v6133 = vadd.f32 0.0, %v6132
        %v6134 = vpop.f32.mrf.mxu0
        %v6135 = vadd.f32 0.0, %v6134
        %6136 = vmatmul.bf16.gmra.mxu0 %v5928
        %v6137 = vpop.f32.mrf.mxu0
        %v6138 = vadd.f32 0.0, %v6137
        %v6139 = vpop.f32.mrf.mxu0
        %v6140 = vadd.f32 0.0, %v6139
        %6141 = vmatmul.bf16.gmra.mxu0 %v5931
        %v6142 = vpop.f32.mrf.mxu0
        %v6143 = vadd.f32 0.0, %v6142
        %v6144 = vpop.f32.mrf.mxu0
        %v6145 = vadd.f32 0.0, %v6144
        %6146 = vmatmul.bf16.gmra.mxu0 %v5934
        %v6147 = vpop.f32.mrf.mxu0
        %v6148 = vadd.f32 0.0, %v6147
        %v6149 = vpop.f32.mrf.mxu0
        %v6150 = vadd.f32 0.0, %v6149
        %6151 = vmatmul.bf16.gmra.mxu0 %v5937
        %v6152 = vpop.f32.mrf.mxu0
        %v6153 = vadd.f32 0.0, %v6152
        %v6154 = vpop.f32.mrf.mxu0
        %v6155 = vadd.f32 0.0, %v6154
        %6156 = vmatmul.bf16.gmra.mxu0 %v5940
        %v6157 = vpop.f32.mrf.mxu0
        %v6158 = vadd.f32 0.0, %v6157
        %v6159 = vpop.f32.mrf.mxu0
        %v6160 = vadd.f32 0.0, %v6159
        %6161 = vmatmul.bf16.gmra.mxu0 %v5943
        %v6162 = vpop.f32.mrf.mxu0
        %v6163 = vadd.f32 0.0, %v6162
        %v6164 = vpop.f32.mrf.mxu0
        %v6165 = vadd.f32 0.0, %v6164
        %6166 = vmatmul.bf16.gmra.mxu0 %v5946
        %v6167 = vpop.f32.mrf.mxu0
        %v6168 = vadd.f32 0.0, %v6167
        %v6169 = vpop.f32.mrf.mxu0
        %v6170 = vadd.f32 0.0, %v6169
        %6171 = vmatmul.bf16.gmra.mxu0 %v5949
        %v6172 = vpop.f32.mrf.mxu0
        %v6173 = vadd.f32 0.0, %v6172
        %v6174 = vpop.f32.mrf.mxu0
        %v6175 = vadd.f32 0.0, %v6174
        %6176 = vmatmul.bf16.gmra.mxu0 %v5952
        %v6177 = vpop.f32.mrf.mxu0
        %v6178 = vadd.f32 0.0, %v6177
        %v6179 = vpop.f32.mrf.mxu0
        %v6180 = vadd.f32 0.0, %v6179
        %6181 = vmatmul.bf16.gmra.mxu0 %v5955
        %v6182 = vpop.f32.mrf.mxu0
        %v6183 = vadd.f32 0.0, %v6182
        %v6184 = vpop.f32.mrf.mxu0
        %v6185 = vadd.f32 0.0, %v6184
        %6186 = vmatmul.bf16.gmra.mxu0 %v5958
        %v6187 = vpop.f32.mrf.mxu0
        %v6188 = vadd.f32 0.0, %v6187
        %v6189 = vpop.f32.mrf.mxu0
        %v6190 = vadd.f32 0.0, %v6189
        %6191 = vmatmul.bf16.gmra.mxu0 %v5961
        %v6192 = vpop.f32.mrf.mxu0
        %v6193 = vadd.f32 0.0, %v6192
        %v6194 = vpop.f32.mrf.mxu0
        %v6195 = vadd.f32 0.0, %v6194
        %6196 = vdwg.mxu0
        %6197 = vmatpush.bf16.msra.mxu0 0
        %6198 = vmatpush.bf16.msra.mxu0 0
        %6199 = vmatpush.bf16.msra.mxu0 0
        %6200 = vmatpush.bf16.msra.mxu0 0
        %6201 = vmatpush.bf16.msra.mxu0 %v6047
        %6202 = vmatpush.bf16.msra.mxu0 %v6046
        %6203 = vmatpush.bf16.msra.mxu0 %v6045
        %6204 = vmatpush.bf16.msra.mxu0 %v6044
        %6205 = vmatmul.bf16.gmra.mxu0 %v6061
        %v6206 = vpop.f32.mrf.mxu0
        %v6207 = vadd.f32 %v6118, %v6206
        %v6208 = vpop.f32.mrf.mxu0
        %v6209 = vadd.f32 %v6120, %v6208
        %6210 = vmatmul.bf16.gmra.mxu0 %v6064
        %v6211 = vpop.f32.mrf.mxu0
        %v6212 = vadd.f32 %v6123, %v6211
        %v6213 = vpop.f32.mrf.mxu0
        %v6214 = vadd.f32 %v6125, %v6213
        %6215 = vmatmul.bf16.gmra.mxu0 %v6067
        %v6216 = vpop.f32.mrf.mxu0
        %v6217 = vadd.f32 %v6128, %v6216
        %v6218 = vpop.f32.mrf.mxu0
        %v6219 = vadd.f32 %v6130, %v6218
        %6220 = vmatmul.bf16.gmra.mxu0 %v6070
        %v6221 = vpop.f32.mrf.mxu0
        %v6222 = vadd.f32 %v6133, %v6221
        %v6223 = vpop.f32.mrf.mxu0
        %v6224 = vadd.f32 %v6135, %v6223
        %6225 = vmatmul.bf16.gmra.mxu0 %v6073
        %v6226 = vpop.f32.mrf.mxu0
        %v6227 = vadd.f32 %v6138, %v6226
        %v6228 = vpop.f32.mrf.mxu0
        %v6229 = vadd.f32 %v6140, %v6228
        %6230 = vmatmul.bf16.gmra.mxu0 %v6076
        %v6231 = vpop.f32.mrf.mxu0
        %v6232 = vadd.f32 %v6143, %v6231
        %v6233 = vpop.f32.mrf.mxu0
        %v6234 = vadd.f32 %v6145, %v6233
        %6235 = vmatmul.bf16.gmra.mxu0 %v6079
        %v6236 = vpop.f32.mrf.mxu0
        %v6237 = vadd.f32 %v6148, %v6236
        %v6238 = vpop.f32.mrf.mxu0
        %v6239 = vadd.f32 %v6150, %v6238
        %6240 = vmatmul.bf16.gmra.mxu0 %v6082
        %v6241 = vpop.f32.mrf.mxu0
        %v6242 = vadd.f32 %v6153, %v6241
        %v6243 = vpop.f32.mrf.mxu0
        %v6244 = vadd.f32 %v6155, %v6243
        %6245 = vmatmul.bf16.gmra.mxu0 %v6085
        %v6246 = vpop.f32.mrf.mxu0
        %v6247 = vadd.f32 %v6158, %v6246
        %v6248 = vpop.f32.mrf.mxu0
        %v6249 = vadd.f32 %v6160, %v6248
        %6250 = vmatmul.bf16.gmra.mxu0 %v6088
        %v6251 = vpop.f32.mrf.mxu0
        %v6252 = vadd.f32 %v6163, %v6251
        %v6253 = vpop.f32.mrf.mxu0
        %v6254 = vadd.f32 %v6165, %v6253
        %6255 = vmatmul.bf16.gmra.mxu0 %v6091
        %v6256 = vpop.f32.mrf.mxu0
        %v6257 = vadd.f32 %v6168, %v6256
        %v6258 = vpop.f32.mrf.mxu0
        %v6259 = vadd.f32 %v6170, %v6258
        %6260 = vmatmul.bf16.gmra.mxu0 %v6094
        %v6261 = vpop.f32.mrf.mxu0
        %v6262 = vadd.f32 %v6173, %v6261
        %v6263 = vpop.f32.mrf.mxu0
        %v6264 = vadd.f32 %v6175, %v6263
        %6265 = vmatmul.bf16.gmra.mxu0 %v6097
        %v6266 = vpop.f32.mrf.mxu0
        %v6267 = vadd.f32 %v6178, %v6266
        %v6268 = vpop.f32.mrf.mxu0
        %v6269 = vadd.f32 %v6180, %v6268
        %6270 = vmatmul.bf16.gmra.mxu0 %v6100
        %v6271 = vpop.f32.mrf.mxu0
        %v6272 = vadd.f32 %v6183, %v6271
        %v6273 = vpop.f32.mrf.mxu0
        %v6274 = vadd.f32 %v6185, %v6273
        %6275 = vmatmul.bf16.gmra.mxu0 %v6103
        %v6276 = vpop.f32.mrf.mxu0
        %v6277 = vadd.f32 %v6188, %v6276
        %v6278 = vpop.f32.mrf.mxu0
        %v6279 = vadd.f32 %v6190, %v6278
        %6280 = vmatmul.bf16.gmra.mxu0 %v6106
        %v6281 = vpop.f32.mrf.mxu0
        %v6282 = vadd.f32 %v6193, %v6281
        %v6283 = vpop.f32.mrf.mxu0
        %v6284 = vadd.f32 %v6195, %v6283
        %6285 = vdwg.mxu0
        %v6286 = vadd.f32 %v5387, %v6207
        %v6287 = vadd.f32 %v5389, %v6209
        %v6288 = vadd.f32 %v5392, %v6212
        %v6289 = vadd.f32 %v5394, %v6214
        %v6290 = vadd.f32 %v5397, %v6217
        %v6291 = vadd.f32 %v5399, %v6219
        %v6292 = vadd.f32 %v5402, %v6222
        %v6293 = vadd.f32 %v5404, %v6224
        %v6294 = vadd.f32 %v5407, %v6227
        %v6295 = vadd.f32 %v5409, %v6229
        %v6296 = vadd.f32 %v5412, %v6232
        %v6297 = vadd.f32 %v5414, %v6234
        %v6298 = vadd.f32 %v5417, %v6237
        %v6299 = vadd.f32 %v5419, %v6239
        %v6300 = vadd.f32 %v5422, %v6242
        %v6301 = vadd.f32 %v5424, %v6244
        %v6302 = vadd.f32 %v5427, %v6247
        %v6303 = vadd.f32 %v5429, %v6249
        %v6304 = vadd.f32 %v5432, %v6252
        %v6305 = vadd.f32 %v5434, %v6254
        %v6306 = vadd.f32 %v5437, %v6257
        %v6307 = vadd.f32 %v5439, %v6259
        %v6308 = vadd.f32 %v5442, %v6262
        %v6309 = vadd.f32 %v5444, %v6264
        %v6310 = vadd.f32 %v5447, %v6267
        %v6311 = vadd.f32 %v5449, %v6269
        %v6312 = vadd.f32 %v5452, %v6272
        %v6313 = vadd.f32 %v5454, %v6274
        %v6314 = vadd.f32 %v5457, %v6277
        %v6315 = vadd.f32 %v5459, %v6279
        %v6316 = vadd.f32 %v5462, %v6282
        %v6317 = vadd.f32 %v5464, %v6284
        %v6318 = vunpack.c.l.bf16 %v224
        %v6319 = vunpack.c.l.bf16 %v225
        %v6320 = vunpack.c.l.bf16 %v226
        %v6321 = vunpack.c.l.bf16 %v227
        %v6322 = vunpack.c.l.bf16 %v228
        %v6323 = vunpack.c.l.bf16 %v229
        %v6324 = vunpack.c.l.bf16 %v230
        %v6325 = vunpack.c.l.bf16 %v231
        %v6326 = vunpack.c.l.bf16 %v232
        %v6327 = vunpack.c.l.bf16 %v233
        %v6328 = vunpack.c.l.bf16 %v234
        %v6329 = vunpack.c.l.bf16 %v235
        %v6330 = vunpack.c.l.bf16 %v236
        %v6331 = vunpack.c.l.bf16 %v237
        %v6332 = vunpack.c.l.bf16 %v238
        %v6333 = vunpack.c.l.bf16 %v239
        %v6334 = vunpack.c.l.bf16 %v240
        %v6335 = vunpack.c.l.bf16 %v241
        %v6336 = vunpack.c.l.bf16 %v242
        %v6337 = vunpack.c.l.bf16 %v243
        %v6338 = vunpack.c.l.bf16 %v244
        %v6339 = vunpack.c.l.bf16 %v245
        %v6340 = vunpack.c.l.bf16 %v246
        %v6341 = vunpack.c.l.bf16 %v247
        %v6342 = vunpack.c.l.bf16 %v248
        %v6343 = vunpack.c.l.bf16 %v249
        %v6344 = vunpack.c.l.bf16 %v250
        %v6345 = vunpack.c.l.bf16 %v251
        %v6346 = vunpack.c.l.bf16 %v252
        %v6347 = vunpack.c.l.bf16 %v253
        %v6348 = vunpack.c.l.bf16 %v254
        %v6349 = vunpack.c.l.bf16 %v255
        %v6350 = vld [vmem:[%s4] sm:$0x1]
        %v6352 = vperm.slane %v6350, 0
        %v6354 = vadd.f32 %v6286, %v6352
        %v6355 = vadd.f32 %v6287, %v6352
        %v6356 = vadd.f32 %v6288, %v6352
        %v6357 = vadd.f32 %v6289, %v6352
        %v6358 = vadd.f32 %v6290, %v6352
        %v6359 = vadd.f32 %v6291, %v6352
        %v6360 = vadd.f32 %v6292, %v6352
        %v6361 = vadd.f32 %v6293, %v6352
        %v6362 = vadd.f32 %v6294, %v6352
        %v6363 = vadd.f32 %v6295, %v6352
        %v6364 = vadd.f32 %v6296, %v6352
        %v6365 = vadd.f32 %v6297, %v6352
        %v6366 = vadd.f32 %v6298, %v6352
        %v6367 = vadd.f32 %v6299, %v6352
        %v6368 = vadd.f32 %v6300, %v6352
        %v6369 = vadd.f32 %v6301, %v6352
        %v6370 = vadd.f32 %v6302, %v6352
        %v6371 = vadd.f32 %v6303, %v6352
        %v6372 = vadd.f32 %v6304, %v6352
        %v6373 = vadd.f32 %v6305, %v6352
        %v6374 = vadd.f32 %v6306, %v6352
        %v6375 = vadd.f32 %v6307, %v6352
        %v6376 = vadd.f32 %v6308, %v6352
        %v6377 = vadd.f32 %v6309, %v6352
        %v6378 = vadd.f32 %v6310, %v6352
        %v6379 = vadd.f32 %v6311, %v6352
        %v6380 = vadd.f32 %v6312, %v6352
        %v6381 = vadd.f32 %v6313, %v6352
        %v6382 = vadd.f32 %v6314, %v6352
        %v6383 = vadd.f32 %v6315, %v6352
        %v6384 = vadd.f32 %v6316, %v6352
        %v6385 = vadd.f32 %v6317, %v6352
        %v6386 = vadd.f32 %v6354, %v6318
        %v6387 = vadd.f32 %v6355, %v6319
        %v6388 = vadd.f32 %v6356, %v6320
        %v6389 = vadd.f32 %v6357, %v6321
        %v6390 = vadd.f32 %v6358, %v6322
        %v6391 = vadd.f32 %v6359, %v6323
        %v6392 = vadd.f32 %v6360, %v6324
        %v6393 = vadd.f32 %v6361, %v6325
        %v6394 = vadd.f32 %v6362, %v6326
        %v6395 = vadd.f32 %v6363, %v6327
        %v6396 = vadd.f32 %v6364, %v6328
        %v6397 = vadd.f32 %v6365, %v6329
        %v6398 = vadd.f32 %v6366, %v6330
        %v6399 = vadd.f32 %v6367, %v6331
        %v6400 = vadd.f32 %v6368, %v6332
        %v6401 = vadd.f32 %v6369, %v6333
        %v6402 = vadd.f32 %v6370, %v6334
        %v6403 = vadd.f32 %v6371, %v6335
        %v6404 = vadd.f32 %v6372, %v6336
        %v6405 = vadd.f32 %v6373, %v6337
        %v6406 = vadd.f32 %v6374, %v6338
        %v6407 = vadd.f32 %v6375, %v6339
        %v6408 = vadd.f32 %v6376, %v6340
        %v6409 = vadd.f32 %v6377, %v6341
        %v6410 = vadd.f32 %v6378, %v6342
        %v6411 = vadd.f32 %v6379, %v6343
        %v6412 = vadd.f32 %v6380, %v6344
        %v6413 = vadd.f32 %v6381, %v6345
        %v6414 = vadd.f32 %v6382, %v6346
        %v6415 = vadd.f32 %v6383, %v6347
        %v6416 = vadd.f32 %v6384, %v6348
        %v6417 = vadd.f32 %v6385, %v6349
        %v6418 = vmax.f32 %v6386, 0.0
        %v6419 = vmax.f32 %v6387, 0.0
        %v6420 = vmax.f32 %v6388, 0.0
        %v6421 = vmax.f32 %v6389, 0.0
        %v6422 = vmax.f32 %v6390, 0.0
        %v6423 = vmax.f32 %v6391, 0.0
        %v6424 = vmax.f32 %v6392, 0.0
        %v6425 = vmax.f32 %v6393, 0.0
        %v6426 = vmax.f32 %v6394, 0.0
        %v6427 = vmax.f32 %v6395, 0.0
        %v6428 = vmax.f32 %v6396, 0.0
        %v6429 = vmax.f32 %v6397, 0.0
        %v6430 = vmax.f32 %v6398, 0.0
        %v6431 = vmax.f32 %v6399, 0.0
        %v6432 = vmax.f32 %v6400, 0.0
        %v6433 = vmax.f32 %v6401, 0.0
        %v6434 = vmax.f32 %v6402, 0.0
        %v6435 = vmax.f32 %v6403, 0.0
        %v6436 = vmax.f32 %v6404, 0.0
        %v6437 = vmax.f32 %v6405, 0.0
        %v6438 = vmax.f32 %v6406, 0.0
        %v6439 = vmax.f32 %v6407, 0.0
        %v6440 = vmax.f32 %v6408, 0.0
        %v6441 = vmax.f32 %v6409, 0.0
        %v6442 = vmax.f32 %v6410, 0.0
        %v6443 = vmax.f32 %v6411, 0.0
        %v6444 = vmax.f32 %v6412, 0.0
        %v6445 = vmax.f32 %v6413, 0.0
        %v6446 = vmax.f32 %v6414, 0.0
        %v6447 = vmax.f32 %v6415, 0.0
        %v6448 = vmax.f32 %v6416, 0.0
        %v6449 = vmax.f32 %v6417, 0.0
        %6450 = vst.msk [vmem:[%s217] sm:$0xff] %vm1199, %v6418
        %6451 = vst.msk [vmem:[%s217 + $0x8] sm:$0xff] %vm1199, %v6419
        %6452 = vst.msk [vmem:[%s217 + $0x10] sm:$0xff] %vm1199, %v6420
        %6453 = vst.msk [vmem:[%s217 + $0x18] sm:$0xff] %vm1199, %v6421
        %6454 = vst.msk [vmem:[%s217 + $0x20] sm:$0xff] %vm1199, %v6422
        %6455 = vst.msk [vmem:[%s217 + $0x28] sm:$0xff] %vm1199, %v6423
        %6456 = vst.msk [vmem:[%s217 + $0x30] sm:$0xff] %vm1199, %v6424
        %6457 = vst.msk [vmem:[%s217 + $0x38] sm:$0xff] %vm1199, %v6425
        %6458 = vst.msk [vmem:[%s217 + $0x40] sm:$0xff] %vm1199, %v6426
        %6459 = vst.msk [vmem:[%s217 + $0x48] sm:$0xff] %vm1199, %v6427
        %6460 = vst.msk [vmem:[%s217 + $0x50] sm:$0xff] %vm1199, %v6428
        %6461 = vst.msk [vmem:[%s217 + $0x58] sm:$0xff] %vm1199, %v6429
        %6462 = vst.msk [vmem:[%s217 + $0x60] sm:$0xff] %vm1199, %v6430
        %6463 = vst.msk [vmem:[%s217 + $0x68] sm:$0xff] %vm1199, %v6431
        %6464 = vst.msk [vmem:[%s217 + $0x70] sm:$0xff] %vm1199, %v6432
        %6465 = vst.msk [vmem:[%s217 + $0x78] sm:$0xff] %vm1199, %v6433
        %6466 = vst.msk [vmem:[%s217 + $0x80] sm:$0xff] %vm1199, %v6434
        %6467 = vst.msk [vmem:[%s217 + $0x88] sm:$0xff] %vm1199, %v6435
        %6468 = vst.msk [vmem:[%s217 + $0x90] sm:$0xff] %vm1199, %v6436
        %6469 = vst.msk [vmem:[%s217 + $0x98] sm:$0xff] %vm1199, %v6437
        %6470 = vst.msk [vmem:[%s217 + $0xa0] sm:$0xff] %vm1199, %v6438
        %6471 = vst.msk [vmem:[%s217 + $0xa8] sm:$0xff] %vm1199, %v6439
        %6472 = vst.msk [vmem:[%s217 + $0xb0] sm:$0xff] %vm1199, %v6440
        %6473 = vst.msk [vmem:[%s217 + $0xb8] sm:$0xff] %vm1199, %v6441
        %6474 = vst.msk [vmem:[%s217 + $0xc0] sm:$0xff] %vm1199, %v6442
        %6475 = vst.msk [vmem:[%s217 + $0xc8] sm:$0xff] %vm1199, %v6443
        %6476 = vst.msk [vmem:[%s217 + $0xd0] sm:$0xff] %vm1199, %v6444
        %6477 = vst.msk [vmem:[%s217 + $0xd8] sm:$0xff] %vm1199, %v6445
        %6478 = vst.msk [vmem:[%s217 + $0xe0] sm:$0xff] %vm1199, %v6446
        %6479 = vst.msk [vmem:[%s217 + $0xe8] sm:$0xff] %vm1199, %v6447
        %6480 = vst.msk [vmem:[%s217 + $0xf0] sm:$0xff] %vm1199, %v6448
        %6481 = vst.msk [vmem:[%s217 + $0xf8] sm:$0xff] %vm1199, %v6449
        %s6482 = sand.u32 %s137, 1
        %s6483 = scalar_lea.sflag [#allocation5], %s6482
        %s6484 = sand.u32 %s137, 1
        %s6485 = smul.addr %s6484, 256
        %s6486 = scalar_lea.vmem [#allocation4], %s6485
        // Predicated region
        $region41: #{basic_block.1} parent=39 // pred_check
          %p6487 = pneg %p147
        $region42: #{basic_block.1} parent=39 // pred_check_branch
          %6489 = sbr.rel (%p6487) target = $region44
        $region43: #{basic_block.1} parent=39 // pred_region
          %6491 = vsyncadd %s6483, 0
          %s6492 = smul.addr %s19, 32
          %s6493 = smul.addr %s6492, 8
          %s6494 = scalar_lea.hbm %s5, %s6493
          %s6495 = sshll.u32 %s6486, 4
          %s6496 = int_to_ptr.vmem [resolvable:$true] %s6495
          %s6497 = sshll.u32 %s6494, 4
          %s6498 = int_to_ptr.hbm [resolvable:$true] %s6497
          %6503 = dma.vmem_to_hbm [thread:$0]  %s6496, 4096, %s6498, %s6483, 128, 128, 8
        $region44: #{basic_block.1} parent=39 // pred_fallthru
          _
      $region40: #{basic_block.1} parent=5 // pred_fallthru
        _
      %p6504 = scmp.le.s32.totalorder 2, %s14
      // Predicated region
      $region45: #{basic_block.1} parent=5 // pred_check
        %p6505 = pneg %p6504
      $region46: #{basic_block.1} parent=5 // pred_check_branch
        %6507 = sbr.rel (%p6505) target = $region48
      $region47: #{basic_block.1} parent=5 // pred_region
        %s6508 = ssub.s32 %s14, 2
        // Predicated region
        $region49: #{basic_block.1} parent=47 // pred_check
          %p6509 = pneg %p153
        $region50: #{basic_block.1} parent=47 // pred_check_branch
          %6511 = sbr.rel (%p6509) target = $region52
        $region51: #{basic_block.1} parent=47 // pred_region
          %s6512 = sand.u32 %s138, 1
          %s6513 = scalar_lea.sflag [#allocation5], %s6512
          %s6514 = sand.u32 %s138, 1
          %s6515 = smul.addr %s6514, 256
          %s6516 = scalar_lea.vmem [#allocation4], %s6515
          %6518 = dma.done %s6513, 4096
        $region52: #{basic_block.1} parent=47 // pred_fallthru
          _
      $region48: #{basic_block.1} parent=5 // pred_fallthru
        _
    $region6: #{basic_block.1} parent=1 // loop_footer
      %s18 = sadd.s32 1, %s14
    $region7: #{basic_block.1} parent=1 // loop_footer_branch
      %13 = sbr.rel target = $region3
    $region8: #{basic_block.1} parent=1 // loop_exit
      _
    %6519 = vsyncpa [#allocation5], 1
    %s6520 = scalar_lea.sflag [#allocation5], 1
    %6521 = vsyncpa %s6520, 1

</llo_original>
